<compile_context>
chip_gen: v5e
topology: v5e:2x2
jax: 0.10.0
libtpu: 0.0.40
codegen_flags: <defaults>
</compile_context>

<pallas_src>
import math
import functools

import jax
import jax.numpy as jnp
from jax import lax
from jax.experimental import pallas as pl
from jax.experimental.pallas import tpu as pltpu

FRAMES_MAP = {'<PAD>': 0, 'I': 1, 'P': 2}


# ----------------------------- small helpers -----------------------------

def _vmem_spec():
    # Whole-array-in-VMEM spec for small gridless kernels.
    return pl.BlockSpec(memory_space=pltpu.MemorySpace.VMEM)


def _ln(x, g, b, eps=1e-5):
    # LayerNorm over the last dim (f32 math), matching torch.nn.LayerNorm eps=1e-5.
    mu = jnp.mean(x, axis=-1, keepdims=True)
    xc = x - mu
    var = jnp.mean(xc * xc, axis=-1, keepdims=True)
    return xc * lax.rsqrt(var + eps) * g + b


# --------------------- fused transformer encoder layer ---------------------

def _fused_encoder_layer_kernel(*refs, nhead, add_pe, final_norm):
    """One full post-norm TransformerEncoderLayer for a single batch row.

    Optionally fuses the PositionalEncoding add (first layer) and the encoder's
    final LayerNorm (last layer). All intermediates stay in VMEM/vregs.
    """
    refs = list(refs)
    x_ref = refs.pop(0)                       # (S, D)   (batch dim squeezed)
    mask_ref = refs.pop(0)                    # (1, S)   additive key mask
    pe_ref = refs.pop(0) if add_pe else None  # (S, D)
    (w_in, b_in, w_out, b_out, ln1_g, ln1_b,
     w1, b1, w2, b2, ln2_g, ln2_b) = refs[:12]
    refs = refs[12:]
    if final_norm:
        fn_g, fn_b = refs[0], refs[1]
        refs = refs[2:]
    o_ref = refs[0]                           # (S, D)

    x = x_ref[...]
    if add_pe:
        x = x + pe_ref[...]
    mask = mask_ref[...]                      # (1, S) broadcasts over queries

    S, D = x.shape
    Dh = D // nhead
    scale = 1.0 / math.sqrt(Dh)

    # --- multi-head self-attention (head split/merge done in-kernel) ---
    qkv = jnp.dot(x, w_in[...], preferred_element_type=jnp.float32) + b_in[...]
    q, k, v = qkv[:, :D], qkv[:, D:2 * D], qkv[:, 2 * D:]

    head_outs = []
    for h in range(nhead):                    # static unroll; nhead is small
        sl = slice(h * Dh, (h + 1) * Dh)
        qh, kh, vh = q[:, sl], k[:, sl], v[:, sl]
        s = jnp.einsum('qd,kd->qk', qh, kh,
                       preferred_element_type=jnp.float32) * scale
        s = s + mask                          # (S, S) + (1, S)
        s = s - jnp.max(s, axis=-1, keepdims=True)
        p = jnp.exp(s)
        p = p * pl.reciprocal(jnp.sum(p, axis=-1, keepdims=True), approx=True)
        head_outs.append(jnp.dot(p, vh, preferred_element_type=jnp.float32))
    attn = jnp.concatenate(head_outs, axis=-1)                      # (S, D)
    attn = jnp.dot(attn, w_out[...],
                   preferred_element_type=jnp.float32) + b_out[...]

    # post-norm residual blocks (relu FFN), all f32
    h1 = _ln(x + attn, ln1_g[...], ln1_b[...])
    ff = jnp.maximum(
        jnp.dot(h1, w1[...], preferred_element_type=jnp.float32) + b1[...], 0.0)
    ff = jnp.dot(ff, w2[...], preferred_element_type=jnp.float32) + b2[...]
    out = _ln(h1 + ff, ln2_g[...], ln2_b[...])
    if final_norm:
        out = _ln(out, fn_g[...], fn_b[...])
    o_ref[...] = out.astype(o_ref.dtype)


def fused_encoder_layer(x, add_mask, layer_p, nhead, pe=None, final_norm=None):
    """x: (B, S, D); add_mask: (B, S) additive key-padding mask (0 / -1e30)."""
    B, S, D = x.shape
    mask3 = add_mask.reshape(B, 1, S)

    weight_names = ('w_in', 'b_in', 'w_out', 'b_out', 'ln1_g', 'ln1_b',
                    'w1', 'b1', 'w2', 'b2', 'ln2_g', 'ln2_b')
    weights = []
    if pe is not None:
        weights.append(pe)
    weights += [layer_p[n] for n in weight_names]
    if final_norm is not None:
        weights += list(final_norm)

    in_specs = [pl.BlockSpec((None, S, D), lambda b: (b, 0, 0)),   # x (batch-gridded)
                pl.BlockSpec((None, 1, S), lambda b: (b, 0, 0))]   # mask
    for w in weights:                       # full-array weights, resident across grid
        in_specs.append(pl.BlockSpec(w.shape, lambda b, _nd=w.ndim: (0,) * _nd))

    kernel = functools.partial(_fused_encoder_layer_kernel, nhead=nhead,
                               add_pe=pe is not None,
                               final_norm=final_norm is not None)
    return pl.pallas_call(
        kernel,
        out_shape=jax.ShapeDtypeStruct((B, S, D), jnp.float32),
        grid=(B,),
        in_specs=in_specs,
        out_specs=pl.BlockSpec((None, S, D), lambda b: (b, 0, 0)),
        compiler_params=pltpu.CompilerParams(
            dimension_semantics=("parallel",)),   # shards batch over v7x's 2 TCs
    )(x, mask3, *weights)


def transformer_model(x, params, nhead, key_padding_mask=None):
    # PositionalEncoding + TransformerEncoder stack + final LayerNorm, with the
    # PE add fused into the first layer and the final LN fused into the last.
    B, S, D = x.shape
    if key_padding_mask is None:
        add_mask = jnp.zeros((B, S), jnp.float32)
    else:
        add_mask = jnp.where(key_padding_mask, -1e30, 0.0).astype(jnp.float32)
    nlayers = len(params['layers'])
    for li, layer_p in enumerate(params['layers']):
        pe = params['pe'][:S] if li == 0 else None
        fin = ((params['norm_g'], params['norm_b'])
               if li == nlayers - 1 else None)
        x = fused_encoder_layer(x, add_mask, layer_p, nhead,
                                pe=pe, final_norm=fin)
    return x


# --------------------- small gridless fused kernels ---------------------

def _linear_kernel(x_ref, w_ref, b_ref, o_ref):
    y = jnp.dot(x_ref[...], w_ref[...],
                preferred_element_type=jnp.float32) + b_ref[...]
    o_ref[...] = y.astype(o_ref.dtype)


def pallas_linear(x, w, b):
    M = x.shape[0]
    N = w.shape[1]
    return pl.pallas_call(
        _linear_kernel,
        out_shape=jax.ShapeDtypeStruct((M, N), jnp.float32),
        in_specs=[_vmem_spec()] * 3,
        out_specs=_vmem_spec(),
    )(x, w, b)


def _pframes_kernel(mv_ref, res_ref, w_mv, b_mv, w_res, b_res, w_p, b_p, o_ref):
    # motion-vector stub + residual stub + concat + P_frames_projector, fused.
    mv = jnp.dot(mv_ref[...], w_mv[...],
                 preferred_element_type=jnp.float32) + b_mv[...]
    res = jnp.dot(res_ref[...], w_res[...],
                  preferred_element_type=jnp.float32) + b_res[...]
    feat = jnp.concatenate([mv, res], axis=-1)
    y = jnp.dot(feat, w_p[...], preferred_element_type=jnp.float32) + b_p[...]
    o_ref[...] = y.astype(o_ref.dtype)


def pallas_p_frames(mv, res, params):
    N = mv.shape[0]
    D = params['w_pproj'].shape[1]
    return pl.pallas_call(
        _pframes_kernel,
        out_shape=jax.ShapeDtypeStruct((N, D), jnp.float32),
        in_specs=[_vmem_spec()] * 8,
        out_specs=_vmem_spec(),
    )(mv, res, params['w_mv'], params['b_mv'],
      params['w_res'], params['b_res'],
      params['w_pproj'], params['b_pproj'])


def _spot_head_kernel(pe_ref, ve_ref, w_ref, b_ref, o_ref, *, L):
    # (periods_encoded + video_encoded) residual add, per-period mean pool,
    # and the spotting-head linear, fused. Three static 2-D MXU dots (no 3-D
    # dot_general / stack inside the kernel).
    x = pe_ref[...] + ve_ref[...]                          # (B, 3L, D)
    w = w_ref[...]
    b = b_ref[...]
    for t in range(3):
        pooled = jnp.mean(x[:, t * L:(t + 1) * L, :], axis=1)   # (B, D)
        y = jnp.dot(pooled, w, preferred_element_type=jnp.float32) + b
        o_ref[:, t, :] = y.astype(o_ref.dtype)


def pallas_spot_head(periods_enc, video_enc, w, b, L):
    # Pad the class dim to a full 128-lane group for lane-dense (unmasked)
    # stores; slice back to num_classes in the wrapper.
    B = periods_enc.shape[0]
    C = w.shape[1]
    C_pad = max(128, ((C + 127) // 128) * 128)
    w_pad = jnp.pad(w, ((0, 0), (0, C_pad - C)))
    b_pad = jnp.pad(b, ((0, 0), (0, C_pad - C)))
    out = pl.pallas_call(
        functools.partial(_spot_head_kernel, L=L),
        out_shape=jax.ShapeDtypeStruct((B, 3, C_pad), jnp.float32),
        in_specs=[_vmem_spec()] * 4,
        out_specs=_vmem_spec(),
    )(periods_enc, video_enc, w_pad, b_pad)
    return out[:, :, :C]


# ------------------------------ parameter init ------------------------------

class KeyGen:
    def __init__(self, key):
        self.key = key

    def __call__(self):
        self.key, k = jax.random.split(self.key)
        return k


def _init_linear(kg, din, dout):
    w = 0.02 * jax.random.normal(kg(), (din, dout), jnp.float32)
    b = jnp.zeros((1, dout), jnp.float32)
    return w, b


def _make_pe(max_len, d_model):
    position = jnp.arange(max_len, dtype=jnp.float32)[:, None]
    div_term = jnp.exp(jnp.arange(0, d_model, 2, dtype=jnp.float32)
                       * (-math.log(10000.0) / d_model))
    pe = jnp.zeros((max_len, d_model), jnp.float32)
    pe = pe.at[:, 0::2].set(jnp.sin(position * div_term))
    pe = pe.at[:, 1::2].set(jnp.cos(position * div_term))
    return pe


def _init_encoder_layer(kg, d_model, d_hid):
    w_in, b_in = _init_linear(kg, d_model, 3 * d_model)
    w_out, b_out = _init_linear(kg, d_model, d_model)
    w1, b1 = _init_linear(kg, d_model, d_hid)
    w2, b2 = _init_linear(kg, d_hid, d_model)
    ones = jnp.ones((1, d_model), jnp.float32)
    zeros = jnp.zeros((1, d_model), jnp.float32)
    return dict(w_in=w_in, b_in=b_in, w_out=w_out, b_out=b_out,
                w1=w1, b1=b1, w2=w2, b2=b2,
                ln1_g=ones, ln1_b=zeros, ln2_g=ones, ln2_b=zeros)


def _init_transformer(kg, d_model, d_hid, nlayers, max_pos):
    return dict(pe=_make_pe(max_pos, d_model),
                layers=[_init_encoder_layer(kg, d_model, d_hid)
                        for _ in range(nlayers)],
                norm_g=jnp.ones((1, d_model), jnp.float32),
                norm_b=jnp.zeros((1, d_model), jnp.float32))


def init_cvt5_params(key, cfg, i_flat, mv_flat, res_flat):
    kg = KeyGen(key)
    D = cfg['I_feature_shape']
    params = {}
    # TODO(synk): pretrained CLIPVisionModel (I_frames_encoder) has no in-script
    # Pallas equivalent; replaced by a deterministic linear feature stub.
    params['w_i'], params['b_i'] = _init_linear(kg, i_flat, D)
    # TODO(synk): pretrained resnet18 / ViT motion-vector & residual backbones
    # replaced by deterministic linear feature stubs producing mv/res features.
    params['w_mv'], params['b_mv'] = _init_linear(kg, mv_flat, cfg['mv_feature_shape'])
    params['w_res'], params['b_res'] = _init_linear(kg, res_flat, cfg['res_feature_shape'])
    params['w_pproj'], params['b_pproj'] = _init_linear(
        kg, cfg['mv_feature_shape'] + cfg['res_feature_shape'], D)
    params['frame_type_emb'] = 0.02 * jax.random.normal(kg(), (len(FRAMES_MAP), D), jnp.float32)
    params['period_type_emb'] = 0.02 * jax.random.normal(kg(), (3, D), jnp.float32)
    params['period_encoder'] = _init_transformer(
        kg, D, cfg['period_encoder_d_hid'], cfg['period_encoder_nlayers'],
        cfg['short_memory_len'])
    params['video_encoder'] = _init_transformer(
        kg, D, cfg['video_encoder_d_hid'], cfg['video_encoder_nlayers'],
        cfg['short_memory_len'] * 3)
    params['w_spot'], params['b_spot'] = _init_linear(kg, D, cfg['num_classes'])
    return params


# --------------------------------- forward ---------------------------------

def cvt5_forward(params, frames_map, temporal_masks, I_frames, motion_vectors,
                 residuals, *, cfg):
    L = cfg['short_memory_len']
    D = cfg['I_feature_shape']
    B, S = frames_map.shape
    N_I = I_frames.shape[0]
    N_P = motion_vectors.shape[0]

    # Dropout2d / Dropout1d / Dropout layers: identity (p=0, inference).
    I_enc = pallas_linear(I_frames.reshape(N_I, -1), params['w_i'], params['b_i'])
    P_enc = pallas_p_frames(motion_vectors.reshape(N_P, -1),
                            residuals.reshape(N_P, -1), params)

    # Frame assembly (row-major global I/P counters, exactly like the PyTorch loop).
    flat = frames_map.reshape(-1)
    is_p = flat == FRAMES_MAP['P']
    is_i = flat == FRAMES_MAP['I']
    p_idx = jnp.clip(jnp.cumsum(is_p.astype(jnp.int32)) - 1, 0, N_P - 1)
    i_idx = jnp.clip(jnp.cumsum(is_i.astype(jnp.int32)) - 1, 0, N_I - 1)
    gathered = jnp.where(is_p[:, None], P_enc[p_idx],
                         jnp.where(is_i[:, None], I_enc[i_idx], 0.0))
    frames_encoded = gathered.reshape(B, S, D)

    # FrameTypeEncoding
    frames_encoded = frames_encoded + params['frame_type_emb'][frames_map]

    periods_type = jnp.concatenate([
        jnp.zeros((B, L), jnp.int32),
        jnp.ones((B, L), jnp.int32),
        2 * jnp.ones((B, L), jnp.int32)], axis=1)

    # two_stage_encoder=True: the 3 period chunks share the period-encoder
    # weights, so run them as ONE batched transformer call on (3B, L, D).
    chunks = frames_encoded.reshape(B * 3, L, D)
    periods_encoded = transformer_model(chunks, params['period_encoder'],
                                        cfg['period_encoder_nhead'])
    periods_encoded = periods_encoded.reshape(B, 3 * L, D)
    periods_encoded = periods_encoded + params['period_type_emb'][periods_type]

    video_encoded = transformer_model(periods_encoded, params['video_encoder'],
                                      cfg['video_encoder_nhead'],
                                      key_padding_mask=temporal_masks)

    spotting_logits = pallas_spot_head(periods_encoded, video_encoded,
                                       params['w_spot'], params['b_spot'], L)

    # TODO(synk): umt5_enabled=False -> pretrained UMT5ForConditionalGeneration
    # branch (umt5_projector / generation / loss) is not translated.
    umt5_logits = None
    loss = None
    return spotting_logits, umt5_logits, loss


# ----------------------------------- main -----------------------------------

if __name__ == "__main__":
    CFG = dict(
        short_memory_len=4, I_feature_shape=128,
        mv_feature_shape=64, res_feature_shape=64,
        num_classes=8, dropout=0.0,
        period_encoder_nhead=4, period_encoder_d_hid=128, period_encoder_nlayers=1,
        video_encoder_nhead=4, video_encoder_d_hid=128, video_encoder_nlayers=1,
        feature_extrator='clip-pooler', use_residuals=True,
        two_stage_encoder=True, umt5_enabled=False, use_transcripts_features=False,
    )

    key = jax.random.PRNGKey(0)
    k_param, k_i, k_mv, k_res = jax.random.split(key, 4)

    # frames_map: per sample, 3 periods of length 4: [I, P, P, P]; last frame of
    # sample 1 is <PAD>.
    frames_map = jnp.array(
        [[1, 2, 2, 2, 1, 2, 2, 2, 1, 2, 2, 2],
         [1, 2, 2, 2, 1, 2, 2, 2, 1, 2, 2, 0]], dtype=jnp.int32)
    temporal_masks = frames_map == FRAMES_MAP['<PAD>']          # True = padded
    N_I = int((frames_map == FRAMES_MAP['I']).sum())            # 6
    N_P = int((frames_map == FRAMES_MAP['P']).sum())            # 17

    I_frames = jax.random.normal(k_i, (N_I, 3, 8, 8), jnp.float32)         # NCHW
    motion_vectors = jax.random.normal(k_mv, (N_P, 2, 8, 8), jnp.float32)  # NCHW
    residuals = jax.random.normal(k_res, (N_P, 3, 8, 8), jnp.float32)      # NCHW

    params = init_cvt5_params(
        k_param, CFG,
        i_flat=3 * 8 * 8, mv_flat=2 * 8 * 8, res_flat=3 * 8 * 8)

    forward = jax.jit(functools.partial(cvt5_forward, cfg=CFG))
    spotting_logits, umt5_logits, loss = forward(
        params, frames_map, temporal_masks, I_frames, motion_vectors, residuals)
    spotting_logits = jax.block_until_ready(spotting_logits)

    assert spotting_logits.shape == (2, 3, CFG['num_classes'])
    assert bool(jnp.all(jnp.isfinite(spotting_logits)))
    print("KERNEL_OK")
</pallas_src>

<mosaic_0001>
module attributes {stable_mosaic.version = 11 : i64} {
  func.func @_pframes_kernel(%arg0: memref<17x128xf32, #tpu.memory_space<vmem>>, %arg1: memref<17x192xf32, #tpu.memory_space<vmem>>, %arg2: memref<128x64xf32, #tpu.memory_space<vmem>>, %arg3: memref<1x64xf32, #tpu.memory_space<vmem>>, %arg4: memref<192x64xf32, #tpu.memory_space<vmem>>, %arg5: memref<1x64xf32, #tpu.memory_space<vmem>>, %arg6: memref<128x128xf32, #tpu.memory_space<vmem>>, %arg7: memref<1x128xf32, #tpu.memory_space<vmem>>, %arg8: memref<17x128xf32, #tpu.memory_space<vmem>>) attributes {dimension_semantics = [], scalar_prefetch = 0 : i64, scratch_operands = 0 : i64, tpu.core_type = #tpu.core_type<tc>} {
    %c0 = arith.constant 0 : index
    %c0_0 = arith.constant 0 : index
    %0 = vector.load %arg0[%c0, %c0_0] : memref<17x128xf32, #tpu.memory_space<vmem>>, vector<17x128xf32>
    %c0_1 = arith.constant 0 : index
    %c0_2 = arith.constant 0 : index
    %1 = vector.load %arg2[%c0_1, %c0_2] : memref<128x64xf32, #tpu.memory_space<vmem>>, vector<128x64xf32>
    %cst = arith.constant dense<0.000000e+00> : vector<17x64xf32>
    %2 = tpu.matmul %0, %1, %cst {dimension_numbers = #tpu.dot_dimension_numbers<[1], [0], [0], [1], [0, 0, 1, 1], [], []>} : vector<17x128xf32>, vector<128x64xf32>, vector<17x64xf32> -> vector<17x64xf32>
    %c0_3 = arith.constant 0 : index
    %c0_4 = arith.constant 0 : index
    %3 = vector.load %arg3[%c0_3, %c0_4] : memref<1x64xf32, #tpu.memory_space<vmem>>, vector<1x64xf32>
    %4 = vector.broadcast %3 : vector<1x64xf32> to vector<17x64xf32>
    %5 = arith.addf %2, %4 : vector<17x64xf32>
    %c0_5 = arith.constant 0 : index
    %c0_6 = arith.constant 0 : index
    %6 = vector.load %arg1[%c0_5, %c0_6] : memref<17x192xf32, #tpu.memory_space<vmem>>, vector<17x192xf32>
    %c0_7 = arith.constant 0 : index
    %c0_8 = arith.constant 0 : index
    %7 = vector.load %arg4[%c0_7, %c0_8] : memref<192x64xf32, #tpu.memory_space<vmem>>, vector<192x64xf32>
    %cst_9 = arith.constant dense<0.000000e+00> : vector<17x64xf32>
    %8 = tpu.matmul %6, %7, %cst_9 {dimension_numbers = #tpu.dot_dimension_numbers<[1], [0], [0], [1], [0, 0, 1, 1], [], []>} : vector<17x192xf32>, vector<192x64xf32>, vector<17x64xf32> -> vector<17x64xf32>
    %c0_10 = arith.constant 0 : index
    %c0_11 = arith.constant 0 : index
    %9 = vector.load %arg5[%c0_10, %c0_11] : memref<1x64xf32, #tpu.memory_space<vmem>>, vector<1x64xf32>
    %10 = vector.broadcast %9 : vector<1x64xf32> to vector<17x64xf32>
    %11 = arith.addf %8, %10 : vector<17x64xf32>
    %12 = tpu.concatenate %5, %11 in 1 : vector<17x64xf32>, vector<17x64xf32> -> vector<17x128xf32>
    %c0_12 = arith.constant 0 : index
    %c0_13 = arith.constant 0 : index
    %13 = vector.load %arg6[%c0_12, %c0_13] : memref<128x128xf32, #tpu.memory_space<vmem>>, vector<128x128xf32>
    %cst_14 = arith.constant dense<0.000000e+00> : vector<17x128xf32>
    %14 = tpu.matmul %12, %13, %cst_14 {dimension_numbers = #tpu.dot_dimension_numbers<[1], [0], [0], [1], [0, 0, 1, 1], [], []>} : vector<17x128xf32>, vector<128x128xf32>, vector<17x128xf32> -> vector<17x128xf32>
    %c0_15 = arith.constant 0 : index
    %c0_16 = arith.constant 0 : index
    %15 = vector.load %arg7[%c0_15, %c0_16] : memref<1x128xf32, #tpu.memory_space<vmem>>, vector<1x128xf32>
    %16 = vector.broadcast %15 : vector<1x128xf32> to vector<17x128xf32>
    %17 = arith.addf %14, %16 : vector<17x128xf32>
    %c0_17 = arith.constant 0 : index
    %c0_18 = arith.constant 0 : index
    %18 = vector.load %arg8[%c0_17, %c0_18] : memref<17x128xf32, #tpu.memory_space<vmem>>, vector<17x128xf32>
    tpu.vector_store %arg8[%c0_17, %c0_18], %17 {strides = array<i32>} : memref<17x128xf32, #tpu.memory_space<vmem>>, vector<17x128xf32>,
    return
  }
}

module attributes {stable_mosaic.version = 11 : i64} {
  func.func @_linear_kernel(%arg0: memref<6x192xf32, #tpu.memory_space<vmem>>, %arg1: memref<192x128xf32, #tpu.memory_space<vmem>>, %arg2: memref<1x128xf32, #tpu.memory_space<vmem>>, %arg3: memref<6x128xf32, #tpu.memory_space<vmem>>) attributes {dimension_semantics = [], scalar_prefetch = 0 : i64, scratch_operands = 0 : i64, tpu.core_type = #tpu.core_type<tc>} {
    %c0 = arith.constant 0 : index
    %c0_0 = arith.constant 0 : index
    %0 = vector.load %arg0[%c0, %c0_0] : memref<6x192xf32, #tpu.memory_space<vmem>>, vector<6x192xf32>
    %c0_1 = arith.constant 0 : index
    %c0_2 = arith.constant 0 : index
    %1 = vector.load %arg1[%c0_1, %c0_2] : memref<192x128xf32, #tpu.memory_space<vmem>>, vector<192x128xf32>
    %cst = arith.constant dense<0.000000e+00> : vector<6x128xf32>
    %2 = tpu.matmul %0, %1, %cst {dimension_numbers = #tpu.dot_dimension_numbers<[1], [0], [0], [1], [0, 0, 1, 1], [], []>} : vector<6x192xf32>, vector<192x128xf32>, vector<6x128xf32> -> vector<6x128xf32>
    %c0_3 = arith.constant 0 : index
    %c0_4 = arith.constant 0 : index
    %3 = vector.load %arg2[%c0_3, %c0_4] : memref<1x128xf32, #tpu.memory_space<vmem>>, vector<1x128xf32>
    %4 = vector.broadcast %3 : vector<1x128xf32> to vector<6x128xf32>
    %5 = arith.addf %2, %4 : vector<6x128xf32>
    %c0_5 = arith.constant 0 : index
    %c0_6 = arith.constant 0 : index
    %6 = vector.load %arg3[%c0_5, %c0_6] : memref<6x128xf32, #tpu.memory_space<vmem>>, vector<6x128xf32>
    tpu.vector_store %arg3[%c0_5, %c0_6], %5 {strides = array<i32>} : memref<6x128xf32, #tpu.memory_space<vmem>>, vector<6x128xf32>,
    return
  }
}

module attributes {stable_mosaic.version = 11 : i64} {
  func.func @_fused_encoder_layer_kernel(%arg0: i32, %arg1: memref<1x4x128xf32, #tpu.memory_space<vmem>>, %arg2: memref<1x1x4xf32, #tpu.memory_space<vmem>>, %arg3: memref<4x128xf32, #tpu.memory_space<vmem>>, %arg4: memref<128x384xf32, #tpu.memory_space<vmem>>, %arg5: memref<1x384xf32, #tpu.memory_space<vmem>>, %arg6: memref<128x128xf32, #tpu.memory_space<vmem>>, %arg7: memref<1x128xf32, #tpu.memory_space<vmem>>, %arg8: memref<1x128xf32, #tpu.memory_space<vmem>>, %arg9: memref<1x128xf32, #tpu.memory_space<vmem>>, %arg10: memref<128x128xf32, #tpu.memory_space<vmem>>, %arg11: memref<1x128xf32, #tpu.memory_space<vmem>>, %arg12: memref<128x128xf32, #tpu.memory_space<vmem>>, %arg13: memref<1x128xf32, #tpu.memory_space<vmem>>, %arg14: memref<1x128xf32, #tpu.memory_space<vmem>>, %arg15: memref<1x128xf32, #tpu.memory_space<vmem>>, %arg16: memref<1x128xf32, #tpu.memory_space<vmem>>, %arg17: memref<1x128xf32, #tpu.memory_space<vmem>>, %arg18: memref<1x4x128xf32, #tpu.memory_space<vmem>>) attributes {dimension_semantics = [#tpu.dimension_semantics<parallel>], iteration_bounds = array<i64: 6>, scalar_prefetch = 0 : i64, scratch_operands = 0 : i64, tpu.core_type = #tpu.core_type<tc>, window_params = [{transform_indices = @transform_0, window_bounds = array<i64: 1, 4, 128>}, {transform_indices = @transform_1, window_bounds = array<i64: 1, 1, 4>}, {pipeline_mode = #tpu.pipeline_mode<synchronous>, transform_indices = @transform_2, window_bounds = array<i64: 4, 128>}, {pipeline_mode = #tpu.pipeline_mode<synchronous>, transform_indices = @transform_3, window_bounds = array<i64: 128, 384>}, {pipeline_mode = #tpu.pipeline_mode<synchronous>, transform_indices = @transform_4, window_bounds = array<i64: 1, 384>}, {pipeline_mode = #tpu.pipeline_mode<synchronous>, transform_indices = @transform_5, window_bounds = array<i64: 128, 128>}, {pipeline_mode = #tpu.pipeline_mode<synchronous>, transform_indices = @transform_6, window_bounds = array<i64: 1, 128>}, {pipeline_mode = #tpu.pipeline_mode<synchronous>, transform_indices = @transform_7, window_bounds = array<i64: 1, 128>}, {pipeline_mode = #tpu.pipeline_mode<synchronous>, transform_indices = @transform_8, window_bounds = array<i64: 1, 128>}, {pipeline_mode = #tpu.pipeline_mode<synchronous>, transform_indices = @transform_9, window_bounds = array<i64: 128, 128>}, {pipeline_mode = #tpu.pipeline_mode<synchronous>, transform_indices = @transform_10, window_bounds = array<i64: 1, 128>}, {pipeline_mode = #tpu.pipeline_mode<synchronous>, transform_indices = @transform_11, window_bounds = array<i64: 128, 128>}, {pipeline_mode = #tpu.pipeline_mode<synchronous>, transform_indices = @transform_12, window_bounds = array<i64: 1, 128>}, {pipeline_mode = #tpu.pipeline_mode<synchronous>, transform_indices = @transform_13, window_bounds = array<i64: 1, 128>}, {pipeline_mode = #tpu.pipeline_mode<synchronous>, transform_indices = @transform_14, window_bounds = array<i64: 1, 128>}, {pipeline_mode = #tpu.pipeline_mode<synchronous>, transform_indices = @transform_15, window_bounds = array<i64: 1, 128>}, {pipeline_mode = #tpu.pipeline_mode<synchronous>, transform_indices = @transform_16, window_bounds = array<i64: 1, 128>}, {transform_indices = @transform_17, window_bounds = array<i64: 1, 4, 128>}]} {
    %c0 = arith.constant 0 : index
    %c0_0 = arith.constant 0 : index
    %c0_1 = arith.constant 0 : index
    %0 = vector.load %arg1[%c0, %c0_0, %c0_1] : memref<1x4x128xf32, #tpu.memory_space<vmem>>, vector<1x4x128xf32>
    %1 = vector.shape_cast %0 : vector<1x4x128xf32> to vector<4x128xf32>
    %c0_2 = arith.constant 0 : index
    %c0_3 = arith.constant 0 : index
    %2 = vector.load %arg3[%c0_2, %c0_3] : memref<4x128xf32, #tpu.memory_space<vmem>>, vector<4x128xf32>
    %3 = arith.addf %1, %2 : vector<4x128xf32>
    %c0_4 = arith.constant 0 : index
    %c0_5 = arith.constant 0 : index
    %c0_6 = arith.constant 0 : index
    %4 = vector.load %arg2[%c0_4, %c0_5, %c0_6] : memref<1x1x4xf32, #tpu.memory_space<vmem>>, vector<1x1x4xf32>
    %5 = vector.shape_cast %4 : vector<1x1x4xf32> to vector<1x4xf32>
    %c0_7 = arith.constant 0 : index
    %c0_8 = arith.constant 0 : index
    %6 = vector.load %arg4[%c0_7, %c0_8] : memref<128x384xf32, #tpu.memory_space<vmem>>, vector<128x384xf32>
    %cst = arith.constant dense<0.000000e+00> : vector<4x384xf32>
    %7 = tpu.matmul %3, %6, %cst {dimension_numbers = #tpu.dot_dimension_numbers<[1], [0], [0], [1], [0, 0, 1, 1], [], []>} : vector<4x128xf32>, vector<128x384xf32>, vector<4x384xf32> -> vector<4x384xf32>
    %c0_9 = arith.constant 0 : index
    %c0_10 = arith.constant 0 : index
    %8 = vector.load %arg5[%c0_9, %c0_10] : memref<1x384xf32, #tpu.memory_space<vmem>>, vector<1x384xf32>
    %9 = vector.broadcast %8 : vector<1x384xf32> to vector<4x384xf32>
    %10 = arith.addf %7, %9 : vector<4x384xf32>
    %11 = vector.extract_strided_slice %10 {offsets = [0, 0], sizes = [4, 128], strides = [1, 1]} : vector<4x384xf32> to vector<4x128xf32>
    %12 = vector.extract_strided_slice %10 {offsets = [0, 128], sizes = [4, 128], strides = [1, 1]} : vector<4x384xf32> to vector<4x128xf32>
    %13 = vector.extract_strided_slice %10 {offsets = [0, 256], sizes = [4, 128], strides = [1, 1]} : vector<4x384xf32> to vector<4x128xf32>
    %14 = vector.extract_strided_slice %11 {offsets = [0, 0], sizes = [4, 32], strides = [1, 1]} : vector<4x128xf32> to vector<4x32xf32>
    %15 = vector.extract_strided_slice %12 {offsets = [0, 0], sizes = [4, 32], strides = [1, 1]} : vector<4x128xf32> to vector<4x32xf32>
    %16 = vector.extract_strided_slice %13 {offsets = [0, 0], sizes = [4, 32], strides = [1, 1]} : vector<4x128xf32> to vector<4x32xf32>
    "tpu.trace_start"() <{level = 10 : i32, message = "qd,kd->qk"}> : () -> ()
    %cst_11 = arith.constant dense<0.000000e+00> : vector<4x4xf32>
    %17 = tpu.matmul %14, %15, %cst_11 {dimension_numbers = #tpu.dot_dimension_numbers<[1], [1], [0], [0], [0, 0, 1, 0], [], []>} : vector<4x32xf32>, vector<4x32xf32>, vector<4x4xf32> -> vector<4x4xf32>
    "tpu.trace_stop"() : () -> ()
    %cst_12 = arith.constant 0.176776692 : f32
    %18 = vector.broadcast %cst_12 : f32 to vector<4x4xf32>
    %19 = arith.mulf %17, %18 : vector<4x4xf32>
    %20 = vector.broadcast %5 : vector<1x4xf32> to vector<4x4xf32>
    %21 = arith.addf %19, %20 : vector<4x4xf32>
    %cst_13 = arith.constant dense<0xFF800000> : vector<4xf32>
    %22 = vector.multi_reduction <maximumf>, %21, %cst_13 [1] : vector<4x4xf32> to vector<4xf32>
    %23 = vector.shape_cast %22 : vector<4xf32> to vector<4x1xf32>
    %24 = vector.broadcast %23 : vector<4x1xf32> to vector<4x4xf32>
    %25 = arith.subf %21, %24 : vector<4x4xf32>
    %26 = math.exp %25 : vector<4x4xf32>
    %cst_14 = arith.constant dense<0.000000e+00> : vector<4xf32>
    %27 = vector.multi_reduction <add>, %26, %cst_14 [1] : vector<4x4xf32> to vector<4xf32>
    %28 = vector.shape_cast %27 : vector<4xf32> to vector<4x1xf32>
    %29 = tpu.reciprocal %28 {approx = true} : vector<4x1xf32> -> vector<4x1xf32>
    %30 = vector.broadcast %29 : vector<4x1xf32> to vector<4x4xf32>
    %31 = arith.mulf %26, %30 : vector<4x4xf32>
    %cst_15 = arith.constant dense<0.000000e+00> : vector<4x32xf32>
    %32 = tpu.matmul %31, %16, %cst_15 {dimension_numbers = #tpu.dot_dimension_numbers<[1], [0], [0], [1], [0, 0, 1, 1], [], []>} : vector<4x4xf32>, vector<4x32xf32>, vector<4x32xf32> -> vector<4x32xf32>
    %33 = vector.extract_strided_slice %11 {offsets = [0, 32], sizes = [4, 32], strides = [1, 1]} : vector<4x128xf32> to vector<4x32xf32>
    %34 = vector.extract_strided_slice %12 {offsets = [0, 32], sizes = [4, 32], strides = [1, 1]} : vector<4x128xf32> to vector<4x32xf32>
    %35 = vector.extract_strided_slice %13 {offsets = [0, 32], sizes = [4, 32], strides = [1, 1]} : vector<4x128xf32> to vector<4x32xf32>
    "tpu.trace_start"() <{level = 10 : i32, message = "qd,kd->qk"}> : () -> ()
    %cst_16 = arith.constant dense<0.000000e+00> : vector<4x4xf32>
    %36 = tpu.matmul %33, %34, %cst_16 {dimension_numbers = #tpu.dot_dimension_numbers<[1], [1], [0], [0], [0, 0, 1, 0], [], []>} : vector<4x32xf32>, vector<4x32xf32>, vector<4x4xf32> -> vector<4x4xf32>
    "tpu.trace_stop"() : () -> ()
    %cst_17 = arith.constant 0.176776692 : f32
    %37 = vector.broadcast %cst_17 : f32 to vector<4x4xf32>
    %38 = arith.mulf %36, %37 : vector<4x4xf32>
    %39 = vector.broadcast %5 : vector<1x4xf32> to vector<4x4xf32>
    %40 = arith.addf %38, %39 : vector<4x4xf32>
    %cst_18 = arith.constant dense<0xFF800000> : vector<4xf32>
    %41 = vector.multi_reduction <maximumf>, %40, %cst_18 [1] : vector<4x4xf32> to vector<4xf32>
    %42 = vector.shape_cast %41 : vector<4xf32> to vector<4x1xf32>
    %43 = vector.broadcast %42 : vector<4x1xf32> to vector<4x4xf32>
    %44 = arith.subf %40, %43 : vector<4x4xf32>
    %45 = math.exp %44 : vector<4x4xf32>
    %cst_19 = arith.constant dense<0.000000e+00> : vector<4xf32>
    %46 = vector.multi_reduction <add>, %45, %cst_19 [1] : vector<4x4xf32> to vector<4xf32>
    %47 = vector.shape_cast %46 : vector<4xf32> to vector<4x1xf32>
    %48 = tpu.reciprocal %47 {approx = true} : vector<4x1xf32> -> vector<4x1xf32>
    %49 = vector.broadcast %48 : vector<4x1xf32> to vector<4x4xf32>
    %50 = arith.mulf %45, %49 : vector<4x4xf32>
    %cst_20 = arith.constant dense<0.000000e+00> : vector<4x32xf32>
    %51 = tpu.matmul %50, %35, %cst_20 {dimension_numbers = #tpu.dot_dimension_numbers<[1], [0], [0], [1], [0, 0, 1, 1], [], []>} : vector<4x4xf32>, vector<4x32xf32>, vector<4x32xf32> -> vector<4x32xf32>
    %52 = vector.extract_strided_slice %11 {offsets = [0, 64], sizes = [4, 32], strides = [1, 1]} : vector<4x128xf32> to vector<4x32xf32>
    %53 = vector.extract_strided_slice %12 {offsets = [0, 64], sizes = [4, 32], strides = [1, 1]} : vector<4x128xf32> to vector<4x32xf32>
    %54 = vector.extract_strided_slice %13 {offsets = [0, 64], sizes = [4, 32], strides = [1, 1]} : vector<4x128xf32> to vector<4x32xf32>
    "tpu.trace_start"() <{level = 10 : i32, message = "qd,kd->qk"}> : () -> ()
    %cst_21 = arith.constant dense<0.000000e+00> : vector<4x4xf32>
    %55 = tpu.matmul %52, %53, %cst_21 {dimension_numbers = #tpu.dot_dimension_numbers<[1], [1], [0], [0], [0, 0, 1, 0], [], []>} : vector<4x32xf32>, vector<4x32xf32>, vector<4x4xf32> -> vector<4x4xf32>
    "tpu.trace_stop"() : () -> ()
    %cst_22 = arith.constant 0.176776692 : f32
    %56 = vector.broadcast %cst_22 : f32 to vector<4x4xf32>
    %57 = arith.mulf %55, %56 : vector<4x4xf32>
    %58 = vector.broadcast %5 : vector<1x4xf32> to vector<4x4xf32>
    %59 = arith.addf %57, %58 : vector<4x4xf32>
    %cst_23 = arith.constant dense<0xFF800000> : vector<4xf32>
    %60 = vector.multi_reduction <maximumf>, %59, %cst_23 [1] : vector<4x4xf32> to vector<4xf32>
    %61 = vector.shape_cast %60 : vector<4xf32> to vector<4x1xf32>
    %62 = vector.broadcast %61 : vector<4x1xf32> to vector<4x4xf32>
    %63 = arith.subf %59, %62 : vector<4x4xf32>
    %64 = math.exp %63 : vector<4x4xf32>
    %cst_24 = arith.constant dense<0.000000e+00> : vector<4xf32>
    %65 = vector.multi_reduction <add>, %64, %cst_24 [1] : vector<4x4xf32> to vector<4xf32>
    %66 = vector.shape_cast %65 : vector<4xf32> to vector<4x1xf32>
    %67 = tpu.reciprocal %66 {approx = true} : vector<4x1xf32> -> vector<4x1xf32>
    %68 = vector.broadcast %67 : vector<4x1xf32> to vector<4x4xf32>
    %69 = arith.mulf %64, %68 : vector<4x4xf32>
    %cst_25 = arith.constant dense<0.000000e+00> : vector<4x32xf32>
    %70 = tpu.matmul %69, %54, %cst_25 {dimension_numbers = #tpu.dot_dimension_numbers<[1], [0], [0], [1], [0, 0, 1, 1], [], []>} : vector<4x4xf32>, vector<4x32xf32>, vector<4x32xf32> -> vector<4x32xf32>
    %71 = vector.extract_strided_slice %11 {offsets = [0, 96], sizes = [4, 32], strides = [1, 1]} : vector<4x128xf32> to vector<4x32xf32>
    %72 = vector.extract_strided_slice %12 {offsets = [0, 96], sizes = [4, 32], strides = [1, 1]} : vector<4x128xf32> to vector<4x32xf32>
    %73 = vector.extract_strided_slice %13 {offsets = [0, 96], sizes = [4, 32], strides = [1, 1]} : vector<4x128xf32> to vector<4x32xf32>
    "tpu.trace_start"() <{level = 10 : i32, message = "qd,kd->qk"}> : () -> ()
    %cst_26 = arith.constant dense<0.000000e+00> : vector<4x4xf32>
    %74 = tpu.matmul %71, %72, %cst_26 {dimension_numbers = #tpu.dot_dimension_numbers<[1], [1], [0], [0], [0, 0, 1, 0], [], []>} : vector<4x32xf32>, vector<4x32xf32>, vector<4x4xf32> -> vector<4x4xf32>
    "tpu.trace_stop"() : () -> ()
    %cst_27 = arith.constant 0.176776692 : f32
    %75 = vector.broadcast %cst_27 : f32 to vector<4x4xf32>
    %76 = arith.mulf %74, %75 : vector<4x4xf32>
    %77 = vector.broadcast %5 : vector<1x4xf32> to vector<4x4xf32>
    %78 = arith.addf %76, %77 : vector<4x4xf32>
    %cst_28 = arith.constant dense<0xFF800000> : vector<4xf32>
    %79 = vector.multi_reduction <maximumf>, %78, %cst_28 [1] : vector<4x4xf32> to vector<4xf32>
    %80 = vector.shape_cast %79 : vector<4xf32> to vector<4x1xf32>
    %81 = vector.broadcast %80 : vector<4x1xf32> to vector<4x4xf32>
    %82 = arith.subf %78, %81 : vector<4x4xf32>
    %83 = math.exp %82 : vector<4x4xf32>
    %cst_29 = arith.constant dense<0.000000e+00> : vector<4xf32>
    %84 = vector.multi_reduction <add>, %83, %cst_29 [1] : vector<4x4xf32> to vector<4xf32>
    %85 = vector.shape_cast %84 : vector<4xf32> to vector<4x1xf32>
    %86 = tpu.reciprocal %85 {approx = true} : vector<4x1xf32> -> vector<4x1xf32>
    %87 = vector.broadcast %86 : vector<4x1xf32> to vector<4x4xf32>
    %88 = arith.mulf %83, %87 : vector<4x4xf32>
    %cst_30 = arith.constant dense<0.000000e+00> : vector<4x32xf32>
    %89 = tpu.matmul %88, %73, %cst_30 {dimension_numbers = #tpu.dot_dimension_numbers<[1], [0], [0], [1], [0, 0, 1, 1], [], []>} : vector<4x4xf32>, vector<4x32xf32>, vector<4x32xf32> -> vector<4x32xf32>
    %90 = tpu.concatenate %32, %51, %70, %89 in 1 : vector<4x32xf32>, vector<4x32xf32>, vector<4x32xf32>, vector<4x32xf32> -> vector<4x128xf32>
    %c0_31 = arith.constant 0 : index
    %c0_32 = arith.constant 0 : index
    %91 = vector.load %arg6[%c0_31, %c0_32] : memref<128x128xf32, #tpu.memory_space<vmem>>, vector<128x128xf32>
    %cst_33 = arith.constant dense<0.000000e+00> : vector<4x128xf32>
    %92 = tpu.matmul %90, %91, %cst_33 {dimension_numbers = #tpu.dot_dimension_numbers<[1], [0], [0], [1], [0, 0, 1, 1], [], []>} : vector<4x128xf32>, vector<128x128xf32>, vector<4x128xf32> -> vector<4x128xf32>
    %c0_34 = arith.constant 0 : index
    %c0_35 = arith.constant 0 : index
    %93 = vector.load %arg7[%c0_34, %c0_35] : memref<1x128xf32, #tpu.memory_space<vmem>>, vector<1x128xf32>
    %94 = vector.broadcast %93 : vector<1x128xf32> to vector<4x128xf32>
    %95 = arith.addf %92, %94 : vector<4x128xf32>
    %96 = arith.addf %3, %95 : vector<4x128xf32>
    %c0_36 = arith.constant 0 : index
    %c0_37 = arith.constant 0 : index
    %97 = vector.load %arg8[%c0_36, %c0_37] : memref<1x128xf32, #tpu.memory_space<vmem>>, vector<1x128xf32>
    %c0_38 = arith.constant 0 : index
    %c0_39 = arith.constant 0 : index
    %98 = vector.load %arg9[%c0_38, %c0_39] : memref<1x128xf32, #tpu.memory_space<vmem>>, vector<1x128xf32>
    %cst_40 = arith.constant dense<0.000000e+00> : vector<4xf32>
    %99 = vector.multi_reduction <add>, %96, %cst_40 [1] : vector<4x128xf32> to vector<4xf32>
    %100 = vector.shape_cast %99 : vector<4xf32> to vector<4x1xf32>
    %cst_41 = arith.constant 1.280000e+02 : f32
    %101 = vector.broadcast %cst_41 : f32 to vector<4x1xf32>
    %102 = arith.divf %100, %101 : vector<4x1xf32>
    %103 = vector.broadcast %102 : vector<4x1xf32> to vector<4x128xf32>
    %104 = arith.subf %96, %103 : vector<4x128xf32>
    %105 = arith.mulf %104, %104 : vector<4x128xf32>
    %cst_42 = arith.constant dense<0.000000e+00> : vector<4xf32>
    %106 = vector.multi_reduction <add>, %105, %cst_42 [1] : vector<4x128xf32> to vector<4xf32>
    %107 = vector.shape_cast %106 : vector<4xf32> to vector<4x1xf32>
    %cst_43 = arith.constant 1.280000e+02 : f32
    %108 = vector.broadcast %cst_43 : f32 to vector<4x1xf32>
    %109 = arith.divf %107, %108 : vector<4x1xf32>
    %cst_44 = arith.constant 9.99999974E-6 : f32
    %110 = vector.broadcast %cst_44 : f32 to vector<4x1xf32>
    %111 = arith.addf %109, %110 : vector<4x1xf32>
    %112 = math.rsqrt %111 : vector<4x1xf32>
    %113 = vector.broadcast %112 : vector<4x1xf32> to vector<4x128xf32>
    %114 = arith.mulf %104, %113 : vector<4x128xf32>
    %115 = vector.broadcast %97 : vector<1x128xf32> to vector<4x128xf32>
    %116 = arith.mulf %114, %115 : vector<4x128xf32>
    %117 = vector.broadcast %98 : vector<1x128xf32> to vector<4x128xf32>
    %118 = arith.addf %116, %117 : vector<4x128xf32>
    %c0_45 = arith.constant 0 : index
    %c0_46 = arith.constant 0 : index
    %119 = vector.load %arg10[%c0_45, %c0_46] : memref<128x128xf32, #tpu.memory_space<vmem>>, vector<128x128xf32>
    %cst_47 = arith.constant dense<0.000000e+00> : vector<4x128xf32>
    %120 = tpu.matmul %118, %119, %cst_47 {dimension_numbers = #tpu.dot_dimension_numbers<[1], [0], [0], [1], [0, 0, 1, 1], [], []>} : vector<4x128xf32>, vector<128x128xf32>, vector<4x128xf32> -> vector<4x128xf32>
    %c0_48 = arith.constant 0 : index
    %c0_49 = arith.constant 0 : index
    %121 = vector.load %arg11[%c0_48, %c0_49] : memref<1x128xf32, #tpu.memory_space<vmem>>, vector<1x128xf32>
    %122 = vector.broadcast %121 : vector<1x128xf32> to vector<4x128xf32>
    %123 = arith.addf %120, %122 : vector<4x128xf32>
    %cst_50 = arith.constant 0.000000e+00 : f32
    %124 = vector.broadcast %cst_50 : f32 to vector<4x128xf32>
    %125 = arith.maximumf %123, %124 : vector<4x128xf32>
    %c0_51 = arith.constant 0 : index
    %c0_52 = arith.constant 0 : index
    %126 = vector.load %arg12[%c0_51, %c0_52] : memref<128x128xf32, #tpu.memory_space<vmem>>, vector<128x128xf32>
    %cst_53 = arith.constant dense<0.000000e+00> : vector<4x128xf32>
    %127 = tpu.matmul %125, %126, %cst_53 {dimension_numbers = #tpu.dot_dimension_numbers<[1], [0], [0], [1], [0, 0, 1, 1], [], []>} : vector<4x128xf32>, vector<128x128xf32>, vector<4x128xf32> -> vector<4x128xf32>
    %c0_54 = arith.constant 0 : index
    %c0_55 = arith.constant 0 : index
    %128 = vector.load %arg13[%c0_54, %c0_55] : memref<1x128xf32, #tpu.memory_space<vmem>>, vector<1x128xf32>
    %129 = vector.broadcast %128 : vector<1x128xf32> to vector<4x128xf32>
    %130 = arith.addf %127, %129 : vector<4x128xf32>
    %131 = arith.addf %118, %130 : vector<4x128xf32>
    %c0_56 = arith.constant 0 : index
    %c0_57 = arith.constant 0 : index
    %132 = vector.load %arg14[%c0_56, %c0_57] : memref<1x128xf32, #tpu.memory_space<vmem>>, vector<1x128xf32>
    %c0_58 = arith.constant 0 : index
    %c0_59 = arith.constant 0 : index
    %133 = vector.load %arg15[%c0_58, %c0_59] : memref<1x128xf32, #tpu.memory_space<vmem>>, vector<1x128xf32>
    %cst_60 = arith.constant dense<0.000000e+00> : vector<4xf32>
    %134 = vector.multi_reduction <add>, %131, %cst_60 [1] : vector<4x128xf32> to vector<4xf32>
    %135 = vector.shape_cast %134 : vector<4xf32> to vector<4x1xf32>
    %cst_61 = arith.constant 1.280000e+02 : f32
    %136 = vector.broadcast %cst_61 : f32 to vector<4x1xf32>
    %137 = arith.divf %135, %136 : vector<4x1xf32>
    %138 = vector.broadcast %137 : vector<4x1xf32> to vector<4x128xf32>
    %139 = arith.subf %131, %138 : vector<4x128xf32>
    %140 = arith.mulf %139, %139 : vector<4x128xf32>
    %cst_62 = arith.constant dense<0.000000e+00> : vector<4xf32>
    %141 = vector.multi_reduction <add>, %140, %cst_62 [1] : vector<4x128xf32> to vector<4xf32>
    %142 = vector.shape_cast %141 : vector<4xf32> to vector<4x1xf32>
    %cst_63 = arith.constant 1.280000e+02 : f32
    %143 = vector.broadcast %cst_63 : f32 to vector<4x1xf32>
    %144 = arith.divf %142, %143 : vector<4x1xf32>
    %cst_64 = arith.constant 9.99999974E-6 : f32
    %145 = vector.broadcast %cst_64 : f32 to vector<4x1xf32>
    %146 = arith.addf %144, %145 : vector<4x1xf32>
    %147 = math.rsqrt %146 : vector<4x1xf32>
    %148 = vector.broadcast %147 : vector<4x1xf32> to vector<4x128xf32>
    %149 = arith.mulf %139, %148 : vector<4x128xf32>
    %150 = vector.broadcast %132 : vector<1x128xf32> to vector<4x128xf32>
    %151 = arith.mulf %149, %150 : vector<4x128xf32>
    %152 = vector.broadcast %133 : vector<1x128xf32> to vector<4x128xf32>
    %153 = arith.addf %151, %152 : vector<4x128xf32>
    %c0_65 = arith.constant 0 : index
    %c0_66 = arith.constant 0 : index
    %154 = vector.load %arg16[%c0_65, %c0_66] : memref<1x128xf32, #tpu.memory_space<vmem>>, vector<1x128xf32>
    %c0_67 = arith.constant 0 : index
    %c0_68 = arith.constant 0 : index
    %155 = vector.load %arg17[%c0_67, %c0_68] : memref<1x128xf32, #tpu.memory_space<vmem>>, vector<1x128xf32>
    %cst_69 = arith.constant dense<0.000000e+00> : vector<4xf32>
    %156 = vector.multi_reduction <add>, %153, %cst_69 [1] : vector<4x128xf32> to vector<4xf32>
    %157 = vector.shape_cast %156 : vector<4xf32> to vector<4x1xf32>
    %cst_70 = arith.constant 1.280000e+02 : f32
    %158 = vector.broadcast %cst_70 : f32 to vector<4x1xf32>
    %159 = arith.divf %157, %158 : vector<4x1xf32>
    %160 = vector.broadcast %159 : vector<4x1xf32> to vector<4x128xf32>
    %161 = arith.subf %153, %160 : vector<4x128xf32>
    %162 = arith.mulf %161, %161 : vector<4x128xf32>
    %cst_71 = arith.constant dense<0.000000e+00> : vector<4xf32>
    %163 = vector.multi_reduction <add>, %162, %cst_71 [1] : vector<4x128xf32> to vector<4xf32>
    %164 = vector.shape_cast %163 : vector<4xf32> to vector<4x1xf32>
    %cst_72 = arith.constant 1.280000e+02 : f32
    %165 = vector.broadcast %cst_72 : f32 to vector<4x1xf32>
    %166 = arith.divf %164, %165 : vector<4x1xf32>
    %cst_73 = arith.constant 9.99999974E-6 : f32
    %167 = vector.broadcast %cst_73 : f32 to vector<4x1xf32>
    %168 = arith.addf %166, %167 : vector<4x1xf32>
    %169 = math.rsqrt %168 : vector<4x1xf32>
    %170 = vector.broadcast %169 : vector<4x1xf32> to vector<4x128xf32>
    %171 = arith.mulf %161, %170 : vector<4x128xf32>
    %172 = vector.broadcast %154 : vector<1x128xf32> to vector<4x128xf32>
    %173 = arith.mulf %171, %172 : vector<4x128xf32>
    %174 = vector.broadcast %155 : vector<1x128xf32> to vector<4x128xf32>
    %175 = arith.addf %173, %174 : vector<4x128xf32>
    %c0_74 = arith.constant 0 : index
    %c0_75 = arith.constant 0 : index
    %c0_76 = arith.constant 0 : index
    %176 = vector.load %arg18[%c0_74, %c0_75, %c0_76] : memref<1x4x128xf32, #tpu.memory_space<vmem>>, vector<1x4x128xf32>
    %177 = vector.shape_cast %176 : vector<1x4x128xf32> to vector<4x128xf32>
    %178 = vector.shape_cast %175 : vector<4x128xf32> to vector<1x4x128xf32>
    tpu.vector_store %arg18[%c0_74, %c0_75, %c0_76], %178 {strides = array<i32>} : memref<1x4x128xf32, #tpu.memory_space<vmem>>, vector<1x4x128xf32>,
    return
  }
  func.func @transform_0(%arg0: i32) -> (i32, i32, i32) {
    %c0_i32 = arith.constant 0 : i32
    %c0_i32_0 = arith.constant 0 : i32
    %c0_i32_1 = arith.constant 0 : i32
    return %arg0, %c0_i32, %c0_i32_0 : i32, i32, i32
  }
  func.func @transform_1(%arg0: i32) -> (i32, i32, i32) {
    %c0_i32 = arith.constant 0 : i32
    %c0_i32_0 = arith.constant 0 : i32
    %c0_i32_1 = arith.constant 0 : i32
    return %arg0, %c0_i32, %c0_i32_0 : i32, i32, i32
  }
  func.func @transform_2(%arg0: i32) -> (i32, i32) {
    %c0_i32 = arith.constant 0 : i32
    %c0_i32_0 = arith.constant 0 : i32
    %c0_i32_1 = arith.constant 0 : i32
    return %c0_i32, %c0_i32_0 : i32, i32
  }
  func.func @transform_3(%arg0: i32) -> (i32, i32) {
    %c0_i32 = arith.constant 0 : i32
    %c0_i32_0 = arith.constant 0 : i32
    %c0_i32_1 = arith.constant 0 : i32
    return %c0_i32, %c0_i32_0 : i32, i32
  }
  func.func @transform_4(%arg0: i32) -> (i32, i32) {
    %c0_i32 = arith.constant 0 : i32
    %c0_i32_0 = arith.constant 0 : i32
    %c0_i32_1 = arith.constant 0 : i32
    return %c0_i32, %c0_i32_0 : i32, i32
  }
  func.func @transform_5(%arg0: i32) -> (i32, i32) {
    %c0_i32 = arith.constant 0 : i32
    %c0_i32_0 = arith.constant 0 : i32
    %c0_i32_1 = arith.constant 0 : i32
    return %c0_i32, %c0_i32_0 : i32, i32
  }
  func.func @transform_6(%arg0: i32) -> (i32, i32) {
    %c0_i32 = arith.constant 0 : i32
    %c0_i32_0 = arith.constant 0 : i32
    %c0_i32_1 = arith.constant 0 : i32
    return %c0_i32, %c0_i32_0 : i32, i32
  }
  func.func @transform_7(%arg0: i32) -> (i32, i32) {
    %c0_i32 = arith.constant 0 : i32
    %c0_i32_0 = arith.constant 0 : i32
    %c0_i32_1 = arith.constant 0 : i32
    return %c0_i32, %c0_i32_0 : i32, i32
  }
  func.func @transform_8(%arg0: i32) -> (i32, i32) {
    %c0_i32 = arith.constant 0 : i32
    %c0_i32_0 = arith.constant 0 : i32
    %c0_i32_1 = arith.constant 0 : i32
    return %c0_i32, %c0_i32_0 : i32, i32
  }
  func.func @transform_9(%arg0: i32) -> (i32, i32) {
    %c0_i32 = arith.constant 0 : i32
    %c0_i32_0 = arith.constant 0 : i32
    %c0_i32_1 = arith.constant 0 : i32
    return %c0_i32, %c0_i32_0 : i32, i32
  }
  func.func @transform_10(%arg0: i32) -> (i32, i32) {
    %c0_i32 = arith.constant 0 : i32
    %c0_i32_0 = arith.constant 0 : i32
    %c0_i32_1 = arith.constant 0 : i32
    return %c0_i32, %c0_i32_0 : i32, i32
  }
  func.func @transform_11(%arg0: i32) -> (i32, i32) {
    %c0_i32 = arith.constant 0 : i32
    %c0_i32_0 = arith.constant 0 : i32
    %c0_i32_1 = arith.constant 0 : i32
    return %c0_i32, %c0_i32_0 : i32, i32
  }
  func.func @transform_12(%arg0: i32) -> (i32, i32) {
    %c0_i32 = arith.constant 0 : i32
    %c0_i32_0 = arith.constant 0 : i32
    %c0_i32_1 = arith.constant 0 : i32
    return %c0_i32, %c0_i32_0 : i32, i32
  }
  func.func @transform_13(%arg0: i32) -> (i32, i32) {
    %c0_i32 = arith.constant 0 : i32
    %c0_i32_0 = arith.constant 0 : i32
    %c0_i32_1 = arith.constant 0 : i32
    return %c0_i32, %c0_i32_0 : i32, i32
  }
  func.func @transform_14(%arg0: i32) -> (i32, i32) {
    %c0_i32 = arith.constant 0 : i32
    %c0_i32_0 = arith.constant 0 : i32
    %c0_i32_1 = arith.constant 0 : i32
    return %c0_i32, %c0_i32_0 : i32, i32
  }
  func.func @transform_15(%arg0: i32) -> (i32, i32) {
    %c0_i32 = arith.constant 0 : i32
    %c0_i32_0 = arith.constant 0 : i32
    %c0_i32_1 = arith.constant 0 : i32
    return %c0_i32, %c0_i32_0 : i32, i32
  }
  func.func @transform_16(%arg0: i32) -> (i32, i32) {
    %c0_i32 = arith.constant 0 : i32
    %c0_i32_0 = arith.constant 0 : i32
    %c0_i32_1 = arith.constant 0 : i32
    return %c0_i32, %c0_i32_0 : i32, i32
  }
  func.func @transform_17(%arg0: i32) -> (i32, i32, i32) {
    %c0_i32 = arith.constant 0 : i32
    %c0_i32_0 = arith.constant 0 : i32
    %c0_i32_1 = arith.constant 0 : i32
    return %arg0, %c0_i32, %c0_i32_0 : i32, i32, i32
  }
}

module attributes {stable_mosaic.version = 11 : i64} {
  func.func @_fused_encoder_layer_kernel(%arg0: i32, %arg1: memref<1x12x128xf32, #tpu.memory_space<vmem>>, %arg2: memref<1x1x12xf32, #tpu.memory_space<vmem>>, %arg3: memref<12x128xf32, #tpu.memory_space<vmem>>, %arg4: memref<128x384xf32, #tpu.memory_space<vmem>>, %arg5: memref<1x384xf32, #tpu.memory_space<vmem>>, %arg6: memref<128x128xf32, #tpu.memory_space<vmem>>, %arg7: memref<1x128xf32, #tpu.memory_space<vmem>>, %arg8: memref<1x128xf32, #tpu.memory_space<vmem>>, %arg9: memref<1x128xf32, #tpu.memory_space<vmem>>, %arg10: memref<128x128xf32, #tpu.memory_space<vmem>>, %arg11: memref<1x128xf32, #tpu.memory_space<vmem>>, %arg12: memref<128x128xf32, #tpu.memory_space<vmem>>, %arg13: memref<1x128xf32, #tpu.memory_space<vmem>>, %arg14: memref<1x128xf32, #tpu.memory_space<vmem>>, %arg15: memref<1x128xf32, #tpu.memory_space<vmem>>, %arg16: memref<1x128xf32, #tpu.memory_space<vmem>>, %arg17: memref<1x128xf32, #tpu.memory_space<vmem>>, %arg18: memref<1x12x128xf32, #tpu.memory_space<vmem>>) attributes {dimension_semantics = [#tpu.dimension_semantics<parallel>], iteration_bounds = array<i64: 2>, scalar_prefetch = 0 : i64, scratch_operands = 0 : i64, tpu.core_type = #tpu.core_type<tc>, window_params = [{transform_indices = @transform_0, window_bounds = array<i64: 1, 12, 128>}, {transform_indices = @transform_1, window_bounds = array<i64: 1, 1, 12>}, {pipeline_mode = #tpu.pipeline_mode<synchronous>, transform_indices = @transform_2, window_bounds = array<i64: 12, 128>}, {pipeline_mode = #tpu.pipeline_mode<synchronous>, transform_indices = @transform_3, window_bounds = array<i64: 128, 384>}, {pipeline_mode = #tpu.pipeline_mode<synchronous>, transform_indices = @transform_4, window_bounds = array<i64: 1, 384>}, {pipeline_mode = #tpu.pipeline_mode<synchronous>, transform_indices = @transform_5, window_bounds = array<i64: 128, 128>}, {pipeline_mode = #tpu.pipeline_mode<synchronous>, transform_indices = @transform_6, window_bounds = array<i64: 1, 128>}, {pipeline_mode = #tpu.pipeline_mode<synchronous>, transform_indices = @transform_7, window_bounds = array<i64: 1, 128>}, {pipeline_mode = #tpu.pipeline_mode<synchronous>, transform_indices = @transform_8, window_bounds = array<i64: 1, 128>}, {pipeline_mode = #tpu.pipeline_mode<synchronous>, transform_indices = @transform_9, window_bounds = array<i64: 128, 128>}, {pipeline_mode = #tpu.pipeline_mode<synchronous>, transform_indices = @transform_10, window_bounds = array<i64: 1, 128>}, {pipeline_mode = #tpu.pipeline_mode<synchronous>, transform_indices = @transform_11, window_bounds = array<i64: 128, 128>}, {pipeline_mode = #tpu.pipeline_mode<synchronous>, transform_indices = @transform_12, window_bounds = array<i64: 1, 128>}, {pipeline_mode = #tpu.pipeline_mode<synchronous>, transform_indices = @transform_13, window_bounds = array<i64: 1, 128>}, {pipeline_mode = #tpu.pipeline_mode<synchronous>, transform_indices = @transform_14, window_bounds = array<i64: 1, 128>}, {pipeline_mode = #tpu.pipeline_mode<synchronous>, transform_indices = @transform_15, window_bounds = array<i64: 1, 128>}, {pipeline_mode = #tpu.pipeline_mode<synchronous>, transform_indices = @transform_16, window_bounds = array<i64: 1, 128>}, {transform_indices = @transform_17, window_bounds = array<i64: 1, 12, 128>}]} {
    %c0 = arith.constant 0 : index
    %c0_0 = arith.constant 0 : index
    %c0_1 = arith.constant 0 : index
    %0 = vector.load %arg1[%c0, %c0_0, %c0_1] : memref<1x12x128xf32, #tpu.memory_space<vmem>>, vector<1x12x128xf32>
    %1 = vector.shape_cast %0 : vector<1x12x128xf32> to vector<12x128xf32>
    %c0_2 = arith.constant 0 : index
    %c0_3 = arith.constant 0 : index
    %2 = vector.load %arg3[%c0_2, %c0_3] : memref<12x128xf32, #tpu.memory_space<vmem>>, vector<12x128xf32>
    %3 = arith.addf %1, %2 : vector<12x128xf32>
    %c0_4 = arith.constant 0 : index
    %c0_5 = arith.constant 0 : index
    %c0_6 = arith.constant 0 : index
    %4 = vector.load %arg2[%c0_4, %c0_5, %c0_6] : memref<1x1x12xf32, #tpu.memory_space<vmem>>, vector<1x1x12xf32>
    %5 = vector.shape_cast %4 : vector<1x1x12xf32> to vector<1x12xf32>
    %c0_7 = arith.constant 0 : index
    %c0_8 = arith.constant 0 : index
    %6 = vector.load %arg4[%c0_7, %c0_8] : memref<128x384xf32, #tpu.memory_space<vmem>>, vector<128x384xf32>
    %cst = arith.constant dense<0.000000e+00> : vector<12x384xf32>
    %7 = tpu.matmul %3, %6, %cst {dimension_numbers = #tpu.dot_dimension_numbers<[1], [0], [0], [1], [0, 0, 1, 1], [], []>} : vector<12x128xf32>, vector<128x384xf32>, vector<12x384xf32> -> vector<12x384xf32>
    %c0_9 = arith.constant 0 : index
    %c0_10 = arith.constant 0 : index
    %8 = vector.load %arg5[%c0_9, %c0_10] : memref<1x384xf32, #tpu.memory_space<vmem>>, vector<1x384xf32>
    %9 = vector.broadcast %8 : vector<1x384xf32> to vector<12x384xf32>
    %10 = arith.addf %7, %9 : vector<12x384xf32>
    %11 = vector.extract_strided_slice %10 {offsets = [0, 0], sizes = [12, 128], strides = [1, 1]} : vector<12x384xf32> to vector<12x128xf32>
    %12 = vector.extract_strided_slice %10 {offsets = [0, 128], sizes = [12, 128], strides = [1, 1]} : vector<12x384xf32> to vector<12x128xf32>
    %13 = vector.extract_strided_slice %10 {offsets = [0, 256], sizes = [12, 128], strides = [1, 1]} : vector<12x384xf32> to vector<12x128xf32>
    %14 = vector.extract_strided_slice %11 {offsets = [0, 0], sizes = [12, 32], strides = [1, 1]} : vector<12x128xf32> to vector<12x32xf32>
    %15 = vector.extract_strided_slice %12 {offsets = [0, 0], sizes = [12, 32], strides = [1, 1]} : vector<12x128xf32> to vector<12x32xf32>
    %16 = vector.extract_strided_slice %13 {offsets = [0, 0], sizes = [12, 32], strides = [1, 1]} : vector<12x128xf32> to vector<12x32xf32>
    "tpu.trace_start"() <{level = 10 : i32, message = "qd,kd->qk"}> : () -> ()
    %cst_11 = arith.constant dense<0.000000e+00> : vector<12x12xf32>
    %17 = tpu.matmul %14, %15, %cst_11 {dimension_numbers = #tpu.dot_dimension_numbers<[1], [1], [0], [0], [0, 0, 1, 0], [], []>} : vector<12x32xf32>, vector<12x32xf32>, vector<12x12xf32> -> vector<12x12xf32>
    "tpu.trace_stop"() : () -> ()
    %cst_12 = arith.constant 0.176776692 : f32
    %18 = vector.broadcast %cst_12 : f32 to vector<12x12xf32>
    %19 = arith.mulf %17, %18 : vector<12x12xf32>
    %20 = vector.broadcast %5 : vector<1x12xf32> to vector<12x12xf32>
    %21 = arith.addf %19, %20 : vector<12x12xf32>
    %cst_13 = arith.constant dense<0xFF800000> : vector<12xf32>
    %22 = vector.multi_reduction <maximumf>, %21, %cst_13 [1] : vector<12x12xf32> to vector<12xf32>
    %23 = vector.shape_cast %22 : vector<12xf32> to vector<12x1xf32>
    %24 = vector.broadcast %23 : vector<12x1xf32> to vector<12x12xf32>
    %25 = arith.subf %21, %24 : vector<12x12xf32>
    %26 = math.exp %25 : vector<12x12xf32>
    %cst_14 = arith.constant dense<0.000000e+00> : vector<12xf32>
    %27 = vector.multi_reduction <add>, %26, %cst_14 [1] : vector<12x12xf32> to vector<12xf32>
    %28 = vector.shape_cast %27 : vector<12xf32> to vector<12x1xf32>
    %29 = tpu.reciprocal %28 {approx = true} : vector<12x1xf32> -> vector<12x1xf32>
    %30 = vector.broadcast %29 : vector<12x1xf32> to vector<12x12xf32>
    %31 = arith.mulf %26, %30 : vector<12x12xf32>
    %cst_15 = arith.constant dense<0.000000e+00> : vector<12x32xf32>
    %32 = tpu.matmul %31, %16, %cst_15 {dimension_numbers = #tpu.dot_dimension_numbers<[1], [0], [0], [1], [0, 0, 1, 1], [], []>} : vector<12x12xf32>, vector<12x32xf32>, vector<12x32xf32> -> vector<12x32xf32>
    %33 = vector.extract_strided_slice %11 {offsets = [0, 32], sizes = [12, 32], strides = [1, 1]} : vector<12x128xf32> to vector<12x32xf32>
    %34 = vector.extract_strided_slice %12 {offsets = [0, 32], sizes = [12, 32], strides = [1, 1]} : vector<12x128xf32> to vector<12x32xf32>
    %35 = vector.extract_strided_slice %13 {offsets = [0, 32], sizes = [12, 32], strides = [1, 1]} : vector<12x128xf32> to vector<12x32xf32>
    "tpu.trace_start"() <{level = 10 : i32, message = "qd,kd->qk"}> : () -> ()
    %cst_16 = arith.constant dense<0.000000e+00> : vector<12x12xf32>
    %36 = tpu.matmul %33, %34, %cst_16 {dimension_numbers = #tpu.dot_dimension_numbers<[1], [1], [0], [0], [0, 0, 1, 0], [], []>} : vector<12x32xf32>, vector<12x32xf32>, vector<12x12xf32> -> vector<12x12xf32>
    "tpu.trace_stop"() : () -> ()
    %cst_17 = arith.constant 0.176776692 : f32
    %37 = vector.broadcast %cst_17 : f32 to vector<12x12xf32>
    %38 = arith.mulf %36, %37 : vector<12x12xf32>
    %39 = vector.broadcast %5 : vector<1x12xf32> to vector<12x12xf32>
    %40 = arith.addf %38, %39 : vector<12x12xf32>
    %cst_18 = arith.constant dense<0xFF800000> : vector<12xf32>
    %41 = vector.multi_reduction <maximumf>, %40, %cst_18 [1] : vector<12x12xf32> to vector<12xf32>
    %42 = vector.shape_cast %41 : vector<12xf32> to vector<12x1xf32>
    %43 = vector.broadcast %42 : vector<12x1xf32> to vector<12x12xf32>
    %44 = arith.subf %40, %43 : vector<12x12xf32>
    %45 = math.exp %44 : vector<12x12xf32>
    %cst_19 = arith.constant dense<0.000000e+00> : vector<12xf32>
    %46 = vector.multi_reduction <add>, %45, %cst_19 [1] : vector<12x12xf32> to vector<12xf32>
    %47 = vector.shape_cast %46 : vector<12xf32> to vector<12x1xf32>
    %48 = tpu.reciprocal %47 {approx = true} : vector<12x1xf32> -> vector<12x1xf32>
    %49 = vector.broadcast %48 : vector<12x1xf32> to vector<12x12xf32>
    %50 = arith.mulf %45, %49 : vector<12x12xf32>
    %cst_20 = arith.constant dense<0.000000e+00> : vector<12x32xf32>
    %51 = tpu.matmul %50, %35, %cst_20 {dimension_numbers = #tpu.dot_dimension_numbers<[1], [0], [0], [1], [0, 0, 1, 1], [], []>} : vector<12x12xf32>, vector<12x32xf32>, vector<12x32xf32> -> vector<12x32xf32>
    %52 = vector.extract_strided_slice %11 {offsets = [0, 64], sizes = [12, 32], strides = [1, 1]} : vector<12x128xf32> to vector<12x32xf32>
    %53 = vector.extract_strided_slice %12 {offsets = [0, 64], sizes = [12, 32], strides = [1, 1]} : vector<12x128xf32> to vector<12x32xf32>
    %54 = vector.extract_strided_slice %13 {offsets = [0, 64], sizes = [12, 32], strides = [1, 1]} : vector<12x128xf32> to vector<12x32xf32>
    "tpu.trace_start"() <{level = 10 : i32, message = "qd,kd->qk"}> : () -> ()
    %cst_21 = arith.constant dense<0.000000e+00> : vector<12x12xf32>
    %55 = tpu.matmul %52, %53, %cst_21 {dimension_numbers = #tpu.dot_dimension_numbers<[1], [1], [0], [0], [0, 0, 1, 0], [], []>} : vector<12x32xf32>, vector<12x32xf32>, vector<12x12xf32> -> vector<12x12xf32>
    "tpu.trace_stop"() : () -> ()
    %cst_22 = arith.constant 0.176776692 : f32
    %56 = vector.broadcast %cst_22 : f32 to vector<12x12xf32>
    %57 = arith.mulf %55, %56 : vector<12x12xf32>
    %58 = vector.broadcast %5 : vector<1x12xf32> to vector<12x12xf32>
    %59 = arith.addf %57, %58 : vector<12x12xf32>
    %cst_23 = arith.constant dense<0xFF800000> : vector<12xf32>
    %60 = vector.multi_reduction <maximumf>, %59, %cst_23 [1] : vector<12x12xf32> to vector<12xf32>
    %61 = vector.shape_cast %60 : vector<12xf32> to vector<12x1xf32>
    %62 = vector.broadcast %61 : vector<12x1xf32> to vector<12x12xf32>
    %63 = arith.subf %59, %62 : vector<12x12xf32>
    %64 = math.exp %63 : vector<12x12xf32>
    %cst_24 = arith.constant dense<0.000000e+00> : vector<12xf32>
    %65 = vector.multi_reduction <add>, %64, %cst_24 [1] : vector<12x12xf32> to vector<12xf32>
    %66 = vector.shape_cast %65 : vector<12xf32> to vector<12x1xf32>
    %67 = tpu.reciprocal %66 {approx = true} : vector<12x1xf32> -> vector<12x1xf32>
    %68 = vector.broadcast %67 : vector<12x1xf32> to vector<12x12xf32>
    %69 = arith.mulf %64, %68 : vector<12x12xf32>
    %cst_25 = arith.constant dense<0.000000e+00> : vector<12x32xf32>
    %70 = tpu.matmul %69, %54, %cst_25 {dimension_numbers = #tpu.dot_dimension_numbers<[1], [0], [0], [1], [0, 0, 1, 1], [], []>} : vector<12x12xf32>, vector<12x32xf32>, vector<12x32xf32> -> vector<12x32xf32>
    %71 = vector.extract_strided_slice %11 {offsets = [0, 96], sizes = [12, 32], strides = [1, 1]} : vector<12x128xf32> to vector<12x32xf32>
    %72 = vector.extract_strided_slice %12 {offsets = [0, 96], sizes = [12, 32], strides = [1, 1]} : vector<12x128xf32> to vector<12x32xf32>
    %73 = vector.extract_strided_slice %13 {offsets = [0, 96], sizes = [12, 32], strides = [1, 1]} : vector<12x128xf32> to vector<12x32xf32>
    "tpu.trace_start"() <{level = 10 : i32, message = "qd,kd->qk"}> : () -> ()
    %cst_26 = arith.constant dense<0.000000e+00> : vector<12x12xf32>
    %74 = tpu.matmul %71, %72, %cst_26 {dimension_numbers = #tpu.dot_dimension_numbers<[1], [1], [0], [0], [0, 0, 1, 0], [], []>} : vector<12x32xf32>, vector<12x32xf32>, vector<12x12xf32> -> vector<12x12xf32>
    "tpu.trace_stop"() : () -> ()
    %cst_27 = arith.constant 0.176776692 : f32
    %75 = vector.broadcast %cst_27 : f32 to vector<12x12xf32>
    %76 = arith.mulf %74, %75 : vector<12x12xf32>
    %77 = vector.broadcast %5 : vector<1x12xf32> to vector<12x12xf32>
    %78 = arith.addf %76, %77 : vector<12x12xf32>
    %cst_28 = arith.constant dense<0xFF800000> : vector<12xf32>
    %79 = vector.multi_reduction <maximumf>, %78, %cst_28 [1] : vector<12x12xf32> to vector<12xf32>
    %80 = vector.shape_cast %79 : vector<12xf32> to vector<12x1xf32>
    %81 = vector.broadcast %80 : vector<12x1xf32> to vector<12x12xf32>
    %82 = arith.subf %78, %81 : vector<12x12xf32>
    %83 = math.exp %82 : vector<12x12xf32>
    %cst_29 = arith.constant dense<0.000000e+00> : vector<12xf32>
    %84 = vector.multi_reduction <add>, %83, %cst_29 [1] : vector<12x12xf32> to vector<12xf32>
    %85 = vector.shape_cast %84 : vector<12xf32> to vector<12x1xf32>
    %86 = tpu.reciprocal %85 {approx = true} : vector<12x1xf32> -> vector<12x1xf32>
    %87 = vector.broadcast %86 : vector<12x1xf32> to vector<12x12xf32>
    %88 = arith.mulf %83, %87 : vector<12x12xf32>
    %cst_30 = arith.constant dense<0.000000e+00> : vector<12x32xf32>
    %89 = tpu.matmul %88, %73, %cst_30 {dimension_numbers = #tpu.dot_dimension_numbers<[1], [0], [0], [1], [0, 0, 1, 1], [], []>} : vector<12x12xf32>, vector<12x32xf32>, vector<12x32xf32> -> vector<12x32xf32>
    %90 = tpu.concatenate %32, %51, %70, %89 in 1 : vector<12x32xf32>, vector<12x32xf32>, vector<12x32xf32>, vector<12x32xf32> -> vector<12x128xf32>
    %c0_31 = arith.constant 0 : index
    %c0_32 = arith.constant 0 : index
    %91 = vector.load %arg6[%c0_31, %c0_32] : memref<128x128xf32, #tpu.memory_space<vmem>>, vector<128x128xf32>
    %cst_33 = arith.constant dense<0.000000e+00> : vector<12x128xf32>
    %92 = tpu.matmul %90, %91, %cst_33 {dimension_numbers = #tpu.dot_dimension_numbers<[1], [0], [0], [1], [0, 0, 1, 1], [], []>} : vector<12x128xf32>, vector<128x128xf32>, vector<12x128xf32> -> vector<12x128xf32>
    %c0_34 = arith.constant 0 : index
    %c0_35 = arith.constant 0 : index
    %93 = vector.load %arg7[%c0_34, %c0_35] : memref<1x128xf32, #tpu.memory_space<vmem>>, vector<1x128xf32>
    %94 = vector.broadcast %93 : vector<1x128xf32> to vector<12x128xf32>
    %95 = arith.addf %92, %94 : vector<12x128xf32>
    %96 = arith.addf %3, %95 : vector<12x128xf32>
    %c0_36 = arith.constant 0 : index
    %c0_37 = arith.constant 0 : index
    %97 = vector.load %arg8[%c0_36, %c0_37] : memref<1x128xf32, #tpu.memory_space<vmem>>, vector<1x128xf32>
    %c0_38 = arith.constant 0 : index
    %c0_39 = arith.constant 0 : index
    %98 = vector.load %arg9[%c0_38, %c0_39] : memref<1x128xf32, #tpu.memory_space<vmem>>, vector<1x128xf32>
    %cst_40 = arith.constant dense<0.000000e+00> : vector<12xf32>
    %99 = vector.multi_reduction <add>, %96, %cst_40 [1] : vector<12x128xf32> to vector<12xf32>
    %100 = vector.shape_cast %99 : vector<12xf32> to vector<12x1xf32>
    %cst_41 = arith.constant 1.280000e+02 : f32
    %101 = vector.broadcast %cst_41 : f32 to vector<12x1xf32>
    %102 = arith.divf %100, %101 : vector<12x1xf32>
    %103 = vector.broadcast %102 : vector<12x1xf32> to vector<12x128xf32>
    %104 = arith.subf %96, %103 : vector<12x128xf32>
    %105 = arith.mulf %104, %104 : vector<12x128xf32>
    %cst_42 = arith.constant dense<0.000000e+00> : vector<12xf32>
    %106 = vector.multi_reduction <add>, %105, %cst_42 [1] : vector<12x128xf32> to vector<12xf32>
    %107 = vector.shape_cast %106 : vector<12xf32> to vector<12x1xf32>
    %cst_43 = arith.constant 1.280000e+02 : f32
    %108 = vector.broadcast %cst_43 : f32 to vector<12x1xf32>
    %109 = arith.divf %107, %108 : vector<12x1xf32>
    %cst_44 = arith.constant 9.99999974E-6 : f32
    %110 = vector.broadcast %cst_44 : f32 to vector<12x1xf32>
    %111 = arith.addf %109, %110 : vector<12x1xf32>
    %112 = math.rsqrt %111 : vector<12x1xf32>
    %113 = vector.broadcast %112 : vector<12x1xf32> to vector<12x128xf32>
    %114 = arith.mulf %104, %113 : vector<12x128xf32>
    %115 = vector.broadcast %97 : vector<1x128xf32> to vector<12x128xf32>
    %116 = arith.mulf %114, %115 : vector<12x128xf32>
    %117 = vector.broadcast %98 : vector<1x128xf32> to vector<12x128xf32>
    %118 = arith.addf %116, %117 : vector<12x128xf32>
    %c0_45 = arith.constant 0 : index
    %c0_46 = arith.constant 0 : index
    %119 = vector.load %arg10[%c0_45, %c0_46] : memref<128x128xf32, #tpu.memory_space<vmem>>, vector<128x128xf32>
    %cst_47 = arith.constant dense<0.000000e+00> : vector<12x128xf32>
    %120 = tpu.matmul %118, %119, %cst_47 {dimension_numbers = #tpu.dot_dimension_numbers<[1], [0], [0], [1], [0, 0, 1, 1], [], []>} : vector<12x128xf32>, vector<128x128xf32>, vector<12x128xf32> -> vector<12x128xf32>
    %c0_48 = arith.constant 0 : index
    %c0_49 = arith.constant 0 : index
    %121 = vector.load %arg11[%c0_48, %c0_49] : memref<1x128xf32, #tpu.memory_space<vmem>>, vector<1x128xf32>
    %122 = vector.broadcast %121 : vector<1x128xf32> to vector<12x128xf32>
    %123 = arith.addf %120, %122 : vector<12x128xf32>
    %cst_50 = arith.constant 0.000000e+00 : f32
    %124 = vector.broadcast %cst_50 : f32 to vector<12x128xf32>
    %125 = arith.maximumf %123, %124 : vector<12x128xf32>
    %c0_51 = arith.constant 0 : index
    %c0_52 = arith.constant 0 : index
    %126 = vector.load %arg12[%c0_51, %c0_52] : memref<128x128xf32, #tpu.memory_space<vmem>>, vector<128x128xf32>
    %cst_53 = arith.constant dense<0.000000e+00> : vector<12x128xf32>
    %127 = tpu.matmul %125, %126, %cst_53 {dimension_numbers = #tpu.dot_dimension_numbers<[1], [0], [0], [1], [0, 0, 1, 1], [], []>} : vector<12x128xf32>, vector<128x128xf32>, vector<12x128xf32> -> vector<12x128xf32>
    %c0_54 = arith.constant 0 : index
    %c0_55 = arith.constant 0 : index
    %128 = vector.load %arg13[%c0_54, %c0_55] : memref<1x128xf32, #tpu.memory_space<vmem>>, vector<1x128xf32>
    %129 = vector.broadcast %128 : vector<1x128xf32> to vector<12x128xf32>
    %130 = arith.addf %127, %129 : vector<12x128xf32>
    %131 = arith.addf %118, %130 : vector<12x128xf32>
    %c0_56 = arith.constant 0 : index
    %c0_57 = arith.constant 0 : index
    %132 = vector.load %arg14[%c0_56, %c0_57] : memref<1x128xf32, #tpu.memory_space<vmem>>, vector<1x128xf32>
    %c0_58 = arith.constant 0 : index
    %c0_59 = arith.constant 0 : index
    %133 = vector.load %arg15[%c0_58, %c0_59] : memref<1x128xf32, #tpu.memory_space<vmem>>, vector<1x128xf32>
    %cst_60 = arith.constant dense<0.000000e+00> : vector<12xf32>
    %134 = vector.multi_reduction <add>, %131, %cst_60 [1] : vector<12x128xf32> to vector<12xf32>
    %135 = vector.shape_cast %134 : vector<12xf32> to vector<12x1xf32>
    %cst_61 = arith.constant 1.280000e+02 : f32
    %136 = vector.broadcast %cst_61 : f32 to vector<12x1xf32>
    %137 = arith.divf %135, %136 : vector<12x1xf32>
    %138 = vector.broadcast %137 : vector<12x1xf32> to vector<12x128xf32>
    %139 = arith.subf %131, %138 : vector<12x128xf32>
    %140 = arith.mulf %139, %139 : vector<12x128xf32>
    %cst_62 = arith.constant dense<0.000000e+00> : vector<12xf32>
    %141 = vector.multi_reduction <add>, %140, %cst_62 [1] : vector<12x128xf32> to vector<12xf32>
    %142 = vector.shape_cast %141 : vector<12xf32> to vector<12x1xf32>
    %cst_63 = arith.constant 1.280000e+02 : f32
    %143 = vector.broadcast %cst_63 : f32 to vector<12x1xf32>
    %144 = arith.divf %142, %143 : vector<12x1xf32>
    %cst_64 = arith.constant 9.99999974E-6 : f32
    %145 = vector.broadcast %cst_64 : f32 to vector<12x1xf32>
    %146 = arith.addf %144, %145 : vector<12x1xf32>
    %147 = math.rsqrt %146 : vector<12x1xf32>
    %148 = vector.broadcast %147 : vector<12x1xf32> to vector<12x128xf32>
    %149 = arith.mulf %139, %148 : vector<12x128xf32>
    %150 = vector.broadcast %132 : vector<1x128xf32> to vector<12x128xf32>
    %151 = arith.mulf %149, %150 : vector<12x128xf32>
    %152 = vector.broadcast %133 : vector<1x128xf32> to vector<12x128xf32>
    %153 = arith.addf %151, %152 : vector<12x128xf32>
    %c0_65 = arith.constant 0 : index
    %c0_66 = arith.constant 0 : index
    %154 = vector.load %arg16[%c0_65, %c0_66] : memref<1x128xf32, #tpu.memory_space<vmem>>, vector<1x128xf32>
    %c0_67 = arith.constant 0 : index
    %c0_68 = arith.constant 0 : index
    %155 = vector.load %arg17[%c0_67, %c0_68] : memref<1x128xf32, #tpu.memory_space<vmem>>, vector<1x128xf32>
    %cst_69 = arith.constant dense<0.000000e+00> : vector<12xf32>
    %156 = vector.multi_reduction <add>, %153, %cst_69 [1] : vector<12x128xf32> to vector<12xf32>
    %157 = vector.shape_cast %156 : vector<12xf32> to vector<12x1xf32>
    %cst_70 = arith.constant 1.280000e+02 : f32
    %158 = vector.broadcast %cst_70 : f32 to vector<12x1xf32>
    %159 = arith.divf %157, %158 : vector<12x1xf32>
    %160 = vector.broadcast %159 : vector<12x1xf32> to vector<12x128xf32>
    %161 = arith.subf %153, %160 : vector<12x128xf32>
    %162 = arith.mulf %161, %161 : vector<12x128xf32>
    %cst_71 = arith.constant dense<0.000000e+00> : vector<12xf32>
    %163 = vector.multi_reduction <add>, %162, %cst_71 [1] : vector<12x128xf32> to vector<12xf32>
    %164 = vector.shape_cast %163 : vector<12xf32> to vector<12x1xf32>
    %cst_72 = arith.constant 1.280000e+02 : f32
    %165 = vector.broadcast %cst_72 : f32 to vector<12x1xf32>
    %166 = arith.divf %164, %165 : vector<12x1xf32>
    %cst_73 = arith.constant 9.99999974E-6 : f32
    %167 = vector.broadcast %cst_73 : f32 to vector<12x1xf32>
    %168 = arith.addf %166, %167 : vector<12x1xf32>
    %169 = math.rsqrt %168 : vector<12x1xf32>
    %170 = vector.broadcast %169 : vector<12x1xf32> to vector<12x128xf32>
    %171 = arith.mulf %161, %170 : vector<12x128xf32>
    %172 = vector.broadcast %154 : vector<1x128xf32> to vector<12x128xf32>
    %173 = arith.mulf %171, %172 : vector<12x128xf32>
    %174 = vector.broadcast %155 : vector<1x128xf32> to vector<12x128xf32>
    %175 = arith.addf %173, %174 : vector<12x128xf32>
    %c0_74 = arith.constant 0 : index
    %c0_75 = arith.constant 0 : index
    %c0_76 = arith.constant 0 : index
    %176 = vector.load %arg18[%c0_74, %c0_75, %c0_76] : memref<1x12x128xf32, #tpu.memory_space<vmem>>, vector<1x12x128xf32>
    %177 = vector.shape_cast %176 : vector<1x12x128xf32> to vector<12x128xf32>
    %178 = vector.shape_cast %175 : vector<12x128xf32> to vector<1x12x128xf32>
    tpu.vector_store %arg18[%c0_74, %c0_75, %c0_76], %178 {strides = array<i32>} : memref<1x12x128xf32, #tpu.memory_space<vmem>>, vector<1x12x128xf32>,
    return
  }
  func.func @transform_0(%arg0: i32) -> (i32, i32, i32) {
    %c0_i32 = arith.constant 0 : i32
    %c0_i32_0 = arith.constant 0 : i32
    %c0_i32_1 = arith.constant 0 : i32
    return %arg0, %c0_i32, %c0_i32_0 : i32, i32, i32
  }
  func.func @transform_1(%arg0: i32) -> (i32, i32, i32) {
    %c0_i32 = arith.constant 0 : i32
    %c0_i32_0 = arith.constant 0 : i32
    %c0_i32_1 = arith.constant 0 : i32
    return %arg0, %c0_i32, %c0_i32_0 : i32, i32, i32
  }
  func.func @transform_2(%arg0: i32) -> (i32, i32) {
    %c0_i32 = arith.constant 0 : i32
    %c0_i32_0 = arith.constant 0 : i32
    %c0_i32_1 = arith.constant 0 : i32
    return %c0_i32, %c0_i32_0 : i32, i32
  }
  func.func @transform_3(%arg0: i32) -> (i32, i32) {
    %c0_i32 = arith.constant 0 : i32
    %c0_i32_0 = arith.constant 0 : i32
    %c0_i32_1 = arith.constant 0 : i32
    return %c0_i32, %c0_i32_0 : i32, i32
  }
  func.func @transform_4(%arg0: i32) -> (i32, i32) {
    %c0_i32 = arith.constant 0 : i32
    %c0_i32_0 = arith.constant 0 : i32
    %c0_i32_1 = arith.constant 0 : i32
    return %c0_i32, %c0_i32_0 : i32, i32
  }
  func.func @transform_5(%arg0: i32) -> (i32, i32) {
    %c0_i32 = arith.constant 0 : i32
    %c0_i32_0 = arith.constant 0 : i32
    %c0_i32_1 = arith.constant 0 : i32
    return %c0_i32, %c0_i32_0 : i32, i32
  }
  func.func @transform_6(%arg0: i32) -> (i32, i32) {
    %c0_i32 = arith.constant 0 : i32
    %c0_i32_0 = arith.constant 0 : i32
    %c0_i32_1 = arith.constant 0 : i32
    return %c0_i32, %c0_i32_0 : i32, i32
  }
  func.func @transform_7(%arg0: i32) -> (i32, i32) {
    %c0_i32 = arith.constant 0 : i32
    %c0_i32_0 = arith.constant 0 : i32
    %c0_i32_1 = arith.constant 0 : i32
    return %c0_i32, %c0_i32_0 : i32, i32
  }
  func.func @transform_8(%arg0: i32) -> (i32, i32) {
    %c0_i32 = arith.constant 0 : i32
    %c0_i32_0 = arith.constant 0 : i32
    %c0_i32_1 = arith.constant 0 : i32
    return %c0_i32, %c0_i32_0 : i32, i32
  }
  func.func @transform_9(%arg0: i32) -> (i32, i32) {
    %c0_i32 = arith.constant 0 : i32
    %c0_i32_0 = arith.constant 0 : i32
    %c0_i32_1 = arith.constant 0 : i32
    return %c0_i32, %c0_i32_0 : i32, i32
  }
  func.func @transform_10(%arg0: i32) -> (i32, i32) {
    %c0_i32 = arith.constant 0 : i32
    %c0_i32_0 = arith.constant 0 : i32
    %c0_i32_1 = arith.constant 0 : i32
    return %c0_i32, %c0_i32_0 : i32, i32
  }
  func.func @transform_11(%arg0: i32) -> (i32, i32) {
    %c0_i32 = arith.constant 0 : i32
    %c0_i32_0 = arith.constant 0 : i32
    %c0_i32_1 = arith.constant 0 : i32
    return %c0_i32, %c0_i32_0 : i32, i32
  }
  func.func @transform_12(%arg0: i32) -> (i32, i32) {
    %c0_i32 = arith.constant 0 : i32
    %c0_i32_0 = arith.constant 0 : i32
    %c0_i32_1 = arith.constant 0 : i32
    return %c0_i32, %c0_i32_0 : i32, i32
  }
  func.func @transform_13(%arg0: i32) -> (i32, i32) {
    %c0_i32 = arith.constant 0 : i32
    %c0_i32_0 = arith.constant 0 : i32
    %c0_i32_1 = arith.constant 0 : i32
    return %c0_i32, %c0_i32_0 : i32, i32
  }
  func.func @transform_14(%arg0: i32) -> (i32, i32) {
    %c0_i32 = arith.constant 0 : i32
    %c0_i32_0 = arith.constant 0 : i32
    %c0_i32_1 = arith.constant 0 : i32
    return %c0_i32, %c0_i32_0 : i32, i32
  }
  func.func @transform_15(%arg0: i32) -> (i32, i32) {
    %c0_i32 = arith.constant 0 : i32
    %c0_i32_0 = arith.constant 0 : i32
    %c0_i32_1 = arith.constant 0 : i32
    return %c0_i32, %c0_i32_0 : i32, i32
  }
  func.func @transform_16(%arg0: i32) -> (i32, i32) {
    %c0_i32 = arith.constant 0 : i32
    %c0_i32_0 = arith.constant 0 : i32
    %c0_i32_1 = arith.constant 0 : i32
    return %c0_i32, %c0_i32_0 : i32, i32
  }
  func.func @transform_17(%arg0: i32) -> (i32, i32, i32) {
    %c0_i32 = arith.constant 0 : i32
    %c0_i32_0 = arith.constant 0 : i32
    %c0_i32_1 = arith.constant 0 : i32
    return %arg0, %c0_i32, %c0_i32_0 : i32, i32, i32
  }
}

module attributes {stable_mosaic.version = 11 : i64} {
  func.func @_spot_head_kernel(%arg0: memref<2x12x128xf32, #tpu.memory_space<vmem>>, %arg1: memref<2x12x128xf32, #tpu.memory_space<vmem>>, %arg2: memref<128x128xf32, #tpu.memory_space<vmem>>, %arg3: memref<1x128xf32, #tpu.memory_space<vmem>>, %arg4: memref<2x3x128xf32, #tpu.memory_space<vmem>>) attributes {dimension_semantics = [], scalar_prefetch = 0 : i64, scratch_operands = 0 : i64, tpu.core_type = #tpu.core_type<tc>} {
    %c0 = arith.constant 0 : index
    %c0_0 = arith.constant 0 : index
    %c0_1 = arith.constant 0 : index
    %0 = vector.load %arg0[%c0, %c0_0, %c0_1] : memref<2x12x128xf32, #tpu.memory_space<vmem>>, vector<2x12x128xf32>
    %c0_2 = arith.constant 0 : index
    %c0_3 = arith.constant 0 : index
    %c0_4 = arith.constant 0 : index
    %1 = vector.load %arg1[%c0_2, %c0_3, %c0_4] : memref<2x12x128xf32, #tpu.memory_space<vmem>>, vector<2x12x128xf32>
    %2 = arith.addf %0, %1 : vector<2x12x128xf32>
    %c0_5 = arith.constant 0 : index
    %c0_6 = arith.constant 0 : index
    %3 = vector.load %arg2[%c0_5, %c0_6] : memref<128x128xf32, #tpu.memory_space<vmem>>, vector<128x128xf32>
    %c0_7 = arith.constant 0 : index
    %c0_8 = arith.constant 0 : index
    %4 = vector.load %arg3[%c0_7, %c0_8] : memref<1x128xf32, #tpu.memory_space<vmem>>, vector<1x128xf32>
    %5 = vector.extract_strided_slice %2 {offsets = [0, 0, 0], sizes = [2, 4, 128], strides = [1, 1, 1]} : vector<2x12x128xf32> to vector<2x4x128xf32>
    %cst = arith.constant dense<0.000000e+00> : vector<2x128xf32>
    %6 = vector.multi_reduction <add>, %5, %cst [1] : vector<2x4x128xf32> to vector<2x128xf32>
    %cst_9 = arith.constant 4.000000e+00 : f32
    %7 = vector.broadcast %cst_9 : f32 to vector<2x128xf32>
    %8 = arith.divf %6, %7 : vector<2x128xf32>
    %cst_10 = arith.constant dense<0.000000e+00> : vector<2x128xf32>
    %9 = tpu.matmul %8, %3, %cst_10 {dimension_numbers = #tpu.dot_dimension_numbers<[1], [0], [0], [1], [0, 0, 1, 1], [], []>} : vector<2x128xf32>, vector<128x128xf32>, vector<2x128xf32> -> vector<2x128xf32>
    %10 = vector.broadcast %4 : vector<1x128xf32> to vector<2x128xf32>
    %11 = arith.addf %9, %10 : vector<2x128xf32>
    %c0_11 = arith.constant 0 : index
    %c0_12 = arith.constant 0 : index
    %c0_13 = arith.constant 0 : index
    %12 = vector.load %arg4[%c0_11, %c0_12, %c0_13] : memref<2x3x128xf32, #tpu.memory_space<vmem>>, vector<2x1x128xf32>
    %13 = vector.shape_cast %12 : vector<2x1x128xf32> to vector<2x128xf32>
    %14 = vector.shape_cast %11 : vector<2x128xf32> to vector<2x1x128xf32>
    tpu.vector_store %arg4[%c0_11, %c0_12, %c0_13], %14 {strides = array<i32>} : memref<2x3x128xf32, #tpu.memory_space<vmem>>, vector<2x1x128xf32>,
    %15 = vector.extract_strided_slice %2 {offsets = [0, 4, 0], sizes = [2, 4, 128], strides = [1, 1, 1]} : vector<2x12x128xf32> to vector<2x4x128xf32>
    %cst_14 = arith.constant dense<0.000000e+00> : vector<2x128xf32>
    %16 = vector.multi_reduction <add>, %15, %cst_14 [1] : vector<2x4x128xf32> to vector<2x128xf32>
    %cst_15 = arith.constant 4.000000e+00 : f32
    %17 = vector.broadcast %cst_15 : f32 to vector<2x128xf32>
    %18 = arith.divf %16, %17 : vector<2x128xf32>
    %cst_16 = arith.constant dense<0.000000e+00> : vector<2x128xf32>
    %19 = tpu.matmul %18, %3, %cst_16 {dimension_numbers = #tpu.dot_dimension_numbers<[1], [0], [0], [1], [0, 0, 1, 1], [], []>} : vector<2x128xf32>, vector<128x128xf32>, vector<2x128xf32> -> vector<2x128xf32>
    %20 = vector.broadcast %4 : vector<1x128xf32> to vector<2x128xf32>
    %21 = arith.addf %19, %20 : vector<2x128xf32>
    %c0_17 = arith.constant 0 : index
    %c1 = arith.constant 1 : index
    %c0_18 = arith.constant 0 : index
    %22 = vector.load %arg4[%c0_17, %c1, %c0_18] : memref<2x3x128xf32, #tpu.memory_space<vmem>>, vector<2x1x128xf32>
    %23 = vector.shape_cast %22 : vector<2x1x128xf32> to vector<2x128xf32>
    %24 = vector.shape_cast %21 : vector<2x128xf32> to vector<2x1x128xf32>
    tpu.vector_store %arg4[%c0_17, %c1, %c0_18], %24 {strides = array<i32>} : memref<2x3x128xf32, #tpu.memory_space<vmem>>, vector<2x1x128xf32>,
    %25 = vector.extract_strided_slice %2 {offsets = [0, 8, 0], sizes = [2, 4, 128], strides = [1, 1, 1]} : vector<2x12x128xf32> to vector<2x4x128xf32>
    %cst_19 = arith.constant dense<0.000000e+00> : vector<2x128xf32>
    %26 = vector.multi_reduction <add>, %25, %cst_19 [1] : vector<2x4x128xf32> to vector<2x128xf32>
    %cst_20 = arith.constant 4.000000e+00 : f32
    %27 = vector.broadcast %cst_20 : f32 to vector<2x128xf32>
    %28 = arith.divf %26, %27 : vector<2x128xf32>
    %cst_21 = arith.constant dense<0.000000e+00> : vector<2x128xf32>
    %29 = tpu.matmul %28, %3, %cst_21 {dimension_numbers = #tpu.dot_dimension_numbers<[1], [0], [0], [1], [0, 0, 1, 1], [], []>} : vector<2x128xf32>, vector<128x128xf32>, vector<2x128xf32> -> vector<2x128xf32>
    %30 = vector.broadcast %4 : vector<1x128xf32> to vector<2x128xf32>
    %31 = arith.addf %29, %30 : vector<2x128xf32>
    %c0_22 = arith.constant 0 : index
    %c2 = arith.constant 2 : index
    %c0_23 = arith.constant 0 : index
    %32 = vector.load %arg4[%c0_22, %c2, %c0_23] : memref<2x3x128xf32, #tpu.memory_space<vmem>>, vector<2x1x128xf32>
    %33 = vector.shape_cast %32 : vector<2x1x128xf32> to vector<2x128xf32>
    %34 = vector.shape_cast %31 : vector<2x128xf32> to vector<2x1x128xf32>
    tpu.vector_store %arg4[%c0_22, %c2, %c0_23], %34 {strides = array<i32>} : memref<2x3x128xf32, #tpu.memory_space<vmem>>, vector<2x1x128xf32>,
    return
  }
}

</mosaic_0001>

<llo_original>
// kernel: cvt5_forward.5
$region0: #{cvt5_forward.5}
  #allocation0 [shape = 'u32[]', space=smem, size = 0x4, offset = 0x4, fixed_abs, tag = 'smem constant byte address 0x4 - core index']
  #allocation1 [shape = 'u32[72,128]{1,0:T(1,128)}', space=vmem, size = 0x9000, scoped, tag = 'internal scratch']
  %s0 = inlined_call_operand.vmem [shape: f32[6,192], index: 0, kind: input, shape index: {}]
  %s1 = inlined_call_operand.vmem [shape: f32[192,128], index: 1, kind: input, shape index: {}]
  %s2 = inlined_call_operand.vmem [shape: f32[1,128], index: 2, kind: input, shape index: {}]
  %s3 = inlined_call_operand.vmem [shape: f32[6,128], index: 3, kind: output, shape index: {}]
  %s4 = sld [smem:[#allocation0]]
  $region22: #{cvt5_forward.5} parent=0
    _
  %s6 = ssub.s32 1, %s4
  %s7 = scalar_select 0, %s6, %s4
  // Predicated region
  $region2: #{cvt5_forward.5} parent=0 // pred_check
    _
  $region3: #{cvt5_forward.5} parent=0 // pred_check_branch
    %9 = sbr.rel (0) target = $region5
  $region4: #{cvt5_forward.5} parent=0 // pred_region
    _
  $region5: #{cvt5_forward.5} parent=0 // pred_fallthru
    _
  // Predicated region
  $region6: #{cvt5_forward.5} parent=0 // pred_check
    _
  $region7: #{cvt5_forward.5} parent=0 // pred_check_branch
    %11 = sbr.rel (0) target = $region9
  $region8: #{cvt5_forward.5} parent=0 // pred_region
    _
  $region9: #{cvt5_forward.5} parent=0 // pred_fallthru
    _
  // Predicated region
  $region10: #{cvt5_forward.5} parent=0 // pred_check
    _
  $region11: #{cvt5_forward.5} parent=0 // pred_check_branch
    %13 = sbr.rel (0) target = $region13
  $region12: #{cvt5_forward.5} parent=0 // pred_region
    _
  $region13: #{cvt5_forward.5} parent=0 // pred_fallthru
    _
  %v14 = vld [vmem:[%s0] sm:$0x3f]
  %v15 = vld [vmem:[%s0 + $0x8] sm:$0x3f]
  %v16 = vld [vmem:[%s1] sm:$0xff]
  %v17 = vld [vmem:[%s1 + $0x8] sm:$0xff]
  %v18 = vld [vmem:[%s1 + $0x10] sm:$0xff]
  %v19 = vld [vmem:[%s1 + $0x18] sm:$0xff]
  %v20 = vld [vmem:[%s1 + $0x20] sm:$0xff]
  %v21 = vld [vmem:[%s1 + $0x28] sm:$0xff]
  %v22 = vld [vmem:[%s1 + $0x30] sm:$0xff]
  %v23 = vld [vmem:[%s1 + $0x38] sm:$0xff]
  %v24 = vld [vmem:[%s1 + $0x40] sm:$0xff]
  %v25 = vld [vmem:[%s1 + $0x48] sm:$0xff]
  %v26 = vld [vmem:[%s1 + $0x50] sm:$0xff]
  %v27 = vld [vmem:[%s1 + $0x58] sm:$0xff]
  %v28 = vld [vmem:[%s1 + $0x60] sm:$0xff]
  %v29 = vld [vmem:[%s1 + $0x68] sm:$0xff]
  %v30 = vld [vmem:[%s1 + $0x70] sm:$0xff]
  %v31 = vld [vmem:[%s1 + $0x78] sm:$0xff]
  %v32 = vld [vmem:[%s1 + $0x80] sm:$0xff]
  %v33 = vld [vmem:[%s1 + $0x88] sm:$0xff]
  %v34 = vld [vmem:[%s1 + $0x90] sm:$0xff]
  %v35 = vld [vmem:[%s1 + $0x98] sm:$0xff]
  %v36 = vld [vmem:[%s1 + $0xa0] sm:$0xff]
  %v37 = vld [vmem:[%s1 + $0xa8] sm:$0xff]
  %v38 = vld [vmem:[%s1 + $0xb0] sm:$0xff]
  %v39 = vld [vmem:[%s1 + $0xb8] sm:$0xff]
  %v40 = vld [vmem:[%s2] sm:$0x1]
  %v42 = vperm.slane %v40, 0
  %vm44 = vcmask 523264
  %v46 = vsel %vm44, %v15, 0
  %48 = vmatpush.msra.mxu0 %v31
  %49 = vmatpush.msra.mxu0 %v30
  %50 = vmatpush.msra.mxu0 %v29
  %51 = vmatpush.msra.mxu0 %v28
  %52 = vmatpush.msra.mxu0 %v27
  %53 = vmatpush.msra.mxu0 %v26
  %54 = vmatpush.msra.mxu0 %v25
  %55 = vmatpush.msra.mxu0 %v24
  %56 = vmatpush.msra.mxu0 %v23
  %57 = vmatpush.msra.mxu0 %v22
  %58 = vmatpush.msra.mxu0 %v21
  %59 = vmatpush.msra.mxu0 %v20
  %60 = vmatpush.msra.mxu0 %v19
  %61 = vmatpush.msra.mxu0 %v18
  %62 = vmatpush.msra.mxu0 %v17
  %63 = vmatpush.msra.mxu0 %v16
  %64 = vmatmul.f32.gmra.mxu0 %v14
  %v65 = vpop.f32.mrf.mxu0
  %v66 = vadd.f32 %v42, %v65
  %67 = vdwg.mxu0
  %68 = vmatpush.msra.mxu0 0.0
  %69 = vmatpush.msra.mxu0 0.0
  %70 = vmatpush.msra.mxu0 0.0
  %71 = vmatpush.msra.mxu0 0.0
  %72 = vmatpush.msra.mxu0 0.0
  %73 = vmatpush.msra.mxu0 0.0
  %74 = vmatpush.msra.mxu0 0.0
  %75 = vmatpush.msra.mxu0 0.0
  %76 = vmatpush.msra.mxu0 %v39
  %77 = vmatpush.msra.mxu0 %v38
  %78 = vmatpush.msra.mxu0 %v37
  %79 = vmatpush.msra.mxu0 %v36
  %80 = vmatpush.msra.mxu0 %v35
  %81 = vmatpush.msra.mxu0 %v34
  %82 = vmatpush.msra.mxu0 %v33
  %83 = vmatpush.msra.mxu0 %v32
  %84 = vmatmul.f32.gmra.mxu0 %v46
  %v85 = vpop.f32.mrf.mxu0
  %v86 = vadd.f32 %v66, %v85
  %87 = vdwg.mxu0
  %88 = vst [vmem:[%s3] sm:$0x3f] %v86
  // Predicated region
  $region14: #{cvt5_forward.5} parent=0 // pred_check
    _
  $region15: #{cvt5_forward.5} parent=0 // pred_check_branch
    %90 = sbr.rel (0) target = $region17
  $region16: #{cvt5_forward.5} parent=0 // pred_region
    _
  $region17: #{cvt5_forward.5} parent=0 // pred_fallthru
    _
  // Predicated region
  $region18: #{cvt5_forward.5} parent=0 // pred_check
    _
  $region19: #{cvt5_forward.5} parent=0 // pred_check_branch
    %92 = sbr.rel (0) target = $region21
  $region20: #{cvt5_forward.5} parent=0 // pred_region
    _
  $region21: #{cvt5_forward.5} parent=0 // pred_fallthru
    _

// kernel: cvt5_forward.6
$region0: #{cvt5_forward.6}
  #allocation0 [shape = 'u32[]', space=smem, size = 0x4, offset = 0x4, fixed_abs, tag = 'smem constant byte address 0x4 - core index']
  #allocation1 [shape = 'u32[72,128]{1,0:T(1,128)}', space=vmem, size = 0x9000, scoped, tag = 'internal scratch']
  %s0 = inlined_call_operand.vmem [shape: f32[17,128], index: 0, kind: input, shape index: {}]
  %s1 = inlined_call_operand.vmem [shape: f32[17,192], index: 1, kind: input, shape index: {}]
  %s2 = inlined_call_operand.vmem [shape: f32[128,64], index: 2, kind: input, shape index: {}]
  %s3 = inlined_call_operand.vmem [shape: f32[1,64], index: 3, kind: input, shape index: {}]
  %s4 = inlined_call_operand.vmem [shape: f32[192,64], index: 4, kind: input, shape index: {}]
  %s5 = inlined_call_operand.vmem [shape: f32[1,64], index: 5, kind: input, shape index: {}]
  %s6 = inlined_call_operand.vmem [shape: f32[128,128], index: 6, kind: input, shape index: {}]
  %s7 = inlined_call_operand.vmem [shape: f32[1,128], index: 7, kind: input, shape index: {}]
  %s8 = inlined_call_operand.vmem [shape: f32[17,128], index: 8, kind: output, shape index: {}]
  %s9 = sld [smem:[#allocation0]]
  $region42: #{cvt5_forward.6} parent=0
    _
  %s11 = ssub.s32 1, %s9
  %s12 = scalar_select 0, %s11, %s9
  // Predicated region
  $region2: #{cvt5_forward.6} parent=0 // pred_check
    _
  $region3: #{cvt5_forward.6} parent=0 // pred_check_branch
    %14 = sbr.rel (0) target = $region5
  $region4: #{cvt5_forward.6} parent=0 // pred_region
    _
  $region5: #{cvt5_forward.6} parent=0 // pred_fallthru
    _
  // Predicated region
  $region6: #{cvt5_forward.6} parent=0 // pred_check
    _
  $region7: #{cvt5_forward.6} parent=0 // pred_check_branch
    %16 = sbr.rel (0) target = $region9
  $region8: #{cvt5_forward.6} parent=0 // pred_region
    _
  $region9: #{cvt5_forward.6} parent=0 // pred_fallthru
    _
  // Predicated region
  $region10: #{cvt5_forward.6} parent=0 // pred_check
    _
  $region11: #{cvt5_forward.6} parent=0 // pred_check_branch
    %18 = sbr.rel (0) target = $region13
  $region12: #{cvt5_forward.6} parent=0 // pred_region
    _
  $region13: #{cvt5_forward.6} parent=0 // pred_fallthru
    _
  // Predicated region
  $region14: #{cvt5_forward.6} parent=0 // pred_check
    _
  $region15: #{cvt5_forward.6} parent=0 // pred_check_branch
    %20 = sbr.rel (0) target = $region17
  $region16: #{cvt5_forward.6} parent=0 // pred_region
    _
  $region17: #{cvt5_forward.6} parent=0 // pred_fallthru
    _
  // Predicated region
  $region18: #{cvt5_forward.6} parent=0 // pred_check
    _
  $region19: #{cvt5_forward.6} parent=0 // pred_check_branch
    %22 = sbr.rel (0) target = $region21
  $region20: #{cvt5_forward.6} parent=0 // pred_region
    _
  $region21: #{cvt5_forward.6} parent=0 // pred_fallthru
    _
  // Predicated region
  $region22: #{cvt5_forward.6} parent=0 // pred_check
    _
  $region23: #{cvt5_forward.6} parent=0 // pred_check_branch
    %24 = sbr.rel (0) target = $region25
  $region24: #{cvt5_forward.6} parent=0 // pred_region
    _
  $region25: #{cvt5_forward.6} parent=0 // pred_fallthru
    _
  // Predicated region
  $region26: #{cvt5_forward.6} parent=0 // pred_check
    _
  $region27: #{cvt5_forward.6} parent=0 // pred_check_branch
    %26 = sbr.rel (0) target = $region29
  $region28: #{cvt5_forward.6} parent=0 // pred_region
    _
  $region29: #{cvt5_forward.6} parent=0 // pred_fallthru
    _
  // Predicated region
  $region30: #{cvt5_forward.6} parent=0 // pred_check
    _
  $region31: #{cvt5_forward.6} parent=0 // pred_check_branch
    %28 = sbr.rel (0) target = $region33
  $region32: #{cvt5_forward.6} parent=0 // pred_region
    _
  $region33: #{cvt5_forward.6} parent=0 // pred_fallthru
    _
  %v29 = vld [vmem:[%s0] sm:$0xff]
  %v30 = vld [vmem:[%s0 + $0x8] sm:$0xff]
  %v31 = vld [vmem:[%s0 + $0x10] sm:$0x1]
  %v32 = vld [vmem:[%s2] sm:$0xff]
  %v33 = vld [vmem:[%s2 + $0x8] sm:$0xff]
  %v34 = vld [vmem:[%s2 + $0x10] sm:$0xff]
  %v35 = vld [vmem:[%s2 + $0x18] sm:$0xff]
  %v36 = vld [vmem:[%s2 + $0x20] sm:$0xff]
  %v37 = vld [vmem:[%s2 + $0x28] sm:$0xff]
  %v38 = vld [vmem:[%s2 + $0x30] sm:$0xff]
  %v39 = vld [vmem:[%s2 + $0x38] sm:$0xff]
  %v40 = vld [vmem:[%s2 + $0x40] sm:$0xff]
  %v41 = vld [vmem:[%s2 + $0x48] sm:$0xff]
  %v42 = vld [vmem:[%s2 + $0x50] sm:$0xff]
  %v43 = vld [vmem:[%s2 + $0x58] sm:$0xff]
  %v44 = vld [vmem:[%s2 + $0x60] sm:$0xff]
  %v45 = vld [vmem:[%s2 + $0x68] sm:$0xff]
  %v46 = vld [vmem:[%s2 + $0x70] sm:$0xff]
  %v47 = vld [vmem:[%s2 + $0x78] sm:$0xff]
  %v48 = vld [vmem:[%s3] sm:$0x1]
  %v50 = vperm.slane %v48, 0
  %52 = vmatpush.msra.mxu0 %v47
  %53 = vmatpush.msra.mxu0 %v46
  %54 = vmatpush.msra.mxu0 %v45
  %55 = vmatpush.msra.mxu0 %v44
  %56 = vmatpush.msra.mxu0 %v43
  %57 = vmatpush.msra.mxu0 %v42
  %58 = vmatpush.msra.mxu0 %v41
  %59 = vmatpush.msra.mxu0 %v40
  %60 = vmatpush.msra.mxu0 %v39
  %61 = vmatpush.msra.mxu0 %v38
  %62 = vmatpush.msra.mxu0 %v37
  %63 = vmatpush.msra.mxu0 %v36
  %64 = vmatpush.msra.mxu0 %v35
  %65 = vmatpush.msra.mxu0 %v34
  %66 = vmatpush.msra.mxu0 %v33
  %67 = vmatpush.msra.mxu0 %v32
  %68 = vmatmul.f32.gmra.mxu0 %v29
  %v69 = vpop.f32.mrf.mxu0
  %v70 = vadd.f32 %v50, %v69
  %71 = vmatmul.f32.gmra.mxu0 %v30
  %v72 = vpop.f32.mrf.mxu0
  %v73 = vadd.f32 %v50, %v72
  %74 = vmatmul.f32.gmra.mxu0 %v31
  %v75 = vpop.f32.mrf.mxu0
  %v76 = vadd.f32 %v50, %v75
  %77 = vdwg.mxu0
  %v78 = vld [vmem:[%s1] sm:$0xff]
  %v79 = vld [vmem:[%s1 + $0x8] sm:$0xff]
  %v80 = vld [vmem:[%s1 + $0x10] sm:$0xff]
  %v81 = vld [vmem:[%s1 + $0x18] sm:$0xff]
  %v82 = vld [vmem:[%s1 + $0x20] sm:$0x1]
  %v83 = vld [vmem:[%s1 + $0x28] sm:$0x1]
  %v84 = vld [vmem:[%s4] sm:$0xff]
  %v85 = vld [vmem:[%s4 + $0x8] sm:$0xff]
  %v86 = vld [vmem:[%s4 + $0x10] sm:$0xff]
  %v87 = vld [vmem:[%s4 + $0x18] sm:$0xff]
  %v88 = vld [vmem:[%s4 + $0x20] sm:$0xff]
  %v89 = vld [vmem:[%s4 + $0x28] sm:$0xff]
  %v90 = vld [vmem:[%s4 + $0x30] sm:$0xff]
  %v91 = vld [vmem:[%s4 + $0x38] sm:$0xff]
  %v92 = vld [vmem:[%s4 + $0x40] sm:$0xff]
  %v93 = vld [vmem:[%s4 + $0x48] sm:$0xff]
  %v94 = vld [vmem:[%s4 + $0x50] sm:$0xff]
  %v95 = vld [vmem:[%s4 + $0x58] sm:$0xff]
  %v96 = vld [vmem:[%s4 + $0x60] sm:$0xff]
  %v97 = vld [vmem:[%s4 + $0x68] sm:$0xff]
  %v98 = vld [vmem:[%s4 + $0x70] sm:$0xff]
  %v99 = vld [vmem:[%s4 + $0x78] sm:$0xff]
  %v100 = vld [vmem:[%s4 + $0x80] sm:$0xff]
  %v101 = vld [vmem:[%s4 + $0x88] sm:$0xff]
  %v102 = vld [vmem:[%s4 + $0x90] sm:$0xff]
  %v103 = vld [vmem:[%s4 + $0x98] sm:$0xff]
  %v104 = vld [vmem:[%s4 + $0xa0] sm:$0xff]
  %v105 = vld [vmem:[%s4 + $0xa8] sm:$0xff]
  %v106 = vld [vmem:[%s4 + $0xb0] sm:$0xff]
  %v107 = vld [vmem:[%s4 + $0xb8] sm:$0xff]
  %v108 = vld [vmem:[%s5] sm:$0x1]
  %v110 = vperm.slane %v108, 0
  %vm112 = vcmask 523264
  %v114 = vsel %vm112, %v79, 0
  %v117 = vsel %vm112, %v81, 0
  %v120 = vsel %vm112, %v83, 0
  %122 = vmatpush.msra.mxu0 %v99
  %123 = vmatpush.msra.mxu0 %v98
  %124 = vmatpush.msra.mxu0 %v97
  %125 = vmatpush.msra.mxu0 %v96
  %126 = vmatpush.msra.mxu0 %v95
  %127 = vmatpush.msra.mxu0 %v94
  %128 = vmatpush.msra.mxu0 %v93
  %129 = vmatpush.msra.mxu0 %v92
  %130 = vmatpush.msra.mxu0 %v91
  %131 = vmatpush.msra.mxu0 %v90
  %132 = vmatpush.msra.mxu0 %v89
  %133 = vmatpush.msra.mxu0 %v88
  %134 = vmatpush.msra.mxu0 %v87
  %135 = vmatpush.msra.mxu0 %v86
  %136 = vmatpush.msra.mxu0 %v85
  %137 = vmatpush.msra.mxu0 %v84
  %138 = vmatmul.f32.gmra.mxu0 %v78
  %v139 = vpop.f32.mrf.mxu0
  %v140 = vadd.f32 %v110, %v139
  %141 = vmatmul.f32.gmra.mxu0 %v80
  %v142 = vpop.f32.mrf.mxu0
  %v143 = vadd.f32 %v110, %v142
  %144 = vmatmul.f32.gmra.mxu0 %v82
  %v145 = vpop.f32.mrf.mxu0
  %v146 = vadd.f32 %v110, %v145
  %147 = vdwg.mxu0
  %148 = vmatpush.msra.mxu0 0.0
  %149 = vmatpush.msra.mxu0 0.0
  %150 = vmatpush.msra.mxu0 0.0
  %151 = vmatpush.msra.mxu0 0.0
  %152 = vmatpush.msra.mxu0 0.0
  %153 = vmatpush.msra.mxu0 0.0
  %154 = vmatpush.msra.mxu0 0.0
  %155 = vmatpush.msra.mxu0 0.0
  %156 = vmatpush.msra.mxu0 %v107
  %157 = vmatpush.msra.mxu0 %v106
  %158 = vmatpush.msra.mxu0 %v105
  %159 = vmatpush.msra.mxu0 %v104
  %160 = vmatpush.msra.mxu0 %v103
  %161 = vmatpush.msra.mxu0 %v102
  %162 = vmatpush.msra.mxu0 %v101
  %163 = vmatpush.msra.mxu0 %v100
  %164 = vmatmul.f32.gmra.mxu0 %v114
  %v165 = vpop.f32.mrf.mxu0
  %v166 = vadd.f32 %v140, %v165
  %167 = vmatmul.f32.gmra.mxu0 %v117
  %v168 = vpop.f32.mrf.mxu0
  %v169 = vadd.f32 %v143, %v168
  %170 = vmatmul.f32.gmra.mxu0 %v120
  %v171 = vpop.f32.mrf.mxu0
  %v172 = vadd.f32 %v146, %v171
  %173 = vdwg.mxu0
  %177 = vrot.lane.b32.xlu0 %v166, 64
  %v178 = vpop.permute.xlu0 %177
  %179 = vrot.lane.b32.xlu0 %v169, 64
  %v180 = vpop.permute.xlu0 %179
  %181 = vrot.lane.b32.xlu0 %v172, 64
  %v182 = vpop.permute.xlu0 %181
  %v186 = vsel %vm112, %v70, %v178
  %v187 = vsel %vm112, %v73, %v180
  %v188 = vsel %vm112, %v76, %v182
  %v189 = vld [vmem:[%s6] sm:$0xff]
  %v190 = vld [vmem:[%s6 + $0x8] sm:$0xff]
  %v191 = vld [vmem:[%s6 + $0x10] sm:$0xff]
  %v192 = vld [vmem:[%s6 + $0x18] sm:$0xff]
  %v193 = vld [vmem:[%s6 + $0x20] sm:$0xff]
  %v194 = vld [vmem:[%s6 + $0x28] sm:$0xff]
  %v195 = vld [vmem:[%s6 + $0x30] sm:$0xff]
  %v196 = vld [vmem:[%s6 + $0x38] sm:$0xff]
  %v197 = vld [vmem:[%s6 + $0x40] sm:$0xff]
  %v198 = vld [vmem:[%s6 + $0x48] sm:$0xff]
  %v199 = vld [vmem:[%s6 + $0x50] sm:$0xff]
  %v200 = vld [vmem:[%s6 + $0x58] sm:$0xff]
  %v201 = vld [vmem:[%s6 + $0x60] sm:$0xff]
  %v202 = vld [vmem:[%s6 + $0x68] sm:$0xff]
  %v203 = vld [vmem:[%s6 + $0x70] sm:$0xff]
  %v204 = vld [vmem:[%s6 + $0x78] sm:$0xff]
  %v205 = vld [vmem:[%s7] sm:$0x1]
  %v207 = vperm.slane %v205, 0
  %209 = vmatpush.msra.mxu0 %v204
  %210 = vmatpush.msra.mxu0 %v203
  %211 = vmatpush.msra.mxu0 %v202
  %212 = vmatpush.msra.mxu0 %v201
  %213 = vmatpush.msra.mxu0 %v200
  %214 = vmatpush.msra.mxu0 %v199
  %215 = vmatpush.msra.mxu0 %v198
  %216 = vmatpush.msra.mxu0 %v197
  %217 = vmatpush.msra.mxu0 %v196
  %218 = vmatpush.msra.mxu0 %v195
  %219 = vmatpush.msra.mxu0 %v194
  %220 = vmatpush.msra.mxu0 %v193
  %221 = vmatpush.msra.mxu0 %v192
  %222 = vmatpush.msra.mxu0 %v191
  %223 = vmatpush.msra.mxu0 %v190
  %224 = vmatpush.msra.mxu0 %v189
  %225 = vmatmul.f32.gmra.mxu0 %v186
  %v226 = vpop.f32.mrf.mxu0
  %v227 = vadd.f32 %v207, %v226
  %228 = vmatmul.f32.gmra.mxu0 %v187
  %v229 = vpop.f32.mrf.mxu0
  %v230 = vadd.f32 %v207, %v229
  %231 = vmatmul.f32.gmra.mxu0 %v188
  %v232 = vpop.f32.mrf.mxu0
  %v233 = vadd.f32 %v207, %v232
  %234 = vdwg.mxu0
  %235 = vst [vmem:[%s8] sm:$0xff] %v227
  %236 = vst [vmem:[%s8 + $0x8] sm:$0xff] %v230
  %237 = vst [vmem:[%s8 + $0x10] sm:$0x1] %v233
  // Predicated region
  $region34: #{cvt5_forward.6} parent=0 // pred_check
    _
  $region35: #{cvt5_forward.6} parent=0 // pred_check_branch
    %239 = sbr.rel (0) target = $region37
  $region36: #{cvt5_forward.6} parent=0 // pred_region
    _
  $region37: #{cvt5_forward.6} parent=0 // pred_fallthru
    _
  // Predicated region
  $region38: #{cvt5_forward.6} parent=0 // pred_check
    _
  $region39: #{cvt5_forward.6} parent=0 // pred_check_branch
    %241 = sbr.rel (0) target = $region41
  $region40: #{cvt5_forward.6} parent=0 // pred_region
    _
  $region41: #{cvt5_forward.6} parent=0 // pred_fallthru
    _

// kernel: cvt5_forward.9
$region0: #{cvt5_forward.9}
  #allocation0 [shape = 'u32[]', space=smem, size = 0x4, offset = 0x4, fixed_abs, tag = 'smem constant byte address 0x4 - core index']
  #allocation1 [shape = 'u32[72,128]{1,0:T(1,128)}', space=vmem, size = 0x9000, scoped, tag = 'internal scratch']
  %s0 = inlined_call_operand.vmem [shape: f32[2,12,128], index: 0, kind: input, shape index: {}]
  %s1 = inlined_call_operand.vmem [shape: f32[2,12,128], index: 1, kind: input, shape index: {}]
  %s2 = inlined_call_operand.vmem [shape: f32[128,128], index: 2, kind: input, shape index: {}]
  %s3 = inlined_call_operand.vmem [shape: f32[1,128], index: 3, kind: input, shape index: {}]
  %s4 = inlined_call_operand.vmem [shape: f32[2,3,128], index: 4, kind: output, shape index: {}]
  %s5 = sld [smem:[#allocation0]]
  $region26: #{cvt5_forward.9} parent=0
    _
  %s7 = ssub.s32 1, %s5
  %s8 = scalar_select 0, %s7, %s5
  // Predicated region
  $region2: #{cvt5_forward.9} parent=0 // pred_check
    _
  $region3: #{cvt5_forward.9} parent=0 // pred_check_branch
    %10 = sbr.rel (0) target = $region5
  $region4: #{cvt5_forward.9} parent=0 // pred_region
    _
  $region5: #{cvt5_forward.9} parent=0 // pred_fallthru
    _
  // Predicated region
  $region6: #{cvt5_forward.9} parent=0 // pred_check
    _
  $region7: #{cvt5_forward.9} parent=0 // pred_check_branch
    %12 = sbr.rel (0) target = $region9
  $region8: #{cvt5_forward.9} parent=0 // pred_region
    _
  $region9: #{cvt5_forward.9} parent=0 // pred_fallthru
    _
  // Predicated region
  $region10: #{cvt5_forward.9} parent=0 // pred_check
    _
  $region11: #{cvt5_forward.9} parent=0 // pred_check_branch
    %14 = sbr.rel (0) target = $region13
  $region12: #{cvt5_forward.9} parent=0 // pred_region
    _
  $region13: #{cvt5_forward.9} parent=0 // pred_fallthru
    _
  // Predicated region
  $region14: #{cvt5_forward.9} parent=0 // pred_check
    _
  $region15: #{cvt5_forward.9} parent=0 // pred_check_branch
    %16 = sbr.rel (0) target = $region17
  $region16: #{cvt5_forward.9} parent=0 // pred_region
    _
  $region17: #{cvt5_forward.9} parent=0 // pred_fallthru
    _
  %v17 = vld [vmem:[%s0] sm:$0xff]
  %v18 = vld [vmem:[%s0 + $0x8] sm:$0xf]
  %v19 = vld [vmem:[%s0 + $0x10] sm:$0xff]
  %v20 = vld [vmem:[%s0 + $0x18] sm:$0xf]
  %v21 = vld [vmem:[%s1] sm:$0xff]
  %v22 = vld [vmem:[%s1 + $0x8] sm:$0xf]
  %v23 = vld [vmem:[%s1 + $0x10] sm:$0xff]
  %v24 = vld [vmem:[%s1 + $0x18] sm:$0xf]
  %v25 = vadd.f32 %v17, %v21
  %v26 = vadd.f32 %v18, %v22
  %v27 = vadd.f32 %v19, %v23
  %v28 = vadd.f32 %v20, %v24
  %v29 = vld [vmem:[%s2] sm:$0xff]
  %v30 = vld [vmem:[%s2 + $0x8] sm:$0xff]
  %v31 = vld [vmem:[%s2 + $0x10] sm:$0xff]
  %v32 = vld [vmem:[%s2 + $0x18] sm:$0xff]
  %v33 = vld [vmem:[%s2 + $0x20] sm:$0xff]
  %v34 = vld [vmem:[%s2 + $0x28] sm:$0xff]
  %v35 = vld [vmem:[%s2 + $0x30] sm:$0xff]
  %v36 = vld [vmem:[%s2 + $0x38] sm:$0xff]
  %v37 = vld [vmem:[%s2 + $0x40] sm:$0xff]
  %v38 = vld [vmem:[%s2 + $0x48] sm:$0xff]
  %v39 = vld [vmem:[%s2 + $0x50] sm:$0xff]
  %v40 = vld [vmem:[%s2 + $0x58] sm:$0xff]
  %v41 = vld [vmem:[%s2 + $0x60] sm:$0xff]
  %v42 = vld [vmem:[%s2 + $0x68] sm:$0xff]
  %v43 = vld [vmem:[%s2 + $0x70] sm:$0xff]
  %v44 = vld [vmem:[%s2 + $0x78] sm:$0xff]
  %v45 = vld [vmem:[%s3] sm:$0x1]
  %vm46 = vcmask 1043456
  %v47 = vsel %vm46, %v25, 0.0
  %v48 = vrot.slane %v47, 4
  %v49 = vadd.f32 %v47, %v48
  %v50 = vrot.slane %v49, 2
  %v51 = vadd.f32 %v49, %v50
  %v52 = vrot.slane %v51, 1
  %v53 = vadd.f32 %v51, %v52
  %v54 = vsel %vm46, %v27, 0.0
  %v55 = vrot.slane %v54, 4
  %v56 = vadd.f32 %v54, %v55
  %v57 = vrot.slane %v56, 2
  %v58 = vadd.f32 %v56, %v57
  %v59 = vrot.slane %v58, 1
  %v60 = vadd.f32 %v58, %v59
  %v61 = vrcp.pop 4.0
  %v62 = vmul.f32 4.0, %v61
  %v63 = vsub.f32 1.0, %v62
  %v64 = vmul.f32 %v61, %v63
  %v65 = vadd.f32 %v61, %v64
  %vm66 = vweird.f32 %v61
  %v67 = vsel %vm66, %v61, %v65
  %v68 = vmul.f32 %v53, %v67
  %v69 = vmul.f32 %v60, %v67
  %v71 = vperm.slane %v45, 0
  %vm75 = vcmask 1041409
  %v76 = vsel %vm75, %v69, %v68
  %78 = vmatpush.msra.mxu0 %v44
  %79 = vmatpush.msra.mxu0 %v43
  %80 = vmatpush.msra.mxu0 %v42
  %81 = vmatpush.msra.mxu0 %v41
  %82 = vmatpush.msra.mxu0 %v40
  %83 = vmatpush.msra.mxu0 %v39
  %84 = vmatpush.msra.mxu0 %v38
  %85 = vmatpush.msra.mxu0 %v37
  %86 = vmatpush.msra.mxu0 %v36
  %87 = vmatpush.msra.mxu0 %v35
  %88 = vmatpush.msra.mxu0 %v34
  %89 = vmatpush.msra.mxu0 %v33
  %90 = vmatpush.msra.mxu0 %v32
  %91 = vmatpush.msra.mxu0 %v31
  %92 = vmatpush.msra.mxu0 %v30
  %93 = vmatpush.msra.mxu0 %v29
  %94 = vmatmul.f32.gmra.mxu0 %v76
  %v95 = vpop.f32.mrf.mxu0
  %v96 = vadd.f32 %v71, %v95
  %97 = vdwg.mxu0
  %v99 = vrot.slane %v96, 1
  %101 = vst [vmem:[%s4] sm:$0x1] %v96
  %102 = vst [vmem:[%s4 + $0x4] sm:$0x1] %v99
  %v105 = vrot.slane %v25, 4
  %v106 = vrot.slane %v27, 4
  %v109 = vsel %vm46, %v105, 0.0
  %v110 = vrot.slane %v109, 4
  %v111 = vadd.f32 %v109, %v110
  %v112 = vrot.slane %v111, 2
  %v113 = vadd.f32 %v111, %v112
  %v114 = vrot.slane %v113, 1
  %v115 = vadd.f32 %v113, %v114
  %v116 = vsel %vm46, %v106, 0.0
  %v117 = vrot.slane %v116, 4
  %v118 = vadd.f32 %v116, %v117
  %v119 = vrot.slane %v118, 2
  %v120 = vadd.f32 %v118, %v119
  %v121 = vrot.slane %v120, 1
  %v122 = vadd.f32 %v120, %v121
  %v123 = vmul.f32 %v115, %v67
  %v124 = vmul.f32 %v122, %v67
  %v127 = vsel %vm75, %v124, %v123
  %129 = vmatpush.msra.mxu0 %v44
  %130 = vmatpush.msra.mxu0 %v43
  %131 = vmatpush.msra.mxu0 %v42
  %132 = vmatpush.msra.mxu0 %v41
  %133 = vmatpush.msra.mxu0 %v40
  %134 = vmatpush.msra.mxu0 %v39
  %135 = vmatpush.msra.mxu0 %v38
  %136 = vmatpush.msra.mxu0 %v37
  %137 = vmatpush.msra.mxu0 %v36
  %138 = vmatpush.msra.mxu0 %v35
  %139 = vmatpush.msra.mxu0 %v34
  %140 = vmatpush.msra.mxu0 %v33
  %141 = vmatpush.msra.mxu0 %v32
  %142 = vmatpush.msra.mxu0 %v31
  %143 = vmatpush.msra.mxu0 %v30
  %144 = vmatpush.msra.mxu0 %v29
  %145 = vmatmul.f32.gmra.mxu0 %v127
  %v146 = vpop.f32.mrf.mxu0
  %v147 = vadd.f32 %v71, %v146
  %148 = vdwg.mxu0
  %v150 = vrot.slane %v147, 1
  %152 = vst [vmem:[%s4 + $0x1] sm:$0x1] %v147
  %153 = vst [vmem:[%s4 + $0x5] sm:$0x1] %v150
  %v154 = vsel %vm46, %v26, 0.0
  %v155 = vrot.slane %v154, 4
  %v156 = vadd.f32 %v154, %v155
  %v157 = vrot.slane %v156, 2
  %v158 = vadd.f32 %v156, %v157
  %v159 = vrot.slane %v158, 1
  %v160 = vadd.f32 %v158, %v159
  %v161 = vsel %vm46, %v28, 0.0
  %v162 = vrot.slane %v161, 4
  %v163 = vadd.f32 %v161, %v162
  %v164 = vrot.slane %v163, 2
  %v165 = vadd.f32 %v163, %v164
  %v166 = vrot.slane %v165, 1
  %v167 = vadd.f32 %v165, %v166
  %v168 = vmul.f32 %v160, %v67
  %v169 = vmul.f32 %v167, %v67
  %v172 = vsel %vm75, %v169, %v168
  %174 = vmatpush.msra.mxu0 %v44
  %175 = vmatpush.msra.mxu0 %v43
  %176 = vmatpush.msra.mxu0 %v42
  %177 = vmatpush.msra.mxu0 %v41
  %178 = vmatpush.msra.mxu0 %v40
  %179 = vmatpush.msra.mxu0 %v39
  %180 = vmatpush.msra.mxu0 %v38
  %181 = vmatpush.msra.mxu0 %v37
  %182 = vmatpush.msra.mxu0 %v36
  %183 = vmatpush.msra.mxu0 %v35
  %184 = vmatpush.msra.mxu0 %v34
  %185 = vmatpush.msra.mxu0 %v33
  %186 = vmatpush.msra.mxu0 %v32
  %187 = vmatpush.msra.mxu0 %v31
  %188 = vmatpush.msra.mxu0 %v30
  %189 = vmatpush.msra.mxu0 %v29
  %190 = vmatmul.f32.gmra.mxu0 %v172
  %v191 = vpop.f32.mrf.mxu0
  %v192 = vadd.f32 %v71, %v191
  %193 = vdwg.mxu0
  %v195 = vrot.slane %v192, 1
  %197 = vst [vmem:[%s4 + $0x2] sm:$0x1] %v192
  %198 = vst [vmem:[%s4 + $0x6] sm:$0x1] %v195
  // Predicated region
  $region18: #{cvt5_forward.9} parent=0 // pred_check
    _
  $region19: #{cvt5_forward.9} parent=0 // pred_check_branch
    %200 = sbr.rel (0) target = $region21
  $region20: #{cvt5_forward.9} parent=0 // pred_region
    _
  $region21: #{cvt5_forward.9} parent=0 // pred_fallthru
    _
  // Predicated region
  $region22: #{cvt5_forward.9} parent=0 // pred_check
    _
  $region23: #{cvt5_forward.9} parent=0 // pred_check_branch
    %202 = sbr.rel (0) target = $region25
  $region24: #{cvt5_forward.9} parent=0 // pred_region
    _
  $region25: #{cvt5_forward.9} parent=0 // pred_fallthru
    _

// kernel: cvt5_forward.8
$region0: #{cvt5_forward.8}
  #allocation0 [shape = 'u32[]', space=smem, size = 0x4, offset = 0x4, fixed_abs, tag = 'smem constant byte address 0x4 - core index']
  #allocation1 [shape = 'u32[72,128]{1,0:T(1,128)}', space=vmem, size = 0x9000, scoped, tag = 'internal scratch']
  %s0 = inlined_call_operand.vmem [shape: f32[2,12,128], index: 0, kind: input, shape index: {}]
  %s1 = inlined_call_operand.vmem [shape: f32[2,1,12], index: 1, kind: input, shape index: {}]
  %s2 = inlined_call_operand.vmem [shape: f32[12,128], index: 2, kind: input, shape index: {}]
  %s3 = inlined_call_operand.vmem [shape: f32[128,384], index: 3, kind: input, shape index: {}]
  %s4 = inlined_call_operand.vmem [shape: f32[1,384], index: 4, kind: input, shape index: {}]
  %s5 = inlined_call_operand.vmem [shape: f32[128,128], index: 5, kind: input, shape index: {}]
  %s6 = inlined_call_operand.vmem [shape: f32[1,128], index: 6, kind: input, shape index: {}]
  %s7 = inlined_call_operand.vmem [shape: f32[1,128], index: 7, kind: input, shape index: {}]
  %s8 = inlined_call_operand.vmem [shape: f32[1,128], index: 8, kind: input, shape index: {}]
  %s9 = inlined_call_operand.vmem [shape: f32[128,128], index: 9, kind: input, shape index: {}]
  %s10 = inlined_call_operand.vmem [shape: f32[1,128], index: 10, kind: input, shape index: {}]
  %s11 = inlined_call_operand.vmem [shape: f32[128,128], index: 11, kind: input, shape index: {}]
  %s12 = inlined_call_operand.vmem [shape: f32[1,128], index: 12, kind: input, shape index: {}]
  %s13 = inlined_call_operand.vmem [shape: f32[1,128], index: 13, kind: input, shape index: {}]
  %s14 = inlined_call_operand.vmem [shape: f32[1,128], index: 14, kind: input, shape index: {}]
  %s15 = inlined_call_operand.vmem [shape: f32[1,128], index: 15, kind: input, shape index: {}]
  %s16 = inlined_call_operand.vmem [shape: f32[1,128], index: 16, kind: input, shape index: {}]
  %s17 = inlined_call_operand.vmem [shape: f32[2,12,128], index: 17, kind: output, shape index: {}]
  %s18 = sld [smem:[#allocation0]]
  $region101: #{cvt5_forward.8} parent=0
    _
  %s20 = ssub.s32 1, %s18
  %s21 = scalar_select 0, %s20, %s18
  loop: start=0, step=1, limit=4
  $region2: #{cvt5_forward.8} parent=0 // loop_pre_header
    _
  $region3: #{cvt5_forward.8} parent=0 // loop_header
    %s23 = sphi 0, %s27
    %p24 = scmp.ge.s32.totalorder %s23, 4
    %s33 = sphi 0, %s35
    %s36 = sphi 0, %s33
    %s37 = sphi 0, %s36
    %s53 = sphi 0, %s37
    %s59 = sphi 0, %s61
    %s62 = sphi 0, %s59
    %s63 = sphi 0, %s62
    %s79 = sphi 0, %s63
    %s83 = sphi 0, %s83
    %s85 = sphi 0, %s83
    %s86 = sphi 0, %s85
    %s100 = sphi 0, %s86
    %s104 = sphi 0, %s104
    %s106 = sphi 0, %s104
    %s107 = sphi 0, %s106
    %s121 = sphi 0, %s107
    %s125 = sphi 0, %s125
    %s127 = sphi 0, %s125
    %s128 = sphi 0, %s127
    %s142 = sphi 0, %s128
    %s146 = sphi 0, %s146
    %s148 = sphi 0, %s146
    %s149 = sphi 0, %s148
    %s163 = sphi 0, %s149
    %s167 = sphi 0, %s167
    %s169 = sphi 0, %s167
    %s170 = sphi 0, %s169
    %s184 = sphi 0, %s170
    %s188 = sphi 0, %s188
    %s190 = sphi 0, %s188
    %s191 = sphi 0, %s190
    %s205 = sphi 0, %s191
    %s209 = sphi 0, %s209
    %s211 = sphi 0, %s209
    %s212 = sphi 0, %s211
    %s226 = sphi 0, %s212
    %s230 = sphi 0, %s230
    %s232 = sphi 0, %s230
    %s233 = sphi 0, %s232
    %s247 = sphi 0, %s233
    %s251 = sphi 0, %s251
    %s253 = sphi 0, %s251
    %s254 = sphi 0, %s253
    %s268 = sphi 0, %s254
    %s272 = sphi 0, %s272
    %s274 = sphi 0, %s272
    %s275 = sphi 0, %s274
    %s289 = sphi 0, %s275
    %s293 = sphi 0, %s293
    %s295 = sphi 0, %s293
    %s296 = sphi 0, %s295
    %s310 = sphi 0, %s296
    %s314 = sphi 0, %s314
    %s316 = sphi 0, %s314
    %s317 = sphi 0, %s316
    %s331 = sphi 0, %s317
    %s335 = sphi 0, %s335
    %s337 = sphi 0, %s335
    %s338 = sphi 0, %s337
    %s352 = sphi 0, %s338
    %s356 = sphi 0, %s356
    %s358 = sphi 0, %s356
    %s359 = sphi 0, %s358
    %s373 = sphi 0, %s359
    %s377 = sphi 0, %s377
    %s379 = sphi 0, %s377
    %s380 = sphi 0, %s379
    %s394 = sphi 0, %s380
    %s400 = sphi 0, %s402
    %s403 = sphi 0, %s400
    %s404 = sphi 0, %s403
    %s420 = sphi 0, %s404
  $region4: #{cvt5_forward.8} parent=0 // loop_header_branch
    %26 = sbr.rel (%p24) target = $region8
  $region5: #{cvt5_forward.8} parent=0 // loop_body
    %s28 = ssub.s32 %s23, 1
    %s29 = ssub.s32 %s23, 2
    %s30 = sadd.s32 %s23, 1
    %s31 = ssub.s32 %s23, %s30
    %p32 = scmp.eq.s32.totalorder %s31, 0
    %s34 = sadd.s32 %s33, 1
    %s35 = scalar_select %p32, %s33, %s34
    %p38 = pneg %p32
    %p39 = scmp.eq.s32.totalorder %s23, 1
    %p40 = por %p38, %p39
    %p41 = scmp.ne.s32.totalorder %s33, %s36
    %p42 = scmp.eq.s32.totalorder %s23, 0
    %p43 = por %p41, %p42
    %p44 = scmp.ne.s32.totalorder %s33, %s36
    %p45 = scmp.eq.s32.totalorder %s28, 1
    %p46 = por %p44, %p45
    %p47 = scmp.ne.s32.totalorder %s36, %s37
    %p48 = scmp.eq.s32.totalorder %s28, 0
    %p49 = por %p47, %p48
    %p50 = scmp.ne.s32.totalorder %s36, %s37
    %p51 = scmp.eq.s32.totalorder %s29, 1
    %p52 = por %p50, %p51
    %p54 = scmp.ne.s32.totalorder %s37, %s53
    %p55 = scmp.eq.s32.totalorder %s29, 0
    %p56 = por %p54, %p55
    %s57 = ssub.s32 %s23, %s30
    %p58 = scmp.eq.s32.totalorder %s57, 0
    %s60 = sadd.s32 %s59, 1
    %s61 = scalar_select %p58, %s59, %s60
    %p64 = pneg %p58
    %p65 = scmp.eq.s32.totalorder %s23, 1
    %p66 = por %p64, %p65
    %p67 = scmp.ne.s32.totalorder %s59, %s62
    %p68 = scmp.eq.s32.totalorder %s23, 0
    %p69 = por %p67, %p68
    %p70 = scmp.ne.s32.totalorder %s59, %s62
    %p71 = scmp.eq.s32.totalorder %s28, 1
    %p72 = por %p70, %p71
    %p73 = scmp.ne.s32.totalorder %s62, %s63
    %p74 = scmp.eq.s32.totalorder %s28, 0
    %p75 = por %p73, %p74
    %p76 = scmp.ne.s32.totalorder %s62, %s63
    %p77 = scmp.eq.s32.totalorder %s29, 1
    %p78 = por %p76, %p77
    %p80 = scmp.ne.s32.totalorder %s63, %s79
    %p81 = scmp.eq.s32.totalorder %s29, 0
    %p82 = por %p80, %p81
    %s84 = sadd.s32 %s83, 1
    %p87 = scmp.eq.s32.totalorder %s23, 1
    %p88 = scmp.ne.s32.totalorder %s83, %s85
    %p89 = scmp.eq.s32.totalorder %s23, 0
    %p90 = por %p88, %p89
    %p91 = scmp.ne.s32.totalorder %s83, %s85
    %p92 = scmp.eq.s32.totalorder %s28, 1
    %p93 = por %p91, %p92
    %p94 = scmp.ne.s32.totalorder %s85, %s86
    %p95 = scmp.eq.s32.totalorder %s28, 0
    %p96 = por %p94, %p95
    %p97 = scmp.ne.s32.totalorder %s85, %s86
    %p98 = scmp.eq.s32.totalorder %s29, 1
    %p99 = por %p97, %p98
    %p101 = scmp.ne.s32.totalorder %s86, %s100
    %p102 = scmp.eq.s32.totalorder %s29, 0
    %p103 = por %p101, %p102
    %s105 = sadd.s32 %s104, 1
    %p108 = scmp.eq.s32.totalorder %s23, 1
    %p109 = scmp.ne.s32.totalorder %s104, %s106
    %p110 = scmp.eq.s32.totalorder %s23, 0
    %p111 = por %p109, %p110
    %p112 = scmp.ne.s32.totalorder %s104, %s106
    %p113 = scmp.eq.s32.totalorder %s28, 1
    %p114 = por %p112, %p113
    %p115 = scmp.ne.s32.totalorder %s106, %s107
    %p116 = scmp.eq.s32.totalorder %s28, 0
    %p117 = por %p115, %p116
    %p118 = scmp.ne.s32.totalorder %s106, %s107
    %p119 = scmp.eq.s32.totalorder %s29, 1
    %p120 = por %p118, %p119
    %p122 = scmp.ne.s32.totalorder %s107, %s121
    %p123 = scmp.eq.s32.totalorder %s29, 0
    %p124 = por %p122, %p123
    %s126 = sadd.s32 %s125, 1
    %p129 = scmp.eq.s32.totalorder %s23, 1
    %p130 = scmp.ne.s32.totalorder %s125, %s127
    %p131 = scmp.eq.s32.totalorder %s23, 0
    %p132 = por %p130, %p131
    %p133 = scmp.ne.s32.totalorder %s125, %s127
    %p134 = scmp.eq.s32.totalorder %s28, 1
    %p135 = por %p133, %p134
    %p136 = scmp.ne.s32.totalorder %s127, %s128
    %p137 = scmp.eq.s32.totalorder %s28, 0
    %p138 = por %p136, %p137
    %p139 = scmp.ne.s32.totalorder %s127, %s128
    %p140 = scmp.eq.s32.totalorder %s29, 1
    %p141 = por %p139, %p140
    %p143 = scmp.ne.s32.totalorder %s128, %s142
    %p144 = scmp.eq.s32.totalorder %s29, 0
    %p145 = por %p143, %p144
    %s147 = sadd.s32 %s146, 1
    %p150 = scmp.eq.s32.totalorder %s23, 1
    %p151 = scmp.ne.s32.totalorder %s146, %s148
    %p152 = scmp.eq.s32.totalorder %s23, 0
    %p153 = por %p151, %p152
    %p154 = scmp.ne.s32.totalorder %s146, %s148
    %p155 = scmp.eq.s32.totalorder %s28, 1
    %p156 = por %p154, %p155
    %p157 = scmp.ne.s32.totalorder %s148, %s149
    %p158 = scmp.eq.s32.totalorder %s28, 0
    %p159 = por %p157, %p158
    %p160 = scmp.ne.s32.totalorder %s148, %s149
    %p161 = scmp.eq.s32.totalorder %s29, 1
    %p162 = por %p160, %p161
    %p164 = scmp.ne.s32.totalorder %s149, %s163
    %p165 = scmp.eq.s32.totalorder %s29, 0
    %p166 = por %p164, %p165
    %s168 = sadd.s32 %s167, 1
    %p171 = scmp.eq.s32.totalorder %s23, 1
    %p172 = scmp.ne.s32.totalorder %s167, %s169
    %p173 = scmp.eq.s32.totalorder %s23, 0
    %p174 = por %p172, %p173
    %p175 = scmp.ne.s32.totalorder %s167, %s169
    %p176 = scmp.eq.s32.totalorder %s28, 1
    %p177 = por %p175, %p176
    %p178 = scmp.ne.s32.totalorder %s169, %s170
    %p179 = scmp.eq.s32.totalorder %s28, 0
    %p180 = por %p178, %p179
    %p181 = scmp.ne.s32.totalorder %s169, %s170
    %p182 = scmp.eq.s32.totalorder %s29, 1
    %p183 = por %p181, %p182
    %p185 = scmp.ne.s32.totalorder %s170, %s184
    %p186 = scmp.eq.s32.totalorder %s29, 0
    %p187 = por %p185, %p186
    %s189 = sadd.s32 %s188, 1
    %p192 = scmp.eq.s32.totalorder %s23, 1
    %p193 = scmp.ne.s32.totalorder %s188, %s190
    %p194 = scmp.eq.s32.totalorder %s23, 0
    %p195 = por %p193, %p194
    %p196 = scmp.ne.s32.totalorder %s188, %s190
    %p197 = scmp.eq.s32.totalorder %s28, 1
    %p198 = por %p196, %p197
    %p199 = scmp.ne.s32.totalorder %s190, %s191
    %p200 = scmp.eq.s32.totalorder %s28, 0
    %p201 = por %p199, %p200
    %p202 = scmp.ne.s32.totalorder %s190, %s191
    %p203 = scmp.eq.s32.totalorder %s29, 1
    %p204 = por %p202, %p203
    %p206 = scmp.ne.s32.totalorder %s191, %s205
    %p207 = scmp.eq.s32.totalorder %s29, 0
    %p208 = por %p206, %p207
    %s210 = sadd.s32 %s209, 1
    %p213 = scmp.eq.s32.totalorder %s23, 1
    %p214 = scmp.ne.s32.totalorder %s209, %s211
    %p215 = scmp.eq.s32.totalorder %s23, 0
    %p216 = por %p214, %p215
    %p217 = scmp.ne.s32.totalorder %s209, %s211
    %p218 = scmp.eq.s32.totalorder %s28, 1
    %p219 = por %p217, %p218
    %p220 = scmp.ne.s32.totalorder %s211, %s212
    %p221 = scmp.eq.s32.totalorder %s28, 0
    %p222 = por %p220, %p221
    %p223 = scmp.ne.s32.totalorder %s211, %s212
    %p224 = scmp.eq.s32.totalorder %s29, 1
    %p225 = por %p223, %p224
    %p227 = scmp.ne.s32.totalorder %s212, %s226
    %p228 = scmp.eq.s32.totalorder %s29, 0
    %p229 = por %p227, %p228
    %s231 = sadd.s32 %s230, 1
    %p234 = scmp.eq.s32.totalorder %s23, 1
    %p235 = scmp.ne.s32.totalorder %s230, %s232
    %p236 = scmp.eq.s32.totalorder %s23, 0
    %p237 = por %p235, %p236
    %p238 = scmp.ne.s32.totalorder %s230, %s232
    %p239 = scmp.eq.s32.totalorder %s28, 1
    %p240 = por %p238, %p239
    %p241 = scmp.ne.s32.totalorder %s232, %s233
    %p242 = scmp.eq.s32.totalorder %s28, 0
    %p243 = por %p241, %p242
    %p244 = scmp.ne.s32.totalorder %s232, %s233
    %p245 = scmp.eq.s32.totalorder %s29, 1
    %p246 = por %p244, %p245
    %p248 = scmp.ne.s32.totalorder %s233, %s247
    %p249 = scmp.eq.s32.totalorder %s29, 0
    %p250 = por %p248, %p249
    %s252 = sadd.s32 %s251, 1
    %p255 = scmp.eq.s32.totalorder %s23, 1
    %p256 = scmp.ne.s32.totalorder %s251, %s253
    %p257 = scmp.eq.s32.totalorder %s23, 0
    %p258 = por %p256, %p257
    %p259 = scmp.ne.s32.totalorder %s251, %s253
    %p260 = scmp.eq.s32.totalorder %s28, 1
    %p261 = por %p259, %p260
    %p262 = scmp.ne.s32.totalorder %s253, %s254
    %p263 = scmp.eq.s32.totalorder %s28, 0
    %p264 = por %p262, %p263
    %p265 = scmp.ne.s32.totalorder %s253, %s254
    %p266 = scmp.eq.s32.totalorder %s29, 1
    %p267 = por %p265, %p266
    %p269 = scmp.ne.s32.totalorder %s254, %s268
    %p270 = scmp.eq.s32.totalorder %s29, 0
    %p271 = por %p269, %p270
    %s273 = sadd.s32 %s272, 1
    %p276 = scmp.eq.s32.totalorder %s23, 1
    %p277 = scmp.ne.s32.totalorder %s272, %s274
    %p278 = scmp.eq.s32.totalorder %s23, 0
    %p279 = por %p277, %p278
    %p280 = scmp.ne.s32.totalorder %s272, %s274
    %p281 = scmp.eq.s32.totalorder %s28, 1
    %p282 = por %p280, %p281
    %p283 = scmp.ne.s32.totalorder %s274, %s275
    %p284 = scmp.eq.s32.totalorder %s28, 0
    %p285 = por %p283, %p284
    %p286 = scmp.ne.s32.totalorder %s274, %s275
    %p287 = scmp.eq.s32.totalorder %s29, 1
    %p288 = por %p286, %p287
    %p290 = scmp.ne.s32.totalorder %s275, %s289
    %p291 = scmp.eq.s32.totalorder %s29, 0
    %p292 = por %p290, %p291
    %s294 = sadd.s32 %s293, 1
    %p297 = scmp.eq.s32.totalorder %s23, 1
    %p298 = scmp.ne.s32.totalorder %s293, %s295
    %p299 = scmp.eq.s32.totalorder %s23, 0
    %p300 = por %p298, %p299
    %p301 = scmp.ne.s32.totalorder %s293, %s295
    %p302 = scmp.eq.s32.totalorder %s28, 1
    %p303 = por %p301, %p302
    %p304 = scmp.ne.s32.totalorder %s295, %s296
    %p305 = scmp.eq.s32.totalorder %s28, 0
    %p306 = por %p304, %p305
    %p307 = scmp.ne.s32.totalorder %s295, %s296
    %p308 = scmp.eq.s32.totalorder %s29, 1
    %p309 = por %p307, %p308
    %p311 = scmp.ne.s32.totalorder %s296, %s310
    %p312 = scmp.eq.s32.totalorder %s29, 0
    %p313 = por %p311, %p312
    %s315 = sadd.s32 %s314, 1
    %p318 = scmp.eq.s32.totalorder %s23, 1
    %p319 = scmp.ne.s32.totalorder %s314, %s316
    %p320 = scmp.eq.s32.totalorder %s23, 0
    %p321 = por %p319, %p320
    %p322 = scmp.ne.s32.totalorder %s314, %s316
    %p323 = scmp.eq.s32.totalorder %s28, 1
    %p324 = por %p322, %p323
    %p325 = scmp.ne.s32.totalorder %s316, %s317
    %p326 = scmp.eq.s32.totalorder %s28, 0
    %p327 = por %p325, %p326
    %p328 = scmp.ne.s32.totalorder %s316, %s317
    %p329 = scmp.eq.s32.totalorder %s29, 1
    %p330 = por %p328, %p329
    %p332 = scmp.ne.s32.totalorder %s317, %s331
    %p333 = scmp.eq.s32.totalorder %s29, 0
    %p334 = por %p332, %p333
    %s336 = sadd.s32 %s335, 1
    %p339 = scmp.eq.s32.totalorder %s23, 1
    %p340 = scmp.ne.s32.totalorder %s335, %s337
    %p341 = scmp.eq.s32.totalorder %s23, 0
    %p342 = por %p340, %p341
    %p343 = scmp.ne.s32.totalorder %s335, %s337
    %p344 = scmp.eq.s32.totalorder %s28, 1
    %p345 = por %p343, %p344
    %p346 = scmp.ne.s32.totalorder %s337, %s338
    %p347 = scmp.eq.s32.totalorder %s28, 0
    %p348 = por %p346, %p347
    %p349 = scmp.ne.s32.totalorder %s337, %s338
    %p350 = scmp.eq.s32.totalorder %s29, 1
    %p351 = por %p349, %p350
    %p353 = scmp.ne.s32.totalorder %s338, %s352
    %p354 = scmp.eq.s32.totalorder %s29, 0
    %p355 = por %p353, %p354
    %s357 = sadd.s32 %s356, 1
    %p360 = scmp.eq.s32.totalorder %s23, 1
    %p361 = scmp.ne.s32.totalorder %s356, %s358
    %p362 = scmp.eq.s32.totalorder %s23, 0
    %p363 = por %p361, %p362
    %p364 = scmp.ne.s32.totalorder %s356, %s358
    %p365 = scmp.eq.s32.totalorder %s28, 1
    %p366 = por %p364, %p365
    %p367 = scmp.ne.s32.totalorder %s358, %s359
    %p368 = scmp.eq.s32.totalorder %s28, 0
    %p369 = por %p367, %p368
    %p370 = scmp.ne.s32.totalorder %s358, %s359
    %p371 = scmp.eq.s32.totalorder %s29, 1
    %p372 = por %p370, %p371
    %p374 = scmp.ne.s32.totalorder %s359, %s373
    %p375 = scmp.eq.s32.totalorder %s29, 0
    %p376 = por %p374, %p375
    %s378 = sadd.s32 %s377, 1
    %p381 = scmp.eq.s32.totalorder %s23, 1
    %p382 = scmp.ne.s32.totalorder %s377, %s379
    %p383 = scmp.eq.s32.totalorder %s23, 0
    %p384 = por %p382, %p383
    %p385 = scmp.ne.s32.totalorder %s377, %s379
    %p386 = scmp.eq.s32.totalorder %s28, 1
    %p387 = por %p385, %p386
    %p388 = scmp.ne.s32.totalorder %s379, %s380
    %p389 = scmp.eq.s32.totalorder %s28, 0
    %p390 = por %p388, %p389
    %p391 = scmp.ne.s32.totalorder %s379, %s380
    %p392 = scmp.eq.s32.totalorder %s29, 1
    %p393 = por %p391, %p392
    %p395 = scmp.ne.s32.totalorder %s380, %s394
    %p396 = scmp.eq.s32.totalorder %s29, 0
    %p397 = por %p395, %p396
    %s398 = ssub.s32 %s23, %s30
    %p399 = scmp.eq.s32.totalorder %s398, 0
    %s401 = sadd.s32 %s400, 1
    %s402 = scalar_select %p399, %s400, %s401
    %p405 = pneg %p399
    %p406 = scmp.eq.s32.totalorder %s23, 1
    %p407 = por %p405, %p406
    %p408 = scmp.ne.s32.totalorder %s400, %s403
    %p409 = scmp.eq.s32.totalorder %s23, 0
    %p410 = por %p408, %p409
    %p411 = scmp.ne.s32.totalorder %s400, %s403
    %p412 = scmp.eq.s32.totalorder %s28, 1
    %p413 = por %p411, %p412
    %p414 = scmp.ne.s32.totalorder %s403, %s404
    %p415 = scmp.eq.s32.totalorder %s28, 0
    %p416 = por %p414, %p415
    %p417 = scmp.ne.s32.totalorder %s403, %s404
    %p418 = scmp.eq.s32.totalorder %s29, 1
    %p419 = por %p417, %p418
    %p421 = scmp.ne.s32.totalorder %s404, %s420
    %p422 = scmp.eq.s32.totalorder %s29, 0
    %p423 = por %p421, %p422
    %p424 = scmp.le.s32.totalorder 1, %s23
    %p425 = scmp.lt.s32.totalorder %s23, 3
    %p426 = pnand %p424, %p425
    %p427 = pneg %p426
    // Predicated region
    $region9: #{cvt5_forward.8} parent=5 // pred_check
      _
    $region10: #{cvt5_forward.8} parent=5 // pred_check_branch
      %429 = sbr.rel (%p426) target = $region12
    $region11: #{cvt5_forward.8} parent=5 // pred_region
      %s430 = ssub.s32 %s23, 1
      // Predicated region
      $region13: #{cvt5_forward.8} parent=11 // pred_check
        %p431 = pneg %p96
      $region14: #{cvt5_forward.8} parent=11 // pred_check_branch
        %433 = sbr.rel (%p431) target = $region16
      $region15: #{cvt5_forward.8} parent=11 // pred_region
        _
      $region16: #{cvt5_forward.8} parent=11 // pred_fallthru
        _
      // Predicated region
      $region17: #{cvt5_forward.8} parent=11 // pred_check
        %p434 = pneg %p117
      $region18: #{cvt5_forward.8} parent=11 // pred_check_branch
        %436 = sbr.rel (%p434) target = $region20
      $region19: #{cvt5_forward.8} parent=11 // pred_region
        _
      $region20: #{cvt5_forward.8} parent=11 // pred_fallthru
        _
      // Predicated region
      $region21: #{cvt5_forward.8} parent=11 // pred_check
        %p437 = pneg %p138
      $region22: #{cvt5_forward.8} parent=11 // pred_check_branch
        %439 = sbr.rel (%p437) target = $region24
      $region23: #{cvt5_forward.8} parent=11 // pred_region
        _
      $region24: #{cvt5_forward.8} parent=11 // pred_fallthru
        _
      // Predicated region
      $region25: #{cvt5_forward.8} parent=11 // pred_check
        %p440 = pneg %p159
      $region26: #{cvt5_forward.8} parent=11 // pred_check_branch
        %442 = sbr.rel (%p440) target = $region28
      $region27: #{cvt5_forward.8} parent=11 // pred_region
        _
      $region28: #{cvt5_forward.8} parent=11 // pred_fallthru
        _
      // Predicated region
      $region29: #{cvt5_forward.8} parent=11 // pred_check
        %p443 = pneg %p180
      $region30: #{cvt5_forward.8} parent=11 // pred_check_branch
        %445 = sbr.rel (%p443) target = $region32
      $region31: #{cvt5_forward.8} parent=11 // pred_region
        _
      $region32: #{cvt5_forward.8} parent=11 // pred_fallthru
        _
      // Predicated region
      $region33: #{cvt5_forward.8} parent=11 // pred_check
        %p446 = pneg %p201
      $region34: #{cvt5_forward.8} parent=11 // pred_check_branch
        %448 = sbr.rel (%p446) target = $region36
      $region35: #{cvt5_forward.8} parent=11 // pred_region
        _
      $region36: #{cvt5_forward.8} parent=11 // pred_fallthru
        _
      // Predicated region
      $region37: #{cvt5_forward.8} parent=11 // pred_check
        %p449 = pneg %p222
      $region38: #{cvt5_forward.8} parent=11 // pred_check_branch
        %451 = sbr.rel (%p449) target = $region40
      $region39: #{cvt5_forward.8} parent=11 // pred_region
        _
      $region40: #{cvt5_forward.8} parent=11 // pred_fallthru
        _
      // Predicated region
      $region41: #{cvt5_forward.8} parent=11 // pred_check
        %p452 = pneg %p243
      $region42: #{cvt5_forward.8} parent=11 // pred_check_branch
        %454 = sbr.rel (%p452) target = $region44
      $region43: #{cvt5_forward.8} parent=11 // pred_region
        _
      $region44: #{cvt5_forward.8} parent=11 // pred_fallthru
        _
      // Predicated region
      $region45: #{cvt5_forward.8} parent=11 // pred_check
        %p455 = pneg %p264
      $region46: #{cvt5_forward.8} parent=11 // pred_check_branch
        %457 = sbr.rel (%p455) target = $region48
      $region47: #{cvt5_forward.8} parent=11 // pred_region
        _
      $region48: #{cvt5_forward.8} parent=11 // pred_fallthru
        _
      // Predicated region
      $region49: #{cvt5_forward.8} parent=11 // pred_check
        %p458 = pneg %p285
      $region50: #{cvt5_forward.8} parent=11 // pred_check_branch
        %460 = sbr.rel (%p458) target = $region52
      $region51: #{cvt5_forward.8} parent=11 // pred_region
        _
      $region52: #{cvt5_forward.8} parent=11 // pred_fallthru
        _
      // Predicated region
      $region53: #{cvt5_forward.8} parent=11 // pred_check
        %p461 = pneg %p306
      $region54: #{cvt5_forward.8} parent=11 // pred_check_branch
        %463 = sbr.rel (%p461) target = $region56
      $region55: #{cvt5_forward.8} parent=11 // pred_region
        _
      $region56: #{cvt5_forward.8} parent=11 // pred_fallthru
        _
      // Predicated region
      $region57: #{cvt5_forward.8} parent=11 // pred_check
        %p464 = pneg %p327
      $region58: #{cvt5_forward.8} parent=11 // pred_check_branch
        %466 = sbr.rel (%p464) target = $region60
      $region59: #{cvt5_forward.8} parent=11 // pred_region
        _
      $region60: #{cvt5_forward.8} parent=11 // pred_fallthru
        _
      // Predicated region
      $region61: #{cvt5_forward.8} parent=11 // pred_check
        %p467 = pneg %p348
      $region62: #{cvt5_forward.8} parent=11 // pred_check_branch
        %469 = sbr.rel (%p467) target = $region64
      $region63: #{cvt5_forward.8} parent=11 // pred_region
        _
      $region64: #{cvt5_forward.8} parent=11 // pred_fallthru
        _
      // Predicated region
      $region65: #{cvt5_forward.8} parent=11 // pred_check
        %p470 = pneg %p369
      $region66: #{cvt5_forward.8} parent=11 // pred_check_branch
        %472 = sbr.rel (%p470) target = $region68
      $region67: #{cvt5_forward.8} parent=11 // pred_region
        _
      $region68: #{cvt5_forward.8} parent=11 // pred_fallthru
        _
      // Predicated region
      $region69: #{cvt5_forward.8} parent=11 // pred_check
        %p473 = pneg %p390
      $region70: #{cvt5_forward.8} parent=11 // pred_check_branch
        %475 = sbr.rel (%p473) target = $region72
      $region71: #{cvt5_forward.8} parent=11 // pred_region
        _
      $region72: #{cvt5_forward.8} parent=11 // pred_fallthru
        _
    $region12: #{cvt5_forward.8} parent=5 // pred_fallthru
      _
    %p476 = scmp.lt.s32.totalorder %s23, 2
    // Predicated region
    $region73: #{cvt5_forward.8} parent=5 // pred_check
      %p477 = pneg %p476
    $region74: #{cvt5_forward.8} parent=5 // pred_check_branch
      %479 = sbr.rel (%p477) target = $region76
    $region75: #{cvt5_forward.8} parent=5 // pred_region
      // Predicated region
      $region77: #{cvt5_forward.8} parent=75 // pred_check
        %p480 = pneg %p43
      $region78: #{cvt5_forward.8} parent=75 // pred_check_branch
        %482 = sbr.rel (%p480) target = $region80
      $region79: #{cvt5_forward.8} parent=75 // pred_region
        %p483 = scmp.lt.s32.totalorder %s23, 1
        %s484 = scalar_select %p483, %s23, 1
        %s485 = smul.addr %s484, 2
        %s486 = smul.addr %s485, 8
        %s487 = scalar_lea.vmem %s0, %s486
      $region80: #{cvt5_forward.8} parent=75 // pred_fallthru
        _
      // Predicated region
      $region81: #{cvt5_forward.8} parent=75 // pred_check
        %p488 = pneg %p69
      $region82: #{cvt5_forward.8} parent=75 // pred_check_branch
        %490 = sbr.rel (%p488) target = $region84
      $region83: #{cvt5_forward.8} parent=75 // pred_region
        %p491 = scmp.lt.s32.totalorder %s23, 1
        %s492 = scalar_select %p491, %s23, 1
        %s493 = scalar_lea.vmem %s1, %s492
      $region84: #{cvt5_forward.8} parent=75 // pred_fallthru
        _
    $region76: #{cvt5_forward.8} parent=5 // pred_fallthru
      _
    %p494 = scmp.le.s32.totalorder 1, %s23
    %p495 = scmp.lt.s32.totalorder %s23, 3
    %p496 = pnand %p494, %p495
    %p497 = pneg %p496
    // Predicated region
    $region85: #{cvt5_forward.8} parent=5 // pred_check
      _
    $region86: #{cvt5_forward.8} parent=5 // pred_check_branch
      %499 = sbr.rel (%p496) target = $region88
    $region87: #{cvt5_forward.8} parent=5 // pred_region
      %s500 = ssub.s32 %s23, 1
      %p501 = scmp.lt.s32.totalorder %s28, 1
      %s502 = scalar_select %p501, %s28, 1
      %s503 = smul.addr %s502, 2
      %s504 = smul.addr %s503, 8
      %s505 = scalar_lea.vmem %s0, %s504
      %p506 = pneg %p49
      %p507 = pneg %p46
      %p508 = scmp.lt.s32.totalorder %s28, 1
      %s509 = scalar_select %p508, %s28, 1
      %s510 = scalar_lea.vmem %s1, %s509
      %p511 = pneg %p75
      %p512 = pneg %p72
      %p513 = pneg %p96
      %p514 = pneg %p93
      %p515 = pneg %p117
      %p516 = pneg %p114
      %p517 = pneg %p138
      %p518 = pneg %p135
      %p519 = pneg %p159
      %p520 = pneg %p156
      %p521 = pneg %p180
      %p522 = pneg %p177
      %p523 = pneg %p201
      %p524 = pneg %p198
      %p525 = pneg %p222
      %p526 = pneg %p219
      %p527 = pneg %p243
      %p528 = pneg %p240
      %p529 = pneg %p264
      %p530 = pneg %p261
      %p531 = pneg %p285
      %p532 = pneg %p282
      %p533 = pneg %p306
      %p534 = pneg %p303
      %p535 = pneg %p327
      %p536 = pneg %p324
      %p537 = pneg %p348
      %p538 = pneg %p345
      %p539 = pneg %p369
      %p540 = pneg %p366
      %p541 = pneg %p390
      %p542 = pneg %p387
      %p543 = pneg %p416
      %p544 = pneg %p413
      %p545 = scmp.lt.s32.totalorder %s28, 1
      %s546 = scalar_select %p545, %s28, 1
      %s547 = smul.addr %s546, 2
      %s548 = smul.addr %s547, 8
      %s549 = scalar_lea.vmem %s17, %s548
      %p550 = scmp.lt.s32.totalorder %s28, 1
      %s551 = scalar_select %p550, %s28, 1
      %s552 = smul.addr %s551, 2
      %s553 = smul.addr %s552, 8
      %s554 = scalar_lea.vmem %s0, %s553
      %p555 = scmp.lt.s32.totalorder %s28, 1
      %s556 = scalar_select %p555, %s28, 1
      %s557 = scalar_lea.vmem %s1, %s556
      %p558 = scmp.lt.s32.totalorder %s28, 1
      %s559 = scalar_select %p558, %s28, 1
      %s560 = smul.addr %s559, 2
      %s561 = smul.addr %s560, 8
      %s562 = scalar_lea.vmem %s17, %s561
      %v563 = vld [vmem:[%s554] sm:$0xff]
      %v564 = vld [vmem:[%s554 + $0x8] sm:$0xf]
      %v565 = vld [vmem:[%s2] sm:$0xff]
      %v566 = vld [vmem:[%s2 + $0x8] sm:$0xf]
      %v567 = vadd.f32 %v563, %v565
      %v568 = vadd.f32 %v564, %v566
      %v569 = vld [vmem:[%s557] sm:$0x1]
      %v570 = vld [vmem:[%s3] sm:$0xff]
      %v571 = vld [vmem:[%s3 + $0x8] sm:$0xff]
      %v572 = vld [vmem:[%s3 + $0x10] sm:$0xff]
      %v573 = vld [vmem:[%s3 + $0x18] sm:$0xff]
      %v574 = vld [vmem:[%s3 + $0x20] sm:$0xff]
      %v575 = vld [vmem:[%s3 + $0x28] sm:$0xff]
      %v576 = vld [vmem:[%s3 + $0x30] sm:$0xff]
      %v577 = vld [vmem:[%s3 + $0x38] sm:$0xff]
      %v578 = vld [vmem:[%s3 + $0x40] sm:$0xff]
      %v579 = vld [vmem:[%s3 + $0x48] sm:$0xff]
      %v580 = vld [vmem:[%s3 + $0x50] sm:$0xff]
      %v581 = vld [vmem:[%s3 + $0x58] sm:$0xff]
      %v582 = vld [vmem:[%s3 + $0x60] sm:$0xff]
      %v583 = vld [vmem:[%s3 + $0x68] sm:$0xff]
      %v584 = vld [vmem:[%s3 + $0x70] sm:$0xff]
      %v585 = vld [vmem:[%s3 + $0x78] sm:$0xff]
      %v586 = vld [vmem:[%s3 + $0x80] sm:$0xff]
      %v587 = vld [vmem:[%s3 + $0x88] sm:$0xff]
      %v588 = vld [vmem:[%s3 + $0x90] sm:$0xff]
      %v589 = vld [vmem:[%s3 + $0x98] sm:$0xff]
      %v590 = vld [vmem:[%s3 + $0xa0] sm:$0xff]
      %v591 = vld [vmem:[%s3 + $0xa8] sm:$0xff]
      %v592 = vld [vmem:[%s3 + $0xb0] sm:$0xff]
      %v593 = vld [vmem:[%s3 + $0xb8] sm:$0xff]
      %v594 = vld [vmem:[%s3 + $0xc0] sm:$0xff]
      %v595 = vld [vmem:[%s3 + $0xc8] sm:$0xff]
      %v596 = vld [vmem:[%s3 + $0xd0] sm:$0xff]
      %v597 = vld [vmem:[%s3 + $0xd8] sm:$0xff]
      %v598 = vld [vmem:[%s3 + $0xe0] sm:$0xff]
      %v599 = vld [vmem:[%s3 + $0xe8] sm:$0xff]
      %v600 = vld [vmem:[%s3 + $0xf0] sm:$0xff]
      %v601 = vld [vmem:[%s3 + $0xf8] sm:$0xff]
      %v602 = vld [vmem:[%s3 + $0x100] sm:$0xff]
      %v603 = vld [vmem:[%s3 + $0x108] sm:$0xff]
      %v604 = vld [vmem:[%s3 + $0x110] sm:$0xff]
      %v605 = vld [vmem:[%s3 + $0x118] sm:$0xff]
      %v606 = vld [vmem:[%s3 + $0x120] sm:$0xff]
      %v607 = vld [vmem:[%s3 + $0x128] sm:$0xff]
      %v608 = vld [vmem:[%s3 + $0x130] sm:$0xff]
      %v609 = vld [vmem:[%s3 + $0x138] sm:$0xff]
      %v610 = vld [vmem:[%s3 + $0x140] sm:$0xff]
      %v611 = vld [vmem:[%s3 + $0x148] sm:$0xff]
      %v612 = vld [vmem:[%s3 + $0x150] sm:$0xff]
      %v613 = vld [vmem:[%s3 + $0x158] sm:$0xff]
      %v614 = vld [vmem:[%s3 + $0x160] sm:$0xff]
      %v615 = vld [vmem:[%s3 + $0x168] sm:$0xff]
      %v616 = vld [vmem:[%s3 + $0x170] sm:$0xff]
      %v617 = vld [vmem:[%s3 + $0x178] sm:$0xff]
      %v618 = vld [vmem:[%s4] sm:$0x7]
      %v620 = vperm.slane %v618, 0
      %v621 = vperm.slane %v618, 1
      %v622 = vperm.slane %v618, 2
      %626 = vmatpush.msra.mxu0 %v615
      %627 = vmatpush.msra.mxu0 %v612
      %628 = vmatpush.msra.mxu0 %v609
      %629 = vmatpush.msra.mxu0 %v606
      %630 = vmatpush.msra.mxu0 %v603
      %631 = vmatpush.msra.mxu0 %v600
      %632 = vmatpush.msra.mxu0 %v597
      %633 = vmatpush.msra.mxu0 %v594
      %634 = vmatpush.msra.mxu0 %v591
      %635 = vmatpush.msra.mxu0 %v588
      %636 = vmatpush.msra.mxu0 %v585
      %637 = vmatpush.msra.mxu0 %v582
      %638 = vmatpush.msra.mxu0 %v579
      %639 = vmatpush.msra.mxu0 %v576
      %640 = vmatpush.msra.mxu0 %v573
      %641 = vmatpush.msra.mxu0 %v570
      %642 = vmatmul.f32.gmra.mxu0 %v567
      %v643 = vpop.f32.mrf.mxu0
      %v644 = vadd.f32 %v620, %v643
      %645 = vmatmul.f32.gmra.mxu0 %v568
      %v646 = vpop.f32.mrf.mxu0
      %v647 = vadd.f32 %v620, %v646
      %648 = vdwg.mxu0
      %649 = vmatpush.msra.mxu0 %v616
      %650 = vmatpush.msra.mxu0 %v613
      %651 = vmatpush.msra.mxu0 %v610
      %652 = vmatpush.msra.mxu0 %v607
      %653 = vmatpush.msra.mxu0 %v604
      %654 = vmatpush.msra.mxu0 %v601
      %655 = vmatpush.msra.mxu0 %v598
      %656 = vmatpush.msra.mxu0 %v595
      %657 = vmatpush.msra.mxu0 %v592
      %658 = vmatpush.msra.mxu0 %v589
      %659 = vmatpush.msra.mxu0 %v586
      %660 = vmatpush.msra.mxu0 %v583
      %661 = vmatpush.msra.mxu0 %v580
      %662 = vmatpush.msra.mxu0 %v577
      %663 = vmatpush.msra.mxu0 %v574
      %664 = vmatpush.msra.mxu0 %v571
      %665 = vmatmul.f32.gmra.mxu0 %v567
      %v666 = vpop.f32.mrf.mxu0
      %v667 = vadd.f32 %v621, %v666
      %668 = vmatmul.f32.gmra.mxu0 %v568
      %v669 = vpop.f32.mrf.mxu0
      %v670 = vadd.f32 %v621, %v669
      %671 = vdwg.mxu0
      %672 = vmatpush.msra.mxu0 %v617
      %673 = vmatpush.msra.mxu0 %v614
      %674 = vmatpush.msra.mxu0 %v611
      %675 = vmatpush.msra.mxu0 %v608
      %676 = vmatpush.msra.mxu0 %v605
      %677 = vmatpush.msra.mxu0 %v602
      %678 = vmatpush.msra.mxu0 %v599
      %679 = vmatpush.msra.mxu0 %v596
      %680 = vmatpush.msra.mxu0 %v593
      %681 = vmatpush.msra.mxu0 %v590
      %682 = vmatpush.msra.mxu0 %v587
      %683 = vmatpush.msra.mxu0 %v584
      %684 = vmatpush.msra.mxu0 %v581
      %685 = vmatpush.msra.mxu0 %v578
      %686 = vmatpush.msra.mxu0 %v575
      %687 = vmatpush.msra.mxu0 %v572
      %688 = vmatmul.f32.gmra.mxu0 %v567
      %v689 = vpop.f32.mrf.mxu0
      %v690 = vadd.f32 %v622, %v689
      %691 = vmatmul.f32.gmra.mxu0 %v568
      %v692 = vpop.f32.mrf.mxu0
      %v693 = vadd.f32 %v622, %v692
      %694 = vdwg.mxu0
      %vm695 = vcmask 261120
      %v697 = vsel %vm695, %v644, 0
      %v700 = vsel %vm695, %v647, 0
      %v703 = vsel %vm695, %v667, 0
      %v706 = vsel %vm695, %v670, 0
      %708 = vmatpush.xpose.msra.mxu0 0.0
      %709 = vmatpush.xpose.msra.mxu0 0.0
      %710 = vmatpush.xpose.msra.mxu0 0.0
      %711 = vmatpush.xpose.msra.mxu0 0.0
      %712 = vmatpush.xpose.msra.mxu0 0.0
      %713 = vmatpush.xpose.msra.mxu0 0.0
      %714 = vmatpush.xpose.msra.mxu0 0.0
      %715 = vmatpush.xpose.msra.mxu0 0.0
      %716 = vmatpush.xpose.msra.mxu0 0.0
      %717 = vmatpush.xpose.msra.mxu0 0.0
      %718 = vmatpush.xpose.msra.mxu0 0.0
      %719 = vmatpush.xpose.msra.mxu0 0.0
      %720 = vmatpush.xpose.msra.mxu0 0.0
      %721 = vmatpush.xpose.msra.mxu0 0.0
      %722 = vmatpush.xpose.msra.mxu0 %v706
      %723 = vmatpush.xpose.msra.mxu0 %v703
      %724 = vmatmul.f32.gmra.mxu0 %v697
      %v725 = vpop.f32.mrf.mxu0
      %v726 = vadd.f32 0.0, %v725
      %727 = vmatmul.f32.gmra.mxu0 %v700
      %v728 = vpop.f32.mrf.mxu0
      %v729 = vadd.f32 0.0, %v728
      %730 = vdwg.mxu0
      %v731 = vmul.f32 %v726, 0.17677669
      %v732 = vmul.f32 %v729, 0.17677669
      %v734 = vperm.slane %v569, 0
      %v736 = vadd.f32 %v731, %v734
      %v737 = vadd.f32 %v732, %v734
      %vm738 = vcmask 97280
      %v739 = vsel %vm738, %v736, -inf
      %740 = vmax.xlane.f32.xlu0 %v739
      %v741 = vpop.xlane.xlu0 %740
      %vm742 = vcmask 93184
      %v743 = vsel %vm742, %v737, -inf
      %744 = vmax.xlane.f32.xlu0 %v743
      %v745 = vpop.xlane.xlu0 %744
      %v746 = vsub.f32 %v736, %v741
      %v747 = vsub.f32 %v737, %v745
      %v748 = vmul.f32 %v746, 1.442695
      %v749 = vpow.pop %v748
      %v750 = vmul.f32 %v747, 1.442695
      %v751 = vpow.pop %v750
      %v752 = vsel %vm738, %v749, 0.0
      %753 = vadd.xlane.f32.xlu0 %v752
      %v754 = vpop.xlane.xlu0 %753
      %v755 = vsel %vm742, %v751, 0.0
      %756 = vadd.xlane.f32.xlu0 %v755
      %v757 = vpop.xlane.xlu0 %756
      %v758 = vrcp.pop %v754
      %v759 = vrcp.pop %v757
      %v760 = vmul.f32 %v749, %v758
      %v761 = vmul.f32 %v751, %v759
      %v763 = vsel %vm738, %v760, 0
      %v766 = vsel %vm738, %v761, 0
      %vm768 = vcmask 1043456
      %v770 = vsel %vm768, %v693, 0
      %772 = vmatpush.msra.mxu0 0.0
      %773 = vmatpush.msra.mxu0 0.0
      %774 = vmatpush.msra.mxu0 0.0
      %775 = vmatpush.msra.mxu0 0.0
      %776 = vmatpush.msra.mxu0 0.0
      %777 = vmatpush.msra.mxu0 0.0
      %778 = vmatpush.msra.mxu0 0.0
      %779 = vmatpush.msra.mxu0 0.0
      %780 = vmatpush.msra.mxu0 0.0
      %781 = vmatpush.msra.mxu0 0.0
      %782 = vmatpush.msra.mxu0 0.0
      %783 = vmatpush.msra.mxu0 0.0
      %784 = vmatpush.msra.mxu0 0.0
      %785 = vmatpush.msra.mxu0 0.0
      %786 = vmatpush.msra.mxu0 %v770
      %787 = vmatpush.msra.mxu0 %v690
      %788 = vmatmul.f32.gmra.mxu0 %v763
      %v789 = vpop.f32.mrf.mxu0
      %v790 = vadd.f32 0.0, %v789
      %791 = vmatmul.f32.gmra.mxu0 %v766
      %v792 = vpop.f32.mrf.mxu0
      %v793 = vadd.f32 0.0, %v792
      %794 = vdwg.mxu0
      %795 = vrot.lane.b32.xlu0 %v644, 96
      %v796 = vpop.permute.xlu0 %795
      %797 = vrot.lane.b32.xlu0 %v647, 96
      %v798 = vpop.permute.xlu0 %797
      %799 = vrot.lane.b32.xlu0 %v667, 96
      %v800 = vpop.permute.xlu0 %799
      %801 = vrot.lane.b32.xlu0 %v670, 96
      %v802 = vpop.permute.xlu0 %801
      %v803 = vsel %vm695, %v796, 0
      %v805 = vsel %vm695, %v798, 0
      %v807 = vsel %vm695, %v800, 0
      %v809 = vsel %vm695, %v802, 0
      %811 = vmatpush.xpose.msra.mxu0 0.0
      %812 = vmatpush.xpose.msra.mxu0 0.0
      %813 = vmatpush.xpose.msra.mxu0 0.0
      %814 = vmatpush.xpose.msra.mxu0 0.0
      %815 = vmatpush.xpose.msra.mxu0 0.0
      %816 = vmatpush.xpose.msra.mxu0 0.0
      %817 = vmatpush.xpose.msra.mxu0 0.0
      %818 = vmatpush.xpose.msra.mxu0 0.0
      %819 = vmatpush.xpose.msra.mxu0 0.0
      %820 = vmatpush.xpose.msra.mxu0 0.0
      %821 = vmatpush.xpose.msra.mxu0 0.0
      %822 = vmatpush.xpose.msra.mxu0 0.0
      %823 = vmatpush.xpose.msra.mxu0 0.0
      %824 = vmatpush.xpose.msra.mxu0 0.0
      %825 = vmatpush.xpose.msra.mxu0 %v809
      %826 = vmatpush.xpose.msra.mxu0 %v807
      %827 = vmatmul.f32.gmra.mxu0 %v803
      %v828 = vpop.f32.mrf.mxu0
      %v829 = vadd.f32 0.0, %v828
      %830 = vmatmul.f32.gmra.mxu0 %v805
      %v831 = vpop.f32.mrf.mxu0
      %v832 = vadd.f32 0.0, %v831
      %833 = vdwg.mxu0
      %v834 = vmul.f32 %v829, 0.17677669
      %v835 = vmul.f32 %v832, 0.17677669
      %v836 = vadd.f32 %v834, %v734
      %v837 = vadd.f32 %v835, %v734
      %v838 = vsel %vm738, %v836, -inf
      %839 = vmax.xlane.f32.xlu0 %v838
      %v840 = vpop.xlane.xlu0 %839
      %v841 = vsel %vm742, %v837, -inf
      %842 = vmax.xlane.f32.xlu0 %v841
      %v843 = vpop.xlane.xlu0 %842
      %v844 = vsub.f32 %v836, %v840
      %v845 = vsub.f32 %v837, %v843
      %v846 = vmul.f32 %v844, 1.442695
      %v847 = vpow.pop %v846
      %v848 = vmul.f32 %v845, 1.442695
      %v849 = vpow.pop %v848
      %v850 = vsel %vm738, %v847, 0.0
      %851 = vadd.xlane.f32.xlu0 %v850
      %v852 = vpop.xlane.xlu0 %851
      %v853 = vsel %vm742, %v849, 0.0
      %854 = vadd.xlane.f32.xlu0 %v853
      %v855 = vpop.xlane.xlu0 %854
      %v856 = vrcp.pop %v852
      %v857 = vrcp.pop %v855
      %v858 = vmul.f32 %v847, %v856
      %v859 = vmul.f32 %v849, %v857
      %861 = vrot.lane.b32.xlu0 %v690, 96
      %v862 = vpop.permute.xlu0 %861
      %863 = vrot.lane.b32.xlu0 %v693, 96
      %v864 = vpop.permute.xlu0 %863
      %v867 = vsel %vm738, %v858, 0
      %v870 = vsel %vm738, %v859, 0
      %v872 = vsel %vm768, %v864, 0
      %874 = vmatpush.msra.mxu0 0.0
      %875 = vmatpush.msra.mxu0 0.0
      %876 = vmatpush.msra.mxu0 0.0
      %877 = vmatpush.msra.mxu0 0.0
      %878 = vmatpush.msra.mxu0 0.0
      %879 = vmatpush.msra.mxu0 0.0
      %880 = vmatpush.msra.mxu0 0.0
      %881 = vmatpush.msra.mxu0 0.0
      %882 = vmatpush.msra.mxu0 0.0
      %883 = vmatpush.msra.mxu0 0.0
      %884 = vmatpush.msra.mxu0 0.0
      %885 = vmatpush.msra.mxu0 0.0
      %886 = vmatpush.msra.mxu0 0.0
      %887 = vmatpush.msra.mxu0 0.0
      %888 = vmatpush.msra.mxu0 %v872
      %889 = vmatpush.msra.mxu0 %v862
      %890 = vmatmul.f32.gmra.mxu0 %v867
      %v891 = vpop.f32.mrf.mxu0
      %v892 = vadd.f32 0.0, %v891
      %893 = vmatmul.f32.gmra.mxu0 %v870
      %v894 = vpop.f32.mrf.mxu0
      %v895 = vadd.f32 0.0, %v894
      %896 = vdwg.mxu0
      %897 = vrot.lane.b32.xlu0 %v644, 64
      %v898 = vpop.permute.xlu0 %897
      %899 = vrot.lane.b32.xlu0 %v647, 64
      %v900 = vpop.permute.xlu0 %899
      %901 = vrot.lane.b32.xlu0 %v667, 64
      %v902 = vpop.permute.xlu0 %901
      %903 = vrot.lane.b32.xlu0 %v670, 64
      %v904 = vpop.permute.xlu0 %903
      %v905 = vsel %vm695, %v898, 0
      %v907 = vsel %vm695, %v900, 0
      %v909 = vsel %vm695, %v902, 0
      %v911 = vsel %vm695, %v904, 0
      %913 = vmatpush.xpose.msra.mxu0 0.0
      %914 = vmatpush.xpose.msra.mxu0 0.0
      %915 = vmatpush.xpose.msra.mxu0 0.0
      %916 = vmatpush.xpose.msra.mxu0 0.0
      %917 = vmatpush.xpose.msra.mxu0 0.0
      %918 = vmatpush.xpose.msra.mxu0 0.0
      %919 = vmatpush.xpose.msra.mxu0 0.0
      %920 = vmatpush.xpose.msra.mxu0 0.0
      %921 = vmatpush.xpose.msra.mxu0 0.0
      %922 = vmatpush.xpose.msra.mxu0 0.0
      %923 = vmatpush.xpose.msra.mxu0 0.0
      %924 = vmatpush.xpose.msra.mxu0 0.0
      %925 = vmatpush.xpose.msra.mxu0 0.0
      %926 = vmatpush.xpose.msra.mxu0 0.0
      %927 = vmatpush.xpose.msra.mxu0 %v911
      %928 = vmatpush.xpose.msra.mxu0 %v909
      %929 = vmatmul.f32.gmra.mxu0 %v905
      %v930 = vpop.f32.mrf.mxu0
      %v931 = vadd.f32 0.0, %v930
      %932 = vmatmul.f32.gmra.mxu0 %v907
      %v933 = vpop.f32.mrf.mxu0
      %v934 = vadd.f32 0.0, %v933
      %935 = vdwg.mxu0
      %v936 = vmul.f32 %v931, 0.17677669
      %v937 = vmul.f32 %v934, 0.17677669
      %v938 = vadd.f32 %v936, %v734
      %v939 = vadd.f32 %v937, %v734
      %v940 = vsel %vm738, %v938, -inf
      %941 = vmax.xlane.f32.xlu0 %v940
      %v942 = vpop.xlane.xlu0 %941
      %v943 = vsel %vm742, %v939, -inf
      %944 = vmax.xlane.f32.xlu0 %v943
      %v945 = vpop.xlane.xlu0 %944
      %v946 = vsub.f32 %v938, %v942
      %v947 = vsub.f32 %v939, %v945
      %v948 = vmul.f32 %v946, 1.442695
      %v949 = vpow.pop %v948
      %v950 = vmul.f32 %v947, 1.442695
      %v951 = vpow.pop %v950
      %v952 = vsel %vm738, %v949, 0.0
      %953 = vadd.xlane.f32.xlu0 %v952
      %v954 = vpop.xlane.xlu0 %953
      %v955 = vsel %vm742, %v951, 0.0
      %956 = vadd.xlane.f32.xlu0 %v955
      %v957 = vpop.xlane.xlu0 %956
      %v958 = vrcp.pop %v954
      %v959 = vrcp.pop %v957
      %v960 = vmul.f32 %v949, %v958
      %v961 = vmul.f32 %v951, %v959
      %962 = vrot.lane.b32.xlu0 %v690, 64
      %v963 = vpop.permute.xlu0 %962
      %964 = vrot.lane.b32.xlu0 %v693, 64
      %v965 = vpop.permute.xlu0 %964
      %v968 = vsel %vm738, %v960, 0
      %v971 = vsel %vm738, %v961, 0
      %v973 = vsel %vm768, %v965, 0
      %975 = vmatpush.msra.mxu0 0.0
      %976 = vmatpush.msra.mxu0 0.0
      %977 = vmatpush.msra.mxu0 0.0
      %978 = vmatpush.msra.mxu0 0.0
      %979 = vmatpush.msra.mxu0 0.0
      %980 = vmatpush.msra.mxu0 0.0
      %981 = vmatpush.msra.mxu0 0.0
      %982 = vmatpush.msra.mxu0 0.0
      %983 = vmatpush.msra.mxu0 0.0
      %984 = vmatpush.msra.mxu0 0.0
      %985 = vmatpush.msra.mxu0 0.0
      %986 = vmatpush.msra.mxu0 0.0
      %987 = vmatpush.msra.mxu0 0.0
      %988 = vmatpush.msra.mxu0 0.0
      %989 = vmatpush.msra.mxu0 %v973
      %990 = vmatpush.msra.mxu0 %v963
      %991 = vmatmul.f32.gmra.mxu0 %v968
      %v992 = vpop.f32.mrf.mxu0
      %v993 = vadd.f32 0.0, %v992
      %994 = vmatmul.f32.gmra.mxu0 %v971
      %v995 = vpop.f32.mrf.mxu0
      %v996 = vadd.f32 0.0, %v995
      %997 = vdwg.mxu0
      %998 = vrot.lane.b32.xlu0 %v644, 32
      %v999 = vpop.permute.xlu0 %998
      %1000 = vrot.lane.b32.xlu0 %v647, 32
      %v1001 = vpop.permute.xlu0 %1000
      %1002 = vrot.lane.b32.xlu0 %v667, 32
      %v1003 = vpop.permute.xlu0 %1002
      %1004 = vrot.lane.b32.xlu0 %v670, 32
      %v1005 = vpop.permute.xlu0 %1004
      %v1006 = vsel %vm695, %v999, 0
      %v1008 = vsel %vm695, %v1001, 0
      %v1010 = vsel %vm695, %v1003, 0
      %v1012 = vsel %vm695, %v1005, 0
      %1014 = vmatpush.xpose.msra.mxu0 0.0
      %1015 = vmatpush.xpose.msra.mxu0 0.0
      %1016 = vmatpush.xpose.msra.mxu0 0.0
      %1017 = vmatpush.xpose.msra.mxu0 0.0
      %1018 = vmatpush.xpose.msra.mxu0 0.0
      %1019 = vmatpush.xpose.msra.mxu0 0.0
      %1020 = vmatpush.xpose.msra.mxu0 0.0
      %1021 = vmatpush.xpose.msra.mxu0 0.0
      %1022 = vmatpush.xpose.msra.mxu0 0.0
      %1023 = vmatpush.xpose.msra.mxu0 0.0
      %1024 = vmatpush.xpose.msra.mxu0 0.0
      %1025 = vmatpush.xpose.msra.mxu0 0.0
      %1026 = vmatpush.xpose.msra.mxu0 0.0
      %1027 = vmatpush.xpose.msra.mxu0 0.0
      %1028 = vmatpush.xpose.msra.mxu0 %v1012
      %1029 = vmatpush.xpose.msra.mxu0 %v1010
      %1030 = vmatmul.f32.gmra.mxu0 %v1006
      %v1031 = vpop.f32.mrf.mxu0
      %v1032 = vadd.f32 0.0, %v1031
      %1033 = vmatmul.f32.gmra.mxu0 %v1008
      %v1034 = vpop.f32.mrf.mxu0
      %v1035 = vadd.f32 0.0, %v1034
      %1036 = vdwg.mxu0
      %v1037 = vmul.f32 %v1032, 0.17677669
      %v1038 = vmul.f32 %v1035, 0.17677669
      %v1039 = vadd.f32 %v1037, %v734
      %v1040 = vadd.f32 %v1038, %v734
      %v1041 = vsel %vm738, %v1039, -inf
      %1042 = vmax.xlane.f32.xlu0 %v1041
      %v1043 = vpop.xlane.xlu0 %1042
      %v1044 = vsel %vm742, %v1040, -inf
      %1045 = vmax.xlane.f32.xlu0 %v1044
      %v1046 = vpop.xlane.xlu0 %1045
      %v1047 = vsub.f32 %v1039, %v1043
      %v1048 = vsub.f32 %v1040, %v1046
      %v1049 = vmul.f32 %v1047, 1.442695
      %v1050 = vpow.pop %v1049
      %v1051 = vmul.f32 %v1048, 1.442695
      %v1052 = vpow.pop %v1051
      %v1053 = vsel %vm738, %v1050, 0.0
      %1054 = vadd.xlane.f32.xlu0 %v1053
      %v1055 = vpop.xlane.xlu0 %1054
      %v1056 = vsel %vm742, %v1052, 0.0
      %1057 = vadd.xlane.f32.xlu0 %v1056
      %v1058 = vpop.xlane.xlu0 %1057
      %v1059 = vrcp.pop %v1055
      %v1060 = vrcp.pop %v1058
      %v1061 = vmul.f32 %v1050, %v1059
      %v1062 = vmul.f32 %v1052, %v1060
      %1063 = vrot.lane.b32.xlu0 %v690, 32
      %v1064 = vpop.permute.xlu0 %1063
      %1065 = vrot.lane.b32.xlu0 %v693, 32
      %v1066 = vpop.permute.xlu0 %1065
      %v1069 = vsel %vm738, %v1061, 0
      %v1072 = vsel %vm738, %v1062, 0
      %v1074 = vsel %vm768, %v1066, 0
      %1076 = vmatpush.msra.mxu0 0.0
      %1077 = vmatpush.msra.mxu0 0.0
      %1078 = vmatpush.msra.mxu0 0.0
      %1079 = vmatpush.msra.mxu0 0.0
      %1080 = vmatpush.msra.mxu0 0.0
      %1081 = vmatpush.msra.mxu0 0.0
      %1082 = vmatpush.msra.mxu0 0.0
      %1083 = vmatpush.msra.mxu0 0.0
      %1084 = vmatpush.msra.mxu0 0.0
      %1085 = vmatpush.msra.mxu0 0.0
      %1086 = vmatpush.msra.mxu0 0.0
      %1087 = vmatpush.msra.mxu0 0.0
      %1088 = vmatpush.msra.mxu0 0.0
      %1089 = vmatpush.msra.mxu0 0.0
      %1090 = vmatpush.msra.mxu0 %v1074
      %1091 = vmatpush.msra.mxu0 %v1064
      %1092 = vmatmul.f32.gmra.mxu0 %v1069
      %v1093 = vpop.f32.mrf.mxu0
      %v1094 = vadd.f32 0.0, %v1093
      %1095 = vmatmul.f32.gmra.mxu0 %v1072
      %v1096 = vpop.f32.mrf.mxu0
      %v1097 = vadd.f32 0.0, %v1096
      %1098 = vdwg.mxu0
      %1101 = vrot.lane.b32.xlu0 %v892, 32
      %v1102 = vpop.permute.xlu0 %1101
      %1103 = vrot.lane.b32.xlu0 %v895, 32
      %v1104 = vpop.permute.xlu0 %1103
      %1109 = vrot.lane.b32.xlu0 %v993, 64
      %v1110 = vpop.permute.xlu0 %1109
      %1111 = vrot.lane.b32.xlu0 %v996, 64
      %v1112 = vpop.permute.xlu0 %1111
      %1117 = vrot.lane.b32.xlu0 %v1094, 96
      %v1118 = vpop.permute.xlu0 %1117
      %1119 = vrot.lane.b32.xlu0 %v1097, 96
      %v1120 = vpop.permute.xlu0 %1119
      %v1123 = vsel %vm695, %v790, %v1102
      %v1124 = vsel %vm695, %v793, %v1104
      %vm1125 = vcmask 523264
      %v1126 = vsel %vm1125, %v1123, %v1110
      %v1127 = vsel %vm1125, %v1124, %v1112
      %vm1128 = vcmask 785408
      %v1129 = vsel %vm1128, %v1126, %v1118
      %v1130 = vsel %vm1128, %v1127, %v1120
      %v1131 = vld [vmem:[%s5] sm:$0xff]
      %v1132 = vld [vmem:[%s5 + $0x8] sm:$0xff]
      %v1133 = vld [vmem:[%s5 + $0x10] sm:$0xff]
      %v1134 = vld [vmem:[%s5 + $0x18] sm:$0xff]
      %v1135 = vld [vmem:[%s5 + $0x20] sm:$0xff]
      %v1136 = vld [vmem:[%s5 + $0x28] sm:$0xff]
      %v1137 = vld [vmem:[%s5 + $0x30] sm:$0xff]
      %v1138 = vld [vmem:[%s5 + $0x38] sm:$0xff]
      %v1139 = vld [vmem:[%s5 + $0x40] sm:$0xff]
      %v1140 = vld [vmem:[%s5 + $0x48] sm:$0xff]
      %v1141 = vld [vmem:[%s5 + $0x50] sm:$0xff]
      %v1142 = vld [vmem:[%s5 + $0x58] sm:$0xff]
      %v1143 = vld [vmem:[%s5 + $0x60] sm:$0xff]
      %v1144 = vld [vmem:[%s5 + $0x68] sm:$0xff]
      %v1145 = vld [vmem:[%s5 + $0x70] sm:$0xff]
      %v1146 = vld [vmem:[%s5 + $0x78] sm:$0xff]
      %v1147 = vld [vmem:[%s6] sm:$0x1]
      %v1149 = vperm.slane %v1147, 0
      %1151 = vmatpush.msra.mxu0 %v1146
      %1152 = vmatpush.msra.mxu0 %v1145
      %1153 = vmatpush.msra.mxu0 %v1144
      %1154 = vmatpush.msra.mxu0 %v1143
      %1155 = vmatpush.msra.mxu0 %v1142
      %1156 = vmatpush.msra.mxu0 %v1141
      %1157 = vmatpush.msra.mxu0 %v1140
      %1158 = vmatpush.msra.mxu0 %v1139
      %1159 = vmatpush.msra.mxu0 %v1138
      %1160 = vmatpush.msra.mxu0 %v1137
      %1161 = vmatpush.msra.mxu0 %v1136
      %1162 = vmatpush.msra.mxu0 %v1135
      %1163 = vmatpush.msra.mxu0 %v1134
      %1164 = vmatpush.msra.mxu0 %v1133
      %1165 = vmatpush.msra.mxu0 %v1132
      %1166 = vmatpush.msra.mxu0 %v1131
      %1167 = vmatmul.f32.gmra.mxu0 %v1129
      %v1168 = vpop.f32.mrf.mxu0
      %v1169 = vadd.f32 %v1149, %v1168
      %1170 = vmatmul.f32.gmra.mxu0 %v1130
      %v1171 = vpop.f32.mrf.mxu0
      %v1172 = vadd.f32 %v1149, %v1171
      %1173 = vdwg.mxu0
      %v1174 = vadd.f32 %v567, %v1169
      %v1175 = vadd.f32 %v568, %v1172
      %v1176 = vld [vmem:[%s7] sm:$0x1]
      %v1177 = vld [vmem:[%s8] sm:$0x1]
      %1178 = vadd.xlane.f32.xlu0 %v1174
      %v1179 = vpop.xlane.xlu0 %1178
      %v1180 = vsel %vm768, %v1175, 0.0
      %1181 = vadd.xlane.f32.xlu0 %v1180
      %v1182 = vpop.xlane.xlu0 %1181
      %v1183 = vrcp.pop 128.0
      %v1184 = vmul.f32 128.0, %v1183
      %v1185 = vsub.f32 1.0, %v1184
      %v1186 = vmul.f32 %v1183, %v1185
      %v1187 = vadd.f32 %v1183, %v1186
      %vm1188 = vweird.f32 %v1183
      %v1189 = vsel %vm1188, %v1183, %v1187
      %v1190 = vmul.f32 %v1179, %v1189
      %v1191 = vmul.f32 %v1182, %v1189
      %v1192 = vsub.f32 %v1174, %v1190
      %v1193 = vsub.f32 %v1175, %v1191
      %v1194 = vmul.f32 %v1192, %v1192
      %v1195 = vmul.f32 %v1193, %v1193
      %1196 = vadd.xlane.f32.xlu0 %v1194
      %v1197 = vpop.xlane.xlu0 %1196
      %v1198 = vsel %vm768, %v1195, 0.0
      %1199 = vadd.xlane.f32.xlu0 %v1198
      %v1200 = vpop.xlane.xlu0 %1199
      %v1201 = vmul.f32 %v1197, %v1189
      %v1202 = vmul.f32 %v1200, %v1189
      %v1203 = vadd.f32 %v1201, 1e-05
      %v1204 = vadd.f32 %v1202, 1e-05
      %v1205 = vrsqrt.pop %v1203
      %v1206 = vmul.f32 %v1205, %v1203
      %v1207 = vmul.f32 %v1206, %v1205
      %v1208 = vmul.f32 0.5, %v1207
      %v1209 = vsub.f32 1.5, %v1208
      %v1210 = vmul.f32 %v1205, %v1209
      %vm1211 = vweird.f32 %v1203
      %vm1212 = vweird.f32 %v1205
      %vm1213 = vmor %vm1211, %vm1212
      %v1214 = vsel %vm1213, %v1205, %v1210
      %v1215 = vrsqrt.pop %v1204
      %v1216 = vmul.f32 %v1215, %v1204
      %v1217 = vmul.f32 %v1216, %v1215
      %v1218 = vmul.f32 0.5, %v1217
      %v1219 = vsub.f32 1.5, %v1218
      %v1220 = vmul.f32 %v1215, %v1219
      %vm1221 = vweird.f32 %v1204
      %vm1222 = vweird.f32 %v1215
      %vm1223 = vmor %vm1221, %vm1222
      %v1224 = vsel %vm1223, %v1215, %v1220
      %v1225 = vmul.f32 %v1192, %v1214
      %v1226 = vmul.f32 %v1193, %v1224
      %v1228 = vperm.slane %v1176, 0
      %v1230 = vmul.f32 %v1225, %v1228
      %v1231 = vmul.f32 %v1226, %v1228
      %v1233 = vperm.slane %v1177, 0
      %v1235 = vadd.f32 %v1230, %v1233
      %v1236 = vadd.f32 %v1231, %v1233
      %v1237 = vld [vmem:[%s9] sm:$0xff]
      %v1238 = vld [vmem:[%s9 + $0x8] sm:$0xff]
      %v1239 = vld [vmem:[%s9 + $0x10] sm:$0xff]
      %v1240 = vld [vmem:[%s9 + $0x18] sm:$0xff]
      %v1241 = vld [vmem:[%s9 + $0x20] sm:$0xff]
      %v1242 = vld [vmem:[%s9 + $0x28] sm:$0xff]
      %v1243 = vld [vmem:[%s9 + $0x30] sm:$0xff]
      %v1244 = vld [vmem:[%s9 + $0x38] sm:$0xff]
      %v1245 = vld [vmem:[%s9 + $0x40] sm:$0xff]
      %v1246 = vld [vmem:[%s9 + $0x48] sm:$0xff]
      %v1247 = vld [vmem:[%s9 + $0x50] sm:$0xff]
      %v1248 = vld [vmem:[%s9 + $0x58] sm:$0xff]
      %v1249 = vld [vmem:[%s9 + $0x60] sm:$0xff]
      %v1250 = vld [vmem:[%s9 + $0x68] sm:$0xff]
      %v1251 = vld [vmem:[%s9 + $0x70] sm:$0xff]
      %v1252 = vld [vmem:[%s9 + $0x78] sm:$0xff]
      %v1253 = vld [vmem:[%s10] sm:$0x1]
      %v1255 = vperm.slane %v1253, 0
      %1257 = vmatpush.msra.mxu0 %v1252
      %1258 = vmatpush.msra.mxu0 %v1251
      %1259 = vmatpush.msra.mxu0 %v1250
      %1260 = vmatpush.msra.mxu0 %v1249
      %1261 = vmatpush.msra.mxu0 %v1248
      %1262 = vmatpush.msra.mxu0 %v1247
      %1263 = vmatpush.msra.mxu0 %v1246
      %1264 = vmatpush.msra.mxu0 %v1245
      %1265 = vmatpush.msra.mxu0 %v1244
      %1266 = vmatpush.msra.mxu0 %v1243
      %1267 = vmatpush.msra.mxu0 %v1242
      %1268 = vmatpush.msra.mxu0 %v1241
      %1269 = vmatpush.msra.mxu0 %v1240
      %1270 = vmatpush.msra.mxu0 %v1239
      %1271 = vmatpush.msra.mxu0 %v1238
      %1272 = vmatpush.msra.mxu0 %v1237
      %1273 = vmatmul.f32.gmra.mxu0 %v1235
      %v1274 = vpop.f32.mrf.mxu0
      %v1275 = vadd.f32 %v1255, %v1274
      %1276 = vmatmul.f32.gmra.mxu0 %v1236
      %v1277 = vpop.f32.mrf.mxu0
      %v1278 = vadd.f32 %v1255, %v1277
      %1279 = vdwg.mxu0
      %v1280 = vmax.f32 %v1275, 0.0
      %v1281 = vmax.f32 %v1278, 0.0
      %v1282 = vld [vmem:[%s11] sm:$0xff]
      %v1283 = vld [vmem:[%s11 + $0x8] sm:$0xff]
      %v1284 = vld [vmem:[%s11 + $0x10] sm:$0xff]
      %v1285 = vld [vmem:[%s11 + $0x18] sm:$0xff]
      %v1286 = vld [vmem:[%s11 + $0x20] sm:$0xff]
      %v1287 = vld [vmem:[%s11 + $0x28] sm:$0xff]
      %v1288 = vld [vmem:[%s11 + $0x30] sm:$0xff]
      %v1289 = vld [vmem:[%s11 + $0x38] sm:$0xff]
      %v1290 = vld [vmem:[%s11 + $0x40] sm:$0xff]
      %v1291 = vld [vmem:[%s11 + $0x48] sm:$0xff]
      %v1292 = vld [vmem:[%s11 + $0x50] sm:$0xff]
      %v1293 = vld [vmem:[%s11 + $0x58] sm:$0xff]
      %v1294 = vld [vmem:[%s11 + $0x60] sm:$0xff]
      %v1295 = vld [vmem:[%s11 + $0x68] sm:$0xff]
      %v1296 = vld [vmem:[%s11 + $0x70] sm:$0xff]
      %v1297 = vld [vmem:[%s11 + $0x78] sm:$0xff]
      %v1298 = vld [vmem:[%s12] sm:$0x1]
      %v1300 = vperm.slane %v1298, 0
      %1302 = vmatpush.msra.mxu0 %v1297
      %1303 = vmatpush.msra.mxu0 %v1296
      %1304 = vmatpush.msra.mxu0 %v1295
      %1305 = vmatpush.msra.mxu0 %v1294
      %1306 = vmatpush.msra.mxu0 %v1293
      %1307 = vmatpush.msra.mxu0 %v1292
      %1308 = vmatpush.msra.mxu0 %v1291
      %1309 = vmatpush.msra.mxu0 %v1290
      %1310 = vmatpush.msra.mxu0 %v1289
      %1311 = vmatpush.msra.mxu0 %v1288
      %1312 = vmatpush.msra.mxu0 %v1287
      %1313 = vmatpush.msra.mxu0 %v1286
      %1314 = vmatpush.msra.mxu0 %v1285
      %1315 = vmatpush.msra.mxu0 %v1284
      %1316 = vmatpush.msra.mxu0 %v1283
      %1317 = vmatpush.msra.mxu0 %v1282
      %1318 = vmatmul.f32.gmra.mxu0 %v1280
      %v1319 = vpop.f32.mrf.mxu0
      %v1320 = vadd.f32 %v1300, %v1319
      %1321 = vmatmul.f32.gmra.mxu0 %v1281
      %v1322 = vpop.f32.mrf.mxu0
      %v1323 = vadd.f32 %v1300, %v1322
      %1324 = vdwg.mxu0
      %v1325 = vadd.f32 %v1235, %v1320
      %v1326 = vadd.f32 %v1236, %v1323
      %v1327 = vld [vmem:[%s13] sm:$0x1]
      %v1328 = vld [vmem:[%s14] sm:$0x1]
      %1329 = vadd.xlane.f32.xlu0 %v1325
      %v1330 = vpop.xlane.xlu0 %1329
      %v1331 = vsel %vm768, %v1326, 0.0
      %1332 = vadd.xlane.f32.xlu0 %v1331
      %v1333 = vpop.xlane.xlu0 %1332
      %v1334 = vmul.f32 %v1330, %v1189
      %v1335 = vmul.f32 %v1333, %v1189
      %v1336 = vsub.f32 %v1325, %v1334
      %v1337 = vsub.f32 %v1326, %v1335
      %v1338 = vmul.f32 %v1336, %v1336
      %v1339 = vmul.f32 %v1337, %v1337
      %1340 = vadd.xlane.f32.xlu0 %v1338
      %v1341 = vpop.xlane.xlu0 %1340
      %v1342 = vsel %vm768, %v1339, 0.0
      %1343 = vadd.xlane.f32.xlu0 %v1342
      %v1344 = vpop.xlane.xlu0 %1343
      %v1345 = vmul.f32 %v1341, %v1189
      %v1346 = vmul.f32 %v1344, %v1189
      %v1347 = vadd.f32 %v1345, 1e-05
      %v1348 = vadd.f32 %v1346, 1e-05
      %v1349 = vrsqrt.pop %v1347
      %v1350 = vmul.f32 %v1349, %v1347
      %v1351 = vmul.f32 %v1350, %v1349
      %v1352 = vmul.f32 0.5, %v1351
      %v1353 = vsub.f32 1.5, %v1352
      %v1354 = vmul.f32 %v1349, %v1353
      %vm1355 = vweird.f32 %v1347
      %vm1356 = vweird.f32 %v1349
      %vm1357 = vmor %vm1355, %vm1356
      %v1358 = vsel %vm1357, %v1349, %v1354
      %v1359 = vrsqrt.pop %v1348
      %v1360 = vmul.f32 %v1359, %v1348
      %v1361 = vmul.f32 %v1360, %v1359
      %v1362 = vmul.f32 0.5, %v1361
      %v1363 = vsub.f32 1.5, %v1362
      %v1364 = vmul.f32 %v1359, %v1363
      %vm1365 = vweird.f32 %v1348
      %vm1366 = vweird.f32 %v1359
      %vm1367 = vmor %vm1365, %vm1366
      %v1368 = vsel %vm1367, %v1359, %v1364
      %v1369 = vmul.f32 %v1336, %v1358
      %v1370 = vmul.f32 %v1337, %v1368
      %v1372 = vperm.slane %v1327, 0
      %v1374 = vmul.f32 %v1369, %v1372
      %v1375 = vmul.f32 %v1370, %v1372
      %v1377 = vperm.slane %v1328, 0
      %v1379 = vadd.f32 %v1374, %v1377
      %v1380 = vadd.f32 %v1375, %v1377
      %v1381 = vld [vmem:[%s15] sm:$0x1]
      %v1382 = vld [vmem:[%s16] sm:$0x1]
      %1383 = vadd.xlane.f32.xlu0 %v1379
      %v1384 = vpop.xlane.xlu0 %1383
      %v1385 = vsel %vm768, %v1380, 0.0
      %1386 = vadd.xlane.f32.xlu0 %v1385
      %v1387 = vpop.xlane.xlu0 %1386
      %v1388 = vmul.f32 %v1384, %v1189
      %v1389 = vmul.f32 %v1387, %v1189
      %v1390 = vsub.f32 %v1379, %v1388
      %v1391 = vsub.f32 %v1380, %v1389
      %v1392 = vmul.f32 %v1390, %v1390
      %v1393 = vmul.f32 %v1391, %v1391
      %1394 = vadd.xlane.f32.xlu0 %v1392
      %v1395 = vpop.xlane.xlu0 %1394
      %v1396 = vsel %vm768, %v1393, 0.0
      %1397 = vadd.xlane.f32.xlu0 %v1396
      %v1398 = vpop.xlane.xlu0 %1397
      %v1399 = vmul.f32 %v1395, %v1189
      %v1400 = vmul.f32 %v1398, %v1189
      %v1401 = vadd.f32 %v1399, 1e-05
      %v1402 = vadd.f32 %v1400, 1e-05
      %v1403 = vrsqrt.pop %v1401
      %v1404 = vmul.f32 %v1403, %v1401
      %v1405 = vmul.f32 %v1404, %v1403
      %v1406 = vmul.f32 0.5, %v1405
      %v1407 = vsub.f32 1.5, %v1406
      %v1408 = vmul.f32 %v1403, %v1407
      %vm1409 = vweird.f32 %v1401
      %vm1410 = vweird.f32 %v1403
      %vm1411 = vmor %vm1409, %vm1410
      %v1412 = vsel %vm1411, %v1403, %v1408
      %v1413 = vrsqrt.pop %v1402
      %v1414 = vmul.f32 %v1413, %v1402
      %v1415 = vmul.f32 %v1414, %v1413
      %v1416 = vmul.f32 0.5, %v1415
      %v1417 = vsub.f32 1.5, %v1416
      %v1418 = vmul.f32 %v1413, %v1417
      %vm1419 = vweird.f32 %v1402
      %vm1420 = vweird.f32 %v1413
      %vm1421 = vmor %vm1419, %vm1420
      %v1422 = vsel %vm1421, %v1413, %v1418
      %v1423 = vmul.f32 %v1390, %v1412
      %v1424 = vmul.f32 %v1391, %v1422
      %v1426 = vperm.slane %v1381, 0
      %v1428 = vmul.f32 %v1423, %v1426
      %v1429 = vmul.f32 %v1424, %v1426
      %v1431 = vperm.slane %v1382, 0
      %v1433 = vadd.f32 %v1428, %v1431
      %v1434 = vadd.f32 %v1429, %v1431
      %1435 = vst [vmem:[%s562] sm:$0xff] %v1433
      %1436 = vst [vmem:[%s562 + $0x8] sm:$0xf] %v1434
      %p1437 = scmp.lt.s32.totalorder %s28, 1
      %s1438 = scalar_select %p1437, %s28, 1
      %s1439 = smul.addr %s1438, 2
      %s1440 = smul.addr %s1439, 8
      %s1441 = scalar_lea.vmem %s17, %s1440
      // Predicated region
      $region89: #{cvt5_forward.8} parent=87 // pred_check
        %p1442 = pneg %p413
      $region90: #{cvt5_forward.8} parent=87 // pred_check_branch
        %1444 = sbr.rel (%p1442) target = $region92
      $region91: #{cvt5_forward.8} parent=87 // pred_region
        _
      $region92: #{cvt5_forward.8} parent=87 // pred_fallthru
        _
    $region88: #{cvt5_forward.8} parent=5 // pred_fallthru
      _
    %p1445 = scmp.le.s32.totalorder 2, %s23
    // Predicated region
    $region93: #{cvt5_forward.8} parent=5 // pred_check
      %p1446 = pneg %p1445
    $region94: #{cvt5_forward.8} parent=5 // pred_check_branch
      %1448 = sbr.rel (%p1446) target = $region96
    $region95: #{cvt5_forward.8} parent=5 // pred_region
      %s1449 = ssub.s32 %s23, 2
      // Predicated region
      $region97: #{cvt5_forward.8} parent=95 // pred_check
        %p1450 = pneg %p419
      $region98: #{cvt5_forward.8} parent=95 // pred_check_branch
        %1452 = sbr.rel (%p1450) target = $region100
      $region99: #{cvt5_forward.8} parent=95 // pred_region
        %p1453 = scmp.lt.s32.totalorder %s29, 1
        %s1454 = scalar_select %p1453, %s29, 1
        %s1455 = smul.addr %s1454, 2
        %s1456 = smul.addr %s1455, 8
        %s1457 = scalar_lea.vmem %s17, %s1456
      $region100: #{cvt5_forward.8} parent=95 // pred_fallthru
        _
    $region96: #{cvt5_forward.8} parent=5 // pred_fallthru
      _
  $region6: #{cvt5_forward.8} parent=0 // loop_footer
    %s27 = sadd.s32 1, %s23
  $region7: #{cvt5_forward.8} parent=0 // loop_footer_branch
    %22 = sbr.rel target = $region3
  $region8: #{cvt5_forward.8} parent=0 // loop_exit
    _

// kernel: cvt5_forward.7
$region0: #{cvt5_forward.7}
  #allocation0 [shape = 'u32[]', space=smem, size = 0x4, offset = 0x4, fixed_abs, tag = 'smem constant byte address 0x4 - core index']
  #allocation1 [shape = 'u32[72,128]{1,0:T(1,128)}', space=vmem, size = 0x9000, scoped, tag = 'internal scratch']
  %s0 = inlined_call_operand.vmem [shape: f32[6,4,128], index: 0, kind: input, shape index: {}]
  %s1 = inlined_call_operand.vmem [shape: f32[6,1,4], index: 1, kind: input, shape index: {}]
  %s2 = inlined_call_operand.vmem [shape: f32[4,128], index: 2, kind: input, shape index: {}]
  %s3 = inlined_call_operand.vmem [shape: f32[128,384], index: 3, kind: input, shape index: {}]
  %s4 = inlined_call_operand.vmem [shape: f32[1,384], index: 4, kind: input, shape index: {}]
  %s5 = inlined_call_operand.vmem [shape: f32[128,128], index: 5, kind: input, shape index: {}]
  %s6 = inlined_call_operand.vmem [shape: f32[1,128], index: 6, kind: input, shape index: {}]
  %s7 = inlined_call_operand.vmem [shape: f32[1,128], index: 7, kind: input, shape index: {}]
  %s8 = inlined_call_operand.vmem [shape: f32[1,128], index: 8, kind: input, shape index: {}]
  %s9 = inlined_call_operand.vmem [shape: f32[128,128], index: 9, kind: input, shape index: {}]
  %s10 = inlined_call_operand.vmem [shape: f32[1,128], index: 10, kind: input, shape index: {}]
  %s11 = inlined_call_operand.vmem [shape: f32[128,128], index: 11, kind: input, shape index: {}]
  %s12 = inlined_call_operand.vmem [shape: f32[1,128], index: 12, kind: input, shape index: {}]
  %s13 = inlined_call_operand.vmem [shape: f32[1,128], index: 13, kind: input, shape index: {}]
  %s14 = inlined_call_operand.vmem [shape: f32[1,128], index: 14, kind: input, shape index: {}]
  %s15 = inlined_call_operand.vmem [shape: f32[1,128], index: 15, kind: input, shape index: {}]
  %s16 = inlined_call_operand.vmem [shape: f32[1,128], index: 16, kind: input, shape index: {}]
  %s17 = inlined_call_operand.vmem [shape: f32[6,4,128], index: 17, kind: output, shape index: {}]
  %s18 = sld [smem:[#allocation0]]
  $region101: #{cvt5_forward.7} parent=0
    _
  %s20 = ssub.s32 1, %s18
  %s21 = scalar_select 0, %s20, %s18
  loop: start=0, step=1, limit=8
  $region2: #{cvt5_forward.7} parent=0 // loop_pre_header
    _
  $region3: #{cvt5_forward.7} parent=0 // loop_header
    %s23 = sphi 0, %s27
    %p24 = scmp.ge.s32.totalorder %s23, 8
    %s33 = sphi 0, %s35
    %s36 = sphi 0, %s33
    %s37 = sphi 0, %s36
    %s53 = sphi 0, %s37
    %s59 = sphi 0, %s61
    %s62 = sphi 0, %s59
    %s63 = sphi 0, %s62
    %s79 = sphi 0, %s63
    %s83 = sphi 0, %s83
    %s85 = sphi 0, %s83
    %s86 = sphi 0, %s85
    %s100 = sphi 0, %s86
    %s104 = sphi 0, %s104
    %s106 = sphi 0, %s104
    %s107 = sphi 0, %s106
    %s121 = sphi 0, %s107
    %s125 = sphi 0, %s125
    %s127 = sphi 0, %s125
    %s128 = sphi 0, %s127
    %s142 = sphi 0, %s128
    %s146 = sphi 0, %s146
    %s148 = sphi 0, %s146
    %s149 = sphi 0, %s148
    %s163 = sphi 0, %s149
    %s167 = sphi 0, %s167
    %s169 = sphi 0, %s167
    %s170 = sphi 0, %s169
    %s184 = sphi 0, %s170
    %s188 = sphi 0, %s188
    %s190 = sphi 0, %s188
    %s191 = sphi 0, %s190
    %s205 = sphi 0, %s191
    %s209 = sphi 0, %s209
    %s211 = sphi 0, %s209
    %s212 = sphi 0, %s211
    %s226 = sphi 0, %s212
    %s230 = sphi 0, %s230
    %s232 = sphi 0, %s230
    %s233 = sphi 0, %s232
    %s247 = sphi 0, %s233
    %s251 = sphi 0, %s251
    %s253 = sphi 0, %s251
    %s254 = sphi 0, %s253
    %s268 = sphi 0, %s254
    %s272 = sphi 0, %s272
    %s274 = sphi 0, %s272
    %s275 = sphi 0, %s274
    %s289 = sphi 0, %s275
    %s293 = sphi 0, %s293
    %s295 = sphi 0, %s293
    %s296 = sphi 0, %s295
    %s310 = sphi 0, %s296
    %s314 = sphi 0, %s314
    %s316 = sphi 0, %s314
    %s317 = sphi 0, %s316
    %s331 = sphi 0, %s317
    %s335 = sphi 0, %s335
    %s337 = sphi 0, %s335
    %s338 = sphi 0, %s337
    %s352 = sphi 0, %s338
    %s356 = sphi 0, %s356
    %s358 = sphi 0, %s356
    %s359 = sphi 0, %s358
    %s373 = sphi 0, %s359
    %s377 = sphi 0, %s377
    %s379 = sphi 0, %s377
    %s380 = sphi 0, %s379
    %s394 = sphi 0, %s380
    %s400 = sphi 0, %s402
    %s403 = sphi 0, %s400
    %s404 = sphi 0, %s403
    %s420 = sphi 0, %s404
  $region4: #{cvt5_forward.7} parent=0 // loop_header_branch
    %26 = sbr.rel (%p24) target = $region8
  $region5: #{cvt5_forward.7} parent=0 // loop_body
    %s28 = ssub.s32 %s23, 1
    %s29 = ssub.s32 %s23, 2
    %s30 = sadd.s32 %s23, 1
    %s31 = ssub.s32 %s23, %s30
    %p32 = scmp.eq.s32.totalorder %s31, 0
    %s34 = sadd.s32 %s33, 1
    %s35 = scalar_select %p32, %s33, %s34
    %p38 = pneg %p32
    %p39 = scmp.eq.s32.totalorder %s23, 5
    %p40 = por %p38, %p39
    %p41 = scmp.ne.s32.totalorder %s33, %s36
    %p42 = scmp.eq.s32.totalorder %s23, 0
    %p43 = por %p41, %p42
    %p44 = scmp.ne.s32.totalorder %s33, %s36
    %p45 = scmp.eq.s32.totalorder %s28, 5
    %p46 = por %p44, %p45
    %p47 = scmp.ne.s32.totalorder %s36, %s37
    %p48 = scmp.eq.s32.totalorder %s28, 0
    %p49 = por %p47, %p48
    %p50 = scmp.ne.s32.totalorder %s36, %s37
    %p51 = scmp.eq.s32.totalorder %s29, 5
    %p52 = por %p50, %p51
    %p54 = scmp.ne.s32.totalorder %s37, %s53
    %p55 = scmp.eq.s32.totalorder %s29, 0
    %p56 = por %p54, %p55
    %s57 = ssub.s32 %s23, %s30
    %p58 = scmp.eq.s32.totalorder %s57, 0
    %s60 = sadd.s32 %s59, 1
    %s61 = scalar_select %p58, %s59, %s60
    %p64 = pneg %p58
    %p65 = scmp.eq.s32.totalorder %s23, 5
    %p66 = por %p64, %p65
    %p67 = scmp.ne.s32.totalorder %s59, %s62
    %p68 = scmp.eq.s32.totalorder %s23, 0
    %p69 = por %p67, %p68
    %p70 = scmp.ne.s32.totalorder %s59, %s62
    %p71 = scmp.eq.s32.totalorder %s28, 5
    %p72 = por %p70, %p71
    %p73 = scmp.ne.s32.totalorder %s62, %s63
    %p74 = scmp.eq.s32.totalorder %s28, 0
    %p75 = por %p73, %p74
    %p76 = scmp.ne.s32.totalorder %s62, %s63
    %p77 = scmp.eq.s32.totalorder %s29, 5
    %p78 = por %p76, %p77
    %p80 = scmp.ne.s32.totalorder %s63, %s79
    %p81 = scmp.eq.s32.totalorder %s29, 0
    %p82 = por %p80, %p81
    %s84 = sadd.s32 %s83, 1
    %p87 = scmp.eq.s32.totalorder %s23, 5
    %p88 = scmp.ne.s32.totalorder %s83, %s85
    %p89 = scmp.eq.s32.totalorder %s23, 0
    %p90 = por %p88, %p89
    %p91 = scmp.ne.s32.totalorder %s83, %s85
    %p92 = scmp.eq.s32.totalorder %s28, 5
    %p93 = por %p91, %p92
    %p94 = scmp.ne.s32.totalorder %s85, %s86
    %p95 = scmp.eq.s32.totalorder %s28, 0
    %p96 = por %p94, %p95
    %p97 = scmp.ne.s32.totalorder %s85, %s86
    %p98 = scmp.eq.s32.totalorder %s29, 5
    %p99 = por %p97, %p98
    %p101 = scmp.ne.s32.totalorder %s86, %s100
    %p102 = scmp.eq.s32.totalorder %s29, 0
    %p103 = por %p101, %p102
    %s105 = sadd.s32 %s104, 1
    %p108 = scmp.eq.s32.totalorder %s23, 5
    %p109 = scmp.ne.s32.totalorder %s104, %s106
    %p110 = scmp.eq.s32.totalorder %s23, 0
    %p111 = por %p109, %p110
    %p112 = scmp.ne.s32.totalorder %s104, %s106
    %p113 = scmp.eq.s32.totalorder %s28, 5
    %p114 = por %p112, %p113
    %p115 = scmp.ne.s32.totalorder %s106, %s107
    %p116 = scmp.eq.s32.totalorder %s28, 0
    %p117 = por %p115, %p116
    %p118 = scmp.ne.s32.totalorder %s106, %s107
    %p119 = scmp.eq.s32.totalorder %s29, 5
    %p120 = por %p118, %p119
    %p122 = scmp.ne.s32.totalorder %s107, %s121
    %p123 = scmp.eq.s32.totalorder %s29, 0
    %p124 = por %p122, %p123
    %s126 = sadd.s32 %s125, 1
    %p129 = scmp.eq.s32.totalorder %s23, 5
    %p130 = scmp.ne.s32.totalorder %s125, %s127
    %p131 = scmp.eq.s32.totalorder %s23, 0
    %p132 = por %p130, %p131
    %p133 = scmp.ne.s32.totalorder %s125, %s127
    %p134 = scmp.eq.s32.totalorder %s28, 5
    %p135 = por %p133, %p134
    %p136 = scmp.ne.s32.totalorder %s127, %s128
    %p137 = scmp.eq.s32.totalorder %s28, 0
    %p138 = por %p136, %p137
    %p139 = scmp.ne.s32.totalorder %s127, %s128
    %p140 = scmp.eq.s32.totalorder %s29, 5
    %p141 = por %p139, %p140
    %p143 = scmp.ne.s32.totalorder %s128, %s142
    %p144 = scmp.eq.s32.totalorder %s29, 0
    %p145 = por %p143, %p144
    %s147 = sadd.s32 %s146, 1
    %p150 = scmp.eq.s32.totalorder %s23, 5
    %p151 = scmp.ne.s32.totalorder %s146, %s148
    %p152 = scmp.eq.s32.totalorder %s23, 0
    %p153 = por %p151, %p152
    %p154 = scmp.ne.s32.totalorder %s146, %s148
    %p155 = scmp.eq.s32.totalorder %s28, 5
    %p156 = por %p154, %p155
    %p157 = scmp.ne.s32.totalorder %s148, %s149
    %p158 = scmp.eq.s32.totalorder %s28, 0
    %p159 = por %p157, %p158
    %p160 = scmp.ne.s32.totalorder %s148, %s149
    %p161 = scmp.eq.s32.totalorder %s29, 5
    %p162 = por %p160, %p161
    %p164 = scmp.ne.s32.totalorder %s149, %s163
    %p165 = scmp.eq.s32.totalorder %s29, 0
    %p166 = por %p164, %p165
    %s168 = sadd.s32 %s167, 1
    %p171 = scmp.eq.s32.totalorder %s23, 5
    %p172 = scmp.ne.s32.totalorder %s167, %s169
    %p173 = scmp.eq.s32.totalorder %s23, 0
    %p174 = por %p172, %p173
    %p175 = scmp.ne.s32.totalorder %s167, %s169
    %p176 = scmp.eq.s32.totalorder %s28, 5
    %p177 = por %p175, %p176
    %p178 = scmp.ne.s32.totalorder %s169, %s170
    %p179 = scmp.eq.s32.totalorder %s28, 0
    %p180 = por %p178, %p179
    %p181 = scmp.ne.s32.totalorder %s169, %s170
    %p182 = scmp.eq.s32.totalorder %s29, 5
    %p183 = por %p181, %p182
    %p185 = scmp.ne.s32.totalorder %s170, %s184
    %p186 = scmp.eq.s32.totalorder %s29, 0
    %p187 = por %p185, %p186
    %s189 = sadd.s32 %s188, 1
    %p192 = scmp.eq.s32.totalorder %s23, 5
    %p193 = scmp.ne.s32.totalorder %s188, %s190
    %p194 = scmp.eq.s32.totalorder %s23, 0
    %p195 = por %p193, %p194
    %p196 = scmp.ne.s32.totalorder %s188, %s190
    %p197 = scmp.eq.s32.totalorder %s28, 5
    %p198 = por %p196, %p197
    %p199 = scmp.ne.s32.totalorder %s190, %s191
    %p200 = scmp.eq.s32.totalorder %s28, 0
    %p201 = por %p199, %p200
    %p202 = scmp.ne.s32.totalorder %s190, %s191
    %p203 = scmp.eq.s32.totalorder %s29, 5
    %p204 = por %p202, %p203
    %p206 = scmp.ne.s32.totalorder %s191, %s205
    %p207 = scmp.eq.s32.totalorder %s29, 0
    %p208 = por %p206, %p207
    %s210 = sadd.s32 %s209, 1
    %p213 = scmp.eq.s32.totalorder %s23, 5
    %p214 = scmp.ne.s32.totalorder %s209, %s211
    %p215 = scmp.eq.s32.totalorder %s23, 0
    %p216 = por %p214, %p215
    %p217 = scmp.ne.s32.totalorder %s209, %s211
    %p218 = scmp.eq.s32.totalorder %s28, 5
    %p219 = por %p217, %p218
    %p220 = scmp.ne.s32.totalorder %s211, %s212
    %p221 = scmp.eq.s32.totalorder %s28, 0
    %p222 = por %p220, %p221
    %p223 = scmp.ne.s32.totalorder %s211, %s212
    %p224 = scmp.eq.s32.totalorder %s29, 5
    %p225 = por %p223, %p224
    %p227 = scmp.ne.s32.totalorder %s212, %s226
    %p228 = scmp.eq.s32.totalorder %s29, 0
    %p229 = por %p227, %p228
    %s231 = sadd.s32 %s230, 1
    %p234 = scmp.eq.s32.totalorder %s23, 5
    %p235 = scmp.ne.s32.totalorder %s230, %s232
    %p236 = scmp.eq.s32.totalorder %s23, 0
    %p237 = por %p235, %p236
    %p238 = scmp.ne.s32.totalorder %s230, %s232
    %p239 = scmp.eq.s32.totalorder %s28, 5
    %p240 = por %p238, %p239
    %p241 = scmp.ne.s32.totalorder %s232, %s233
    %p242 = scmp.eq.s32.totalorder %s28, 0
    %p243 = por %p241, %p242
    %p244 = scmp.ne.s32.totalorder %s232, %s233
    %p245 = scmp.eq.s32.totalorder %s29, 5
    %p246 = por %p244, %p245
    %p248 = scmp.ne.s32.totalorder %s233, %s247
    %p249 = scmp.eq.s32.totalorder %s29, 0
    %p250 = por %p248, %p249
    %s252 = sadd.s32 %s251, 1
    %p255 = scmp.eq.s32.totalorder %s23, 5
    %p256 = scmp.ne.s32.totalorder %s251, %s253
    %p257 = scmp.eq.s32.totalorder %s23, 0
    %p258 = por %p256, %p257
    %p259 = scmp.ne.s32.totalorder %s251, %s253
    %p260 = scmp.eq.s32.totalorder %s28, 5
    %p261 = por %p259, %p260
    %p262 = scmp.ne.s32.totalorder %s253, %s254
    %p263 = scmp.eq.s32.totalorder %s28, 0
    %p264 = por %p262, %p263
    %p265 = scmp.ne.s32.totalorder %s253, %s254
    %p266 = scmp.eq.s32.totalorder %s29, 5
    %p267 = por %p265, %p266
    %p269 = scmp.ne.s32.totalorder %s254, %s268
    %p270 = scmp.eq.s32.totalorder %s29, 0
    %p271 = por %p269, %p270
    %s273 = sadd.s32 %s272, 1
    %p276 = scmp.eq.s32.totalorder %s23, 5
    %p277 = scmp.ne.s32.totalorder %s272, %s274
    %p278 = scmp.eq.s32.totalorder %s23, 0
    %p279 = por %p277, %p278
    %p280 = scmp.ne.s32.totalorder %s272, %s274
    %p281 = scmp.eq.s32.totalorder %s28, 5
    %p282 = por %p280, %p281
    %p283 = scmp.ne.s32.totalorder %s274, %s275
    %p284 = scmp.eq.s32.totalorder %s28, 0
    %p285 = por %p283, %p284
    %p286 = scmp.ne.s32.totalorder %s274, %s275
    %p287 = scmp.eq.s32.totalorder %s29, 5
    %p288 = por %p286, %p287
    %p290 = scmp.ne.s32.totalorder %s275, %s289
    %p291 = scmp.eq.s32.totalorder %s29, 0
    %p292 = por %p290, %p291
    %s294 = sadd.s32 %s293, 1
    %p297 = scmp.eq.s32.totalorder %s23, 5
    %p298 = scmp.ne.s32.totalorder %s293, %s295
    %p299 = scmp.eq.s32.totalorder %s23, 0
    %p300 = por %p298, %p299
    %p301 = scmp.ne.s32.totalorder %s293, %s295
    %p302 = scmp.eq.s32.totalorder %s28, 5
    %p303 = por %p301, %p302
    %p304 = scmp.ne.s32.totalorder %s295, %s296
    %p305 = scmp.eq.s32.totalorder %s28, 0
    %p306 = por %p304, %p305
    %p307 = scmp.ne.s32.totalorder %s295, %s296
    %p308 = scmp.eq.s32.totalorder %s29, 5
    %p309 = por %p307, %p308
    %p311 = scmp.ne.s32.totalorder %s296, %s310
    %p312 = scmp.eq.s32.totalorder %s29, 0
    %p313 = por %p311, %p312
    %s315 = sadd.s32 %s314, 1
    %p318 = scmp.eq.s32.totalorder %s23, 5
    %p319 = scmp.ne.s32.totalorder %s314, %s316
    %p320 = scmp.eq.s32.totalorder %s23, 0
    %p321 = por %p319, %p320
    %p322 = scmp.ne.s32.totalorder %s314, %s316
    %p323 = scmp.eq.s32.totalorder %s28, 5
    %p324 = por %p322, %p323
    %p325 = scmp.ne.s32.totalorder %s316, %s317
    %p326 = scmp.eq.s32.totalorder %s28, 0
    %p327 = por %p325, %p326
    %p328 = scmp.ne.s32.totalorder %s316, %s317
    %p329 = scmp.eq.s32.totalorder %s29, 5
    %p330 = por %p328, %p329
    %p332 = scmp.ne.s32.totalorder %s317, %s331
    %p333 = scmp.eq.s32.totalorder %s29, 0
    %p334 = por %p332, %p333
    %s336 = sadd.s32 %s335, 1
    %p339 = scmp.eq.s32.totalorder %s23, 5
    %p340 = scmp.ne.s32.totalorder %s335, %s337
    %p341 = scmp.eq.s32.totalorder %s23, 0
    %p342 = por %p340, %p341
    %p343 = scmp.ne.s32.totalorder %s335, %s337
    %p344 = scmp.eq.s32.totalorder %s28, 5
    %p345 = por %p343, %p344
    %p346 = scmp.ne.s32.totalorder %s337, %s338
    %p347 = scmp.eq.s32.totalorder %s28, 0
    %p348 = por %p346, %p347
    %p349 = scmp.ne.s32.totalorder %s337, %s338
    %p350 = scmp.eq.s32.totalorder %s29, 5
    %p351 = por %p349, %p350
    %p353 = scmp.ne.s32.totalorder %s338, %s352
    %p354 = scmp.eq.s32.totalorder %s29, 0
    %p355 = por %p353, %p354
    %s357 = sadd.s32 %s356, 1
    %p360 = scmp.eq.s32.totalorder %s23, 5
    %p361 = scmp.ne.s32.totalorder %s356, %s358
    %p362 = scmp.eq.s32.totalorder %s23, 0
    %p363 = por %p361, %p362
    %p364 = scmp.ne.s32.totalorder %s356, %s358
    %p365 = scmp.eq.s32.totalorder %s28, 5
    %p366 = por %p364, %p365
    %p367 = scmp.ne.s32.totalorder %s358, %s359
    %p368 = scmp.eq.s32.totalorder %s28, 0
    %p369 = por %p367, %p368
    %p370 = scmp.ne.s32.totalorder %s358, %s359
    %p371 = scmp.eq.s32.totalorder %s29, 5
    %p372 = por %p370, %p371
    %p374 = scmp.ne.s32.totalorder %s359, %s373
    %p375 = scmp.eq.s32.totalorder %s29, 0
    %p376 = por %p374, %p375
    %s378 = sadd.s32 %s377, 1
    %p381 = scmp.eq.s32.totalorder %s23, 5
    %p382 = scmp.ne.s32.totalorder %s377, %s379
    %p383 = scmp.eq.s32.totalorder %s23, 0
    %p384 = por %p382, %p383
    %p385 = scmp.ne.s32.totalorder %s377, %s379
    %p386 = scmp.eq.s32.totalorder %s28, 5
    %p387 = por %p385, %p386
    %p388 = scmp.ne.s32.totalorder %s379, %s380
    %p389 = scmp.eq.s32.totalorder %s28, 0
    %p390 = por %p388, %p389
    %p391 = scmp.ne.s32.totalorder %s379, %s380
    %p392 = scmp.eq.s32.totalorder %s29, 5
    %p393 = por %p391, %p392
    %p395 = scmp.ne.s32.totalorder %s380, %s394
    %p396 = scmp.eq.s32.totalorder %s29, 0
    %p397 = por %p395, %p396
    %s398 = ssub.s32 %s23, %s30
    %p399 = scmp.eq.s32.totalorder %s398, 0
    %s401 = sadd.s32 %s400, 1
    %s402 = scalar_select %p399, %s400, %s401
    %p405 = pneg %p399
    %p406 = scmp.eq.s32.totalorder %s23, 5
    %p407 = por %p405, %p406
    %p408 = scmp.ne.s32.totalorder %s400, %s403
    %p409 = scmp.eq.s32.totalorder %s23, 0
    %p410 = por %p408, %p409
    %p411 = scmp.ne.s32.totalorder %s400, %s403
    %p412 = scmp.eq.s32.totalorder %s28, 5
    %p413 = por %p411, %p412
    %p414 = scmp.ne.s32.totalorder %s403, %s404
    %p415 = scmp.eq.s32.totalorder %s28, 0
    %p416 = por %p414, %p415
    %p417 = scmp.ne.s32.totalorder %s403, %s404
    %p418 = scmp.eq.s32.totalorder %s29, 5
    %p419 = por %p417, %p418
    %p421 = scmp.ne.s32.totalorder %s404, %s420
    %p422 = scmp.eq.s32.totalorder %s29, 0
    %p423 = por %p421, %p422
    %p424 = scmp.le.s32.totalorder 1, %s23
    %p425 = scmp.lt.s32.totalorder %s23, 7
    %p426 = pnand %p424, %p425
    %p427 = pneg %p426
    // Predicated region
    $region9: #{cvt5_forward.7} parent=5 // pred_check
      _
    $region10: #{cvt5_forward.7} parent=5 // pred_check_branch
      %429 = sbr.rel (%p426) target = $region12
    $region11: #{cvt5_forward.7} parent=5 // pred_region
      %s430 = ssub.s32 %s23, 1
      // Predicated region
      $region13: #{cvt5_forward.7} parent=11 // pred_check
        %p431 = pneg %p96
      $region14: #{cvt5_forward.7} parent=11 // pred_check_branch
        %433 = sbr.rel (%p431) target = $region16
      $region15: #{cvt5_forward.7} parent=11 // pred_region
        _
      $region16: #{cvt5_forward.7} parent=11 // pred_fallthru
        _
      // Predicated region
      $region17: #{cvt5_forward.7} parent=11 // pred_check
        %p434 = pneg %p117
      $region18: #{cvt5_forward.7} parent=11 // pred_check_branch
        %436 = sbr.rel (%p434) target = $region20
      $region19: #{cvt5_forward.7} parent=11 // pred_region
        _
      $region20: #{cvt5_forward.7} parent=11 // pred_fallthru
        _
      // Predicated region
      $region21: #{cvt5_forward.7} parent=11 // pred_check
        %p437 = pneg %p138
      $region22: #{cvt5_forward.7} parent=11 // pred_check_branch
        %439 = sbr.rel (%p437) target = $region24
      $region23: #{cvt5_forward.7} parent=11 // pred_region
        _
      $region24: #{cvt5_forward.7} parent=11 // pred_fallthru
        _
      // Predicated region
      $region25: #{cvt5_forward.7} parent=11 // pred_check
        %p440 = pneg %p159
      $region26: #{cvt5_forward.7} parent=11 // pred_check_branch
        %442 = sbr.rel (%p440) target = $region28
      $region27: #{cvt5_forward.7} parent=11 // pred_region
        _
      $region28: #{cvt5_forward.7} parent=11 // pred_fallthru
        _
      // Predicated region
      $region29: #{cvt5_forward.7} parent=11 // pred_check
        %p443 = pneg %p180
      $region30: #{cvt5_forward.7} parent=11 // pred_check_branch
        %445 = sbr.rel (%p443) target = $region32
      $region31: #{cvt5_forward.7} parent=11 // pred_region
        _
      $region32: #{cvt5_forward.7} parent=11 // pred_fallthru
        _
      // Predicated region
      $region33: #{cvt5_forward.7} parent=11 // pred_check
        %p446 = pneg %p201
      $region34: #{cvt5_forward.7} parent=11 // pred_check_branch
        %448 = sbr.rel (%p446) target = $region36
      $region35: #{cvt5_forward.7} parent=11 // pred_region
        _
      $region36: #{cvt5_forward.7} parent=11 // pred_fallthru
        _
      // Predicated region
      $region37: #{cvt5_forward.7} parent=11 // pred_check
        %p449 = pneg %p222
      $region38: #{cvt5_forward.7} parent=11 // pred_check_branch
        %451 = sbr.rel (%p449) target = $region40
      $region39: #{cvt5_forward.7} parent=11 // pred_region
        _
      $region40: #{cvt5_forward.7} parent=11 // pred_fallthru
        _
      // Predicated region
      $region41: #{cvt5_forward.7} parent=11 // pred_check
        %p452 = pneg %p243
      $region42: #{cvt5_forward.7} parent=11 // pred_check_branch
        %454 = sbr.rel (%p452) target = $region44
      $region43: #{cvt5_forward.7} parent=11 // pred_region
        _
      $region44: #{cvt5_forward.7} parent=11 // pred_fallthru
        _
      // Predicated region
      $region45: #{cvt5_forward.7} parent=11 // pred_check
        %p455 = pneg %p264
      $region46: #{cvt5_forward.7} parent=11 // pred_check_branch
        %457 = sbr.rel (%p455) target = $region48
      $region47: #{cvt5_forward.7} parent=11 // pred_region
        _
      $region48: #{cvt5_forward.7} parent=11 // pred_fallthru
        _
      // Predicated region
      $region49: #{cvt5_forward.7} parent=11 // pred_check
        %p458 = pneg %p285
      $region50: #{cvt5_forward.7} parent=11 // pred_check_branch
        %460 = sbr.rel (%p458) target = $region52
      $region51: #{cvt5_forward.7} parent=11 // pred_region
        _
      $region52: #{cvt5_forward.7} parent=11 // pred_fallthru
        _
      // Predicated region
      $region53: #{cvt5_forward.7} parent=11 // pred_check
        %p461 = pneg %p306
      $region54: #{cvt5_forward.7} parent=11 // pred_check_branch
        %463 = sbr.rel (%p461) target = $region56
      $region55: #{cvt5_forward.7} parent=11 // pred_region
        _
      $region56: #{cvt5_forward.7} parent=11 // pred_fallthru
        _
      // Predicated region
      $region57: #{cvt5_forward.7} parent=11 // pred_check
        %p464 = pneg %p327
      $region58: #{cvt5_forward.7} parent=11 // pred_check_branch
        %466 = sbr.rel (%p464) target = $region60
      $region59: #{cvt5_forward.7} parent=11 // pred_region
        _
      $region60: #{cvt5_forward.7} parent=11 // pred_fallthru
        _
      // Predicated region
      $region61: #{cvt5_forward.7} parent=11 // pred_check
        %p467 = pneg %p348
      $region62: #{cvt5_forward.7} parent=11 // pred_check_branch
        %469 = sbr.rel (%p467) target = $region64
      $region63: #{cvt5_forward.7} parent=11 // pred_region
        _
      $region64: #{cvt5_forward.7} parent=11 // pred_fallthru
        _
      // Predicated region
      $region65: #{cvt5_forward.7} parent=11 // pred_check
        %p470 = pneg %p369
      $region66: #{cvt5_forward.7} parent=11 // pred_check_branch
        %472 = sbr.rel (%p470) target = $region68
      $region67: #{cvt5_forward.7} parent=11 // pred_region
        _
      $region68: #{cvt5_forward.7} parent=11 // pred_fallthru
        _
      // Predicated region
      $region69: #{cvt5_forward.7} parent=11 // pred_check
        %p473 = pneg %p390
      $region70: #{cvt5_forward.7} parent=11 // pred_check_branch
        %475 = sbr.rel (%p473) target = $region72
      $region71: #{cvt5_forward.7} parent=11 // pred_region
        _
      $region72: #{cvt5_forward.7} parent=11 // pred_fallthru
        _
    $region12: #{cvt5_forward.7} parent=5 // pred_fallthru
      _
    %p476 = scmp.lt.s32.totalorder %s23, 6
    // Predicated region
    $region73: #{cvt5_forward.7} parent=5 // pred_check
      %p477 = pneg %p476
    $region74: #{cvt5_forward.7} parent=5 // pred_check_branch
      %479 = sbr.rel (%p477) target = $region76
    $region75: #{cvt5_forward.7} parent=5 // pred_region
      // Predicated region
      $region77: #{cvt5_forward.7} parent=75 // pred_check
        %p480 = pneg %p43
      $region78: #{cvt5_forward.7} parent=75 // pred_check_branch
        %482 = sbr.rel (%p480) target = $region80
      $region79: #{cvt5_forward.7} parent=75 // pred_region
        %p483 = scmp.lt.s32.totalorder %s23, 5
        %s484 = scalar_select %p483, %s23, 5
        %s485 = smul.addr %s484, 4
        %s486 = scalar_lea.vmem %s0, %s485
      $region80: #{cvt5_forward.7} parent=75 // pred_fallthru
        _
      // Predicated region
      $region81: #{cvt5_forward.7} parent=75 // pred_check
        %p487 = pneg %p69
      $region82: #{cvt5_forward.7} parent=75 // pred_check_branch
        %489 = sbr.rel (%p487) target = $region84
      $region83: #{cvt5_forward.7} parent=75 // pred_region
        %p490 = scmp.lt.s32.totalorder %s23, 5
        %s491 = scalar_select %p490, %s23, 5
        %s492 = scalar_lea.vmem %s1, %s491
      $region84: #{cvt5_forward.7} parent=75 // pred_fallthru
        _
    $region76: #{cvt5_forward.7} parent=5 // pred_fallthru
      _
    %p493 = scmp.le.s32.totalorder 1, %s23
    %p494 = scmp.lt.s32.totalorder %s23, 7
    %p495 = pnand %p493, %p494
    %p496 = pneg %p495
    // Predicated region
    $region85: #{cvt5_forward.7} parent=5 // pred_check
      _
    $region86: #{cvt5_forward.7} parent=5 // pred_check_branch
      %498 = sbr.rel (%p495) target = $region88
    $region87: #{cvt5_forward.7} parent=5 // pred_region
      %s499 = ssub.s32 %s23, 1
      %p500 = scmp.lt.s32.totalorder %s28, 5
      %s501 = scalar_select %p500, %s28, 5
      %s502 = smul.addr %s501, 4
      %s503 = scalar_lea.vmem %s0, %s502
      %p504 = pneg %p49
      %p505 = pneg %p46
      %p506 = scmp.lt.s32.totalorder %s28, 5
      %s507 = scalar_select %p506, %s28, 5
      %s508 = scalar_lea.vmem %s1, %s507
      %p509 = pneg %p75
      %p510 = pneg %p72
      %p511 = pneg %p96
      %p512 = pneg %p93
      %p513 = pneg %p117
      %p514 = pneg %p114
      %p515 = pneg %p138
      %p516 = pneg %p135
      %p517 = pneg %p159
      %p518 = pneg %p156
      %p519 = pneg %p180
      %p520 = pneg %p177
      %p521 = pneg %p201
      %p522 = pneg %p198
      %p523 = pneg %p222
      %p524 = pneg %p219
      %p525 = pneg %p243
      %p526 = pneg %p240
      %p527 = pneg %p264
      %p528 = pneg %p261
      %p529 = pneg %p285
      %p530 = pneg %p282
      %p531 = pneg %p306
      %p532 = pneg %p303
      %p533 = pneg %p327
      %p534 = pneg %p324
      %p535 = pneg %p348
      %p536 = pneg %p345
      %p537 = pneg %p369
      %p538 = pneg %p366
      %p539 = pneg %p390
      %p540 = pneg %p387
      %p541 = pneg %p416
      %p542 = pneg %p413
      %p543 = scmp.lt.s32.totalorder %s28, 5
      %s544 = scalar_select %p543, %s28, 5
      %s545 = smul.addr %s544, 4
      %s546 = scalar_lea.vmem %s17, %s545
      %p547 = scmp.lt.s32.totalorder %s28, 5
      %s548 = scalar_select %p547, %s28, 5
      %s549 = smul.addr %s548, 4
      %s550 = scalar_lea.vmem %s0, %s549
      %p551 = scmp.lt.s32.totalorder %s28, 5
      %s552 = scalar_select %p551, %s28, 5
      %s553 = scalar_lea.vmem %s1, %s552
      %p554 = scmp.lt.s32.totalorder %s28, 5
      %s555 = scalar_select %p554, %s28, 5
      %s556 = smul.addr %s555, 4
      %s557 = scalar_lea.vmem %s17, %s556
      %v558 = vld [vmem:[%s550] sm:$0xf]
      %v559 = vld [vmem:[%s2] sm:$0xf]
      %v560 = vadd.f32 %v558, %v559
      %v561 = vld [vmem:[%s553] sm:$0x1]
      %v562 = vld [vmem:[%s3] sm:$0xff]
      %v563 = vld [vmem:[%s3 + $0x8] sm:$0xff]
      %v564 = vld [vmem:[%s3 + $0x10] sm:$0xff]
      %v565 = vld [vmem:[%s3 + $0x18] sm:$0xff]
      %v566 = vld [vmem:[%s3 + $0x20] sm:$0xff]
      %v567 = vld [vmem:[%s3 + $0x28] sm:$0xff]
      %v568 = vld [vmem:[%s3 + $0x30] sm:$0xff]
      %v569 = vld [vmem:[%s3 + $0x38] sm:$0xff]
      %v570 = vld [vmem:[%s3 + $0x40] sm:$0xff]
      %v571 = vld [vmem:[%s3 + $0x48] sm:$0xff]
      %v572 = vld [vmem:[%s3 + $0x50] sm:$0xff]
      %v573 = vld [vmem:[%s3 + $0x58] sm:$0xff]
      %v574 = vld [vmem:[%s3 + $0x60] sm:$0xff]
      %v575 = vld [vmem:[%s3 + $0x68] sm:$0xff]
      %v576 = vld [vmem:[%s3 + $0x70] sm:$0xff]
      %v577 = vld [vmem:[%s3 + $0x78] sm:$0xff]
      %v578 = vld [vmem:[%s3 + $0x80] sm:$0xff]
      %v579 = vld [vmem:[%s3 + $0x88] sm:$0xff]
      %v580 = vld [vmem:[%s3 + $0x90] sm:$0xff]
      %v581 = vld [vmem:[%s3 + $0x98] sm:$0xff]
      %v582 = vld [vmem:[%s3 + $0xa0] sm:$0xff]
      %v583 = vld [vmem:[%s3 + $0xa8] sm:$0xff]
      %v584 = vld [vmem:[%s3 + $0xb0] sm:$0xff]
      %v585 = vld [vmem:[%s3 + $0xb8] sm:$0xff]
      %v586 = vld [vmem:[%s3 + $0xc0] sm:$0xff]
      %v587 = vld [vmem:[%s3 + $0xc8] sm:$0xff]
      %v588 = vld [vmem:[%s3 + $0xd0] sm:$0xff]
      %v589 = vld [vmem:[%s3 + $0xd8] sm:$0xff]
      %v590 = vld [vmem:[%s3 + $0xe0] sm:$0xff]
      %v591 = vld [vmem:[%s3 + $0xe8] sm:$0xff]
      %v592 = vld [vmem:[%s3 + $0xf0] sm:$0xff]
      %v593 = vld [vmem:[%s3 + $0xf8] sm:$0xff]
      %v594 = vld [vmem:[%s3 + $0x100] sm:$0xff]
      %v595 = vld [vmem:[%s3 + $0x108] sm:$0xff]
      %v596 = vld [vmem:[%s3 + $0x110] sm:$0xff]
      %v597 = vld [vmem:[%s3 + $0x118] sm:$0xff]
      %v598 = vld [vmem:[%s3 + $0x120] sm:$0xff]
      %v599 = vld [vmem:[%s3 + $0x128] sm:$0xff]
      %v600 = vld [vmem:[%s3 + $0x130] sm:$0xff]
      %v601 = vld [vmem:[%s3 + $0x138] sm:$0xff]
      %v602 = vld [vmem:[%s3 + $0x140] sm:$0xff]
      %v603 = vld [vmem:[%s3 + $0x148] sm:$0xff]
      %v604 = vld [vmem:[%s3 + $0x150] sm:$0xff]
      %v605 = vld [vmem:[%s3 + $0x158] sm:$0xff]
      %v606 = vld [vmem:[%s3 + $0x160] sm:$0xff]
      %v607 = vld [vmem:[%s3 + $0x168] sm:$0xff]
      %v608 = vld [vmem:[%s3 + $0x170] sm:$0xff]
      %v609 = vld [vmem:[%s3 + $0x178] sm:$0xff]
      %v610 = vld [vmem:[%s4] sm:$0x7]
      %v612 = vperm.slane %v610, 0
      %v613 = vperm.slane %v610, 1
      %v614 = vperm.slane %v610, 2
      %618 = vmatpush.msra.mxu0 %v607
      %619 = vmatpush.msra.mxu0 %v604
      %620 = vmatpush.msra.mxu0 %v601
      %621 = vmatpush.msra.mxu0 %v598
      %622 = vmatpush.msra.mxu0 %v595
      %623 = vmatpush.msra.mxu0 %v592
      %624 = vmatpush.msra.mxu0 %v589
      %625 = vmatpush.msra.mxu0 %v586
      %626 = vmatpush.msra.mxu0 %v583
      %627 = vmatpush.msra.mxu0 %v580
      %628 = vmatpush.msra.mxu0 %v577
      %629 = vmatpush.msra.mxu0 %v574
      %630 = vmatpush.msra.mxu0 %v571
      %631 = vmatpush.msra.mxu0 %v568
      %632 = vmatpush.msra.mxu0 %v565
      %633 = vmatpush.msra.mxu0 %v562
      %634 = vmatmul.f32.gmra.mxu0 %v560
      %v635 = vpop.f32.mrf.mxu0
      %v636 = vadd.f32 %v612, %v635
      %637 = vdwg.mxu0
      %638 = vmatpush.msra.mxu0 %v608
      %639 = vmatpush.msra.mxu0 %v605
      %640 = vmatpush.msra.mxu0 %v602
      %641 = vmatpush.msra.mxu0 %v599
      %642 = vmatpush.msra.mxu0 %v596
      %643 = vmatpush.msra.mxu0 %v593
      %644 = vmatpush.msra.mxu0 %v590
      %645 = vmatpush.msra.mxu0 %v587
      %646 = vmatpush.msra.mxu0 %v584
      %647 = vmatpush.msra.mxu0 %v581
      %648 = vmatpush.msra.mxu0 %v578
      %649 = vmatpush.msra.mxu0 %v575
      %650 = vmatpush.msra.mxu0 %v572
      %651 = vmatpush.msra.mxu0 %v569
      %652 = vmatpush.msra.mxu0 %v566
      %653 = vmatpush.msra.mxu0 %v563
      %654 = vmatmul.f32.gmra.mxu0 %v560
      %v655 = vpop.f32.mrf.mxu0
      %v656 = vadd.f32 %v613, %v655
      %657 = vdwg.mxu0
      %658 = vmatpush.msra.mxu0 %v609
      %659 = vmatpush.msra.mxu0 %v606
      %660 = vmatpush.msra.mxu0 %v603
      %661 = vmatpush.msra.mxu0 %v600
      %662 = vmatpush.msra.mxu0 %v597
      %663 = vmatpush.msra.mxu0 %v594
      %664 = vmatpush.msra.mxu0 %v591
      %665 = vmatpush.msra.mxu0 %v588
      %666 = vmatpush.msra.mxu0 %v585
      %667 = vmatpush.msra.mxu0 %v582
      %668 = vmatpush.msra.mxu0 %v579
      %669 = vmatpush.msra.mxu0 %v576
      %670 = vmatpush.msra.mxu0 %v573
      %671 = vmatpush.msra.mxu0 %v570
      %672 = vmatpush.msra.mxu0 %v567
      %673 = vmatpush.msra.mxu0 %v564
      %674 = vmatmul.f32.gmra.mxu0 %v560
      %v675 = vpop.f32.mrf.mxu0
      %v676 = vadd.f32 %v614, %v675
      %677 = vdwg.mxu0
      %vm678 = vcmask 261120
      %v680 = vsel %vm678, %v636, 0
      %v683 = vsel %vm678, %v656, 0
      %685 = vmatpush.xpose.msra.mxu0 0.0
      %686 = vmatpush.xpose.msra.mxu0 0.0
      %687 = vmatpush.xpose.msra.mxu0 0.0
      %688 = vmatpush.xpose.msra.mxu0 0.0
      %689 = vmatpush.xpose.msra.mxu0 0.0
      %690 = vmatpush.xpose.msra.mxu0 0.0
      %691 = vmatpush.xpose.msra.mxu0 0.0
      %692 = vmatpush.xpose.msra.mxu0 0.0
      %693 = vmatpush.xpose.msra.mxu0 0.0
      %694 = vmatpush.xpose.msra.mxu0 0.0
      %695 = vmatpush.xpose.msra.mxu0 0.0
      %696 = vmatpush.xpose.msra.mxu0 0.0
      %697 = vmatpush.xpose.msra.mxu0 0.0
      %698 = vmatpush.xpose.msra.mxu0 0.0
      %699 = vmatpush.xpose.msra.mxu0 0.0
      %700 = vmatpush.xpose.msra.mxu0 %v683
      %701 = vmatmul.f32.gmra.mxu0 %v680
      %v702 = vpop.f32.mrf.mxu0
      %v703 = vadd.f32 0.0, %v702
      %704 = vdwg.mxu0
      %v705 = vmul.f32 %v703, 0.17677669
      %v707 = vperm.slane %v561, 0
      %v709 = vadd.f32 %v705, %v707
      %vm710 = vcmask 27648
      %v711 = vsel %vm710, %v709, -inf
      %712 = vmax.xlane.f32.xlu0 %v711
      %v713 = vpop.xlane.xlu0 %712
      %v714 = vsub.f32 %v709, %v713
      %v715 = vmul.f32 %v714, 1.442695
      %v716 = vpow.pop %v715
      %v717 = vsel %vm710, %v716, 0.0
      %718 = vadd.xlane.f32.xlu0 %v717
      %v719 = vpop.xlane.xlu0 %718
      %v720 = vrcp.pop %v719
      %v721 = vmul.f32 %v716, %v720
      %vm722 = vcmask 31744
      %v724 = vsel %vm722, %v721, 0
      %vm726 = vcmask 1043456
      %v728 = vsel %vm726, %v676, 0
      %730 = vmatpush.msra.mxu0 0.0
      %731 = vmatpush.msra.mxu0 0.0
      %732 = vmatpush.msra.mxu0 0.0
      %733 = vmatpush.msra.mxu0 0.0
      %734 = vmatpush.msra.mxu0 0.0
      %735 = vmatpush.msra.mxu0 0.0
      %736 = vmatpush.msra.mxu0 0.0
      %737 = vmatpush.msra.mxu0 0.0
      %738 = vmatpush.msra.mxu0 0.0
      %739 = vmatpush.msra.mxu0 0.0
      %740 = vmatpush.msra.mxu0 0.0
      %741 = vmatpush.msra.mxu0 0.0
      %742 = vmatpush.msra.mxu0 0.0
      %743 = vmatpush.msra.mxu0 0.0
      %744 = vmatpush.msra.mxu0 0.0
      %745 = vmatpush.msra.mxu0 %v728
      %746 = vmatmul.f32.gmra.mxu0 %v724
      %v747 = vpop.f32.mrf.mxu0
      %v748 = vadd.f32 0.0, %v747
      %749 = vdwg.mxu0
      %750 = vrot.lane.b32.xlu0 %v636, 96
      %v751 = vpop.permute.xlu0 %750
      %752 = vrot.lane.b32.xlu0 %v656, 96
      %v753 = vpop.permute.xlu0 %752
      %v754 = vsel %vm678, %v751, 0
      %v756 = vsel %vm678, %v753, 0
      %758 = vmatpush.xpose.msra.mxu0 0.0
      %759 = vmatpush.xpose.msra.mxu0 0.0
      %760 = vmatpush.xpose.msra.mxu0 0.0
      %761 = vmatpush.xpose.msra.mxu0 0.0
      %762 = vmatpush.xpose.msra.mxu0 0.0
      %763 = vmatpush.xpose.msra.mxu0 0.0
      %764 = vmatpush.xpose.msra.mxu0 0.0
      %765 = vmatpush.xpose.msra.mxu0 0.0
      %766 = vmatpush.xpose.msra.mxu0 0.0
      %767 = vmatpush.xpose.msra.mxu0 0.0
      %768 = vmatpush.xpose.msra.mxu0 0.0
      %769 = vmatpush.xpose.msra.mxu0 0.0
      %770 = vmatpush.xpose.msra.mxu0 0.0
      %771 = vmatpush.xpose.msra.mxu0 0.0
      %772 = vmatpush.xpose.msra.mxu0 0.0
      %773 = vmatpush.xpose.msra.mxu0 %v756
      %774 = vmatmul.f32.gmra.mxu0 %v754
      %v775 = vpop.f32.mrf.mxu0
      %v776 = vadd.f32 0.0, %v775
      %777 = vdwg.mxu0
      %v778 = vmul.f32 %v776, 0.17677669
      %v779 = vadd.f32 %v778, %v707
      %v780 = vsel %vm710, %v779, -inf
      %781 = vmax.xlane.f32.xlu0 %v780
      %v782 = vpop.xlane.xlu0 %781
      %v783 = vsub.f32 %v779, %v782
      %v784 = vmul.f32 %v783, 1.442695
      %v785 = vpow.pop %v784
      %v786 = vsel %vm710, %v785, 0.0
      %787 = vadd.xlane.f32.xlu0 %v786
      %v788 = vpop.xlane.xlu0 %787
      %v789 = vrcp.pop %v788
      %v790 = vmul.f32 %v785, %v789
      %791 = vrot.lane.b32.xlu0 %v676, 96
      %v792 = vpop.permute.xlu0 %791
      %v794 = vsel %vm722, %v790, 0
      %v796 = vsel %vm726, %v792, 0
      %798 = vmatpush.msra.mxu0 0.0
      %799 = vmatpush.msra.mxu0 0.0
      %800 = vmatpush.msra.mxu0 0.0
      %801 = vmatpush.msra.mxu0 0.0
      %802 = vmatpush.msra.mxu0 0.0
      %803 = vmatpush.msra.mxu0 0.0
      %804 = vmatpush.msra.mxu0 0.0
      %805 = vmatpush.msra.mxu0 0.0
      %806 = vmatpush.msra.mxu0 0.0
      %807 = vmatpush.msra.mxu0 0.0
      %808 = vmatpush.msra.mxu0 0.0
      %809 = vmatpush.msra.mxu0 0.0
      %810 = vmatpush.msra.mxu0 0.0
      %811 = vmatpush.msra.mxu0 0.0
      %812 = vmatpush.msra.mxu0 0.0
      %813 = vmatpush.msra.mxu0 %v796
      %814 = vmatmul.f32.gmra.mxu0 %v794
      %v815 = vpop.f32.mrf.mxu0
      %v816 = vadd.f32 0.0, %v815
      %817 = vdwg.mxu0
      %818 = vrot.lane.b32.xlu0 %v636, 64
      %v819 = vpop.permute.xlu0 %818
      %820 = vrot.lane.b32.xlu0 %v656, 64
      %v821 = vpop.permute.xlu0 %820
      %v822 = vsel %vm678, %v819, 0
      %v824 = vsel %vm678, %v821, 0
      %826 = vmatpush.xpose.msra.mxu0 0.0
      %827 = vmatpush.xpose.msra.mxu0 0.0
      %828 = vmatpush.xpose.msra.mxu0 0.0
      %829 = vmatpush.xpose.msra.mxu0 0.0
      %830 = vmatpush.xpose.msra.mxu0 0.0
      %831 = vmatpush.xpose.msra.mxu0 0.0
      %832 = vmatpush.xpose.msra.mxu0 0.0
      %833 = vmatpush.xpose.msra.mxu0 0.0
      %834 = vmatpush.xpose.msra.mxu0 0.0
      %835 = vmatpush.xpose.msra.mxu0 0.0
      %836 = vmatpush.xpose.msra.mxu0 0.0
      %837 = vmatpush.xpose.msra.mxu0 0.0
      %838 = vmatpush.xpose.msra.mxu0 0.0
      %839 = vmatpush.xpose.msra.mxu0 0.0
      %840 = vmatpush.xpose.msra.mxu0 0.0
      %841 = vmatpush.xpose.msra.mxu0 %v824
      %842 = vmatmul.f32.gmra.mxu0 %v822
      %v843 = vpop.f32.mrf.mxu0
      %v844 = vadd.f32 0.0, %v843
      %845 = vdwg.mxu0
      %v846 = vmul.f32 %v844, 0.17677669
      %v847 = vadd.f32 %v846, %v707
      %v848 = vsel %vm710, %v847, -inf
      %849 = vmax.xlane.f32.xlu0 %v848
      %v850 = vpop.xlane.xlu0 %849
      %v851 = vsub.f32 %v847, %v850
      %v852 = vmul.f32 %v851, 1.442695
      %v853 = vpow.pop %v852
      %v854 = vsel %vm710, %v853, 0.0
      %855 = vadd.xlane.f32.xlu0 %v854
      %v856 = vpop.xlane.xlu0 %855
      %v857 = vrcp.pop %v856
      %v858 = vmul.f32 %v853, %v857
      %859 = vrot.lane.b32.xlu0 %v676, 64
      %v860 = vpop.permute.xlu0 %859
      %v862 = vsel %vm722, %v858, 0
      %v864 = vsel %vm726, %v860, 0
      %866 = vmatpush.msra.mxu0 0.0
      %867 = vmatpush.msra.mxu0 0.0
      %868 = vmatpush.msra.mxu0 0.0
      %869 = vmatpush.msra.mxu0 0.0
      %870 = vmatpush.msra.mxu0 0.0
      %871 = vmatpush.msra.mxu0 0.0
      %872 = vmatpush.msra.mxu0 0.0
      %873 = vmatpush.msra.mxu0 0.0
      %874 = vmatpush.msra.mxu0 0.0
      %875 = vmatpush.msra.mxu0 0.0
      %876 = vmatpush.msra.mxu0 0.0
      %877 = vmatpush.msra.mxu0 0.0
      %878 = vmatpush.msra.mxu0 0.0
      %879 = vmatpush.msra.mxu0 0.0
      %880 = vmatpush.msra.mxu0 0.0
      %881 = vmatpush.msra.mxu0 %v864
      %882 = vmatmul.f32.gmra.mxu0 %v862
      %v883 = vpop.f32.mrf.mxu0
      %v884 = vadd.f32 0.0, %v883
      %885 = vdwg.mxu0
      %886 = vrot.lane.b32.xlu0 %v636, 32
      %v887 = vpop.permute.xlu0 %886
      %888 = vrot.lane.b32.xlu0 %v656, 32
      %v889 = vpop.permute.xlu0 %888
      %v890 = vsel %vm678, %v887, 0
      %v892 = vsel %vm678, %v889, 0
      %894 = vmatpush.xpose.msra.mxu0 0.0
      %895 = vmatpush.xpose.msra.mxu0 0.0
      %896 = vmatpush.xpose.msra.mxu0 0.0
      %897 = vmatpush.xpose.msra.mxu0 0.0
      %898 = vmatpush.xpose.msra.mxu0 0.0
      %899 = vmatpush.xpose.msra.mxu0 0.0
      %900 = vmatpush.xpose.msra.mxu0 0.0
      %901 = vmatpush.xpose.msra.mxu0 0.0
      %902 = vmatpush.xpose.msra.mxu0 0.0
      %903 = vmatpush.xpose.msra.mxu0 0.0
      %904 = vmatpush.xpose.msra.mxu0 0.0
      %905 = vmatpush.xpose.msra.mxu0 0.0
      %906 = vmatpush.xpose.msra.mxu0 0.0
      %907 = vmatpush.xpose.msra.mxu0 0.0
      %908 = vmatpush.xpose.msra.mxu0 0.0
      %909 = vmatpush.xpose.msra.mxu0 %v892
      %910 = vmatmul.f32.gmra.mxu0 %v890
      %v911 = vpop.f32.mrf.mxu0
      %v912 = vadd.f32 0.0, %v911
      %913 = vdwg.mxu0
      %v914 = vmul.f32 %v912, 0.17677669
      %v915 = vadd.f32 %v914, %v707
      %v916 = vsel %vm710, %v915, -inf
      %917 = vmax.xlane.f32.xlu0 %v916
      %v918 = vpop.xlane.xlu0 %917
      %v919 = vsub.f32 %v915, %v918
      %v920 = vmul.f32 %v919, 1.442695
      %v921 = vpow.pop %v920
      %v922 = vsel %vm710, %v921, 0.0
      %923 = vadd.xlane.f32.xlu0 %v922
      %v924 = vpop.xlane.xlu0 %923
      %v925 = vrcp.pop %v924
      %v926 = vmul.f32 %v921, %v925
      %927 = vrot.lane.b32.xlu0 %v676, 32
      %v928 = vpop.permute.xlu0 %927
      %v930 = vsel %vm722, %v926, 0
      %v932 = vsel %vm726, %v928, 0
      %934 = vmatpush.msra.mxu0 0.0
      %935 = vmatpush.msra.mxu0 0.0
      %936 = vmatpush.msra.mxu0 0.0
      %937 = vmatpush.msra.mxu0 0.0
      %938 = vmatpush.msra.mxu0 0.0
      %939 = vmatpush.msra.mxu0 0.0
      %940 = vmatpush.msra.mxu0 0.0
      %941 = vmatpush.msra.mxu0 0.0
      %942 = vmatpush.msra.mxu0 0.0
      %943 = vmatpush.msra.mxu0 0.0
      %944 = vmatpush.msra.mxu0 0.0
      %945 = vmatpush.msra.mxu0 0.0
      %946 = vmatpush.msra.mxu0 0.0
      %947 = vmatpush.msra.mxu0 0.0
      %948 = vmatpush.msra.mxu0 0.0
      %949 = vmatpush.msra.mxu0 %v932
      %950 = vmatmul.f32.gmra.mxu0 %v930
      %v951 = vpop.f32.mrf.mxu0
      %v952 = vadd.f32 0.0, %v951
      %953 = vdwg.mxu0
      %955 = vrot.lane.b32.xlu0 %v816, 32
      %v956 = vpop.permute.xlu0 %955
      %959 = vrot.lane.b32.xlu0 %v884, 64
      %v960 = vpop.permute.xlu0 %959
      %963 = vrot.lane.b32.xlu0 %v952, 96
      %v964 = vpop.permute.xlu0 %963
      %v966 = vsel %vm678, %v748, %v956
      %vm967 = vcmask 523264
      %v968 = vsel %vm967, %v966, %v960
      %vm969 = vcmask 785408
      %v970 = vsel %vm969, %v968, %v964
      %v971 = vld [vmem:[%s5] sm:$0xff]
      %v972 = vld [vmem:[%s5 + $0x8] sm:$0xff]
      %v973 = vld [vmem:[%s5 + $0x10] sm:$0xff]
      %v974 = vld [vmem:[%s5 + $0x18] sm:$0xff]
      %v975 = vld [vmem:[%s5 + $0x20] sm:$0xff]
      %v976 = vld [vmem:[%s5 + $0x28] sm:$0xff]
      %v977 = vld [vmem:[%s5 + $0x30] sm:$0xff]
      %v978 = vld [vmem:[%s5 + $0x38] sm:$0xff]
      %v979 = vld [vmem:[%s5 + $0x40] sm:$0xff]
      %v980 = vld [vmem:[%s5 + $0x48] sm:$0xff]
      %v981 = vld [vmem:[%s5 + $0x50] sm:$0xff]
      %v982 = vld [vmem:[%s5 + $0x58] sm:$0xff]
      %v983 = vld [vmem:[%s5 + $0x60] sm:$0xff]
      %v984 = vld [vmem:[%s5 + $0x68] sm:$0xff]
      %v985 = vld [vmem:[%s5 + $0x70] sm:$0xff]
      %v986 = vld [vmem:[%s5 + $0x78] sm:$0xff]
      %v987 = vld [vmem:[%s6] sm:$0x1]
      %v989 = vperm.slane %v987, 0
      %991 = vmatpush.msra.mxu0 %v986
      %992 = vmatpush.msra.mxu0 %v985
      %993 = vmatpush.msra.mxu0 %v984
      %994 = vmatpush.msra.mxu0 %v983
      %995 = vmatpush.msra.mxu0 %v982
      %996 = vmatpush.msra.mxu0 %v981
      %997 = vmatpush.msra.mxu0 %v980
      %998 = vmatpush.msra.mxu0 %v979
      %999 = vmatpush.msra.mxu0 %v978
      %1000 = vmatpush.msra.mxu0 %v977
      %1001 = vmatpush.msra.mxu0 %v976
      %1002 = vmatpush.msra.mxu0 %v975
      %1003 = vmatpush.msra.mxu0 %v974
      %1004 = vmatpush.msra.mxu0 %v973
      %1005 = vmatpush.msra.mxu0 %v972
      %1006 = vmatpush.msra.mxu0 %v971
      %1007 = vmatmul.f32.gmra.mxu0 %v970
      %v1008 = vpop.f32.mrf.mxu0
      %v1009 = vadd.f32 %v989, %v1008
      %1010 = vdwg.mxu0
      %v1011 = vadd.f32 %v560, %v1009
      %v1012 = vld [vmem:[%s7] sm:$0x1]
      %v1013 = vld [vmem:[%s8] sm:$0x1]
      %v1014 = vsel %vm726, %v1011, 0.0
      %1015 = vadd.xlane.f32.xlu0 %v1014
      %v1016 = vpop.xlane.xlu0 %1015
      %v1017 = vrcp.pop 128.0
      %v1018 = vmul.f32 128.0, %v1017
      %v1019 = vsub.f32 1.0, %v1018
      %v1020 = vmul.f32 %v1017, %v1019
      %v1021 = vadd.f32 %v1017, %v1020
      %vm1022 = vweird.f32 %v1017
      %v1023 = vsel %vm1022, %v1017, %v1021
      %v1024 = vmul.f32 %v1016, %v1023
      %v1025 = vsub.f32 %v1011, %v1024
      %v1026 = vmul.f32 %v1025, %v1025
      %v1027 = vsel %vm726, %v1026, 0.0
      %1028 = vadd.xlane.f32.xlu0 %v1027
      %v1029 = vpop.xlane.xlu0 %1028
      %v1030 = vmul.f32 %v1029, %v1023
      %v1031 = vadd.f32 %v1030, 1e-05
      %v1032 = vrsqrt.pop %v1031
      %v1033 = vmul.f32 %v1032, %v1031
      %v1034 = vmul.f32 %v1033, %v1032
      %v1035 = vmul.f32 0.5, %v1034
      %v1036 = vsub.f32 1.5, %v1035
      %v1037 = vmul.f32 %v1032, %v1036
      %vm1038 = vweird.f32 %v1031
      %vm1039 = vweird.f32 %v1032
      %vm1040 = vmor %vm1038, %vm1039
      %v1041 = vsel %vm1040, %v1032, %v1037
      %v1042 = vmul.f32 %v1025, %v1041
      %v1044 = vperm.slane %v1012, 0
      %v1046 = vmul.f32 %v1042, %v1044
      %v1048 = vperm.slane %v1013, 0
      %v1050 = vadd.f32 %v1046, %v1048
      %v1051 = vld [vmem:[%s9] sm:$0xff]
      %v1052 = vld [vmem:[%s9 + $0x8] sm:$0xff]
      %v1053 = vld [vmem:[%s9 + $0x10] sm:$0xff]
      %v1054 = vld [vmem:[%s9 + $0x18] sm:$0xff]
      %v1055 = vld [vmem:[%s9 + $0x20] sm:$0xff]
      %v1056 = vld [vmem:[%s9 + $0x28] sm:$0xff]
      %v1057 = vld [vmem:[%s9 + $0x30] sm:$0xff]
      %v1058 = vld [vmem:[%s9 + $0x38] sm:$0xff]
      %v1059 = vld [vmem:[%s9 + $0x40] sm:$0xff]
      %v1060 = vld [vmem:[%s9 + $0x48] sm:$0xff]
      %v1061 = vld [vmem:[%s9 + $0x50] sm:$0xff]
      %v1062 = vld [vmem:[%s9 + $0x58] sm:$0xff]
      %v1063 = vld [vmem:[%s9 + $0x60] sm:$0xff]
      %v1064 = vld [vmem:[%s9 + $0x68] sm:$0xff]
      %v1065 = vld [vmem:[%s9 + $0x70] sm:$0xff]
      %v1066 = vld [vmem:[%s9 + $0x78] sm:$0xff]
      %v1067 = vld [vmem:[%s10] sm:$0x1]
      %v1069 = vperm.slane %v1067, 0
      %1071 = vmatpush.msra.mxu0 %v1066
      %1072 = vmatpush.msra.mxu0 %v1065
      %1073 = vmatpush.msra.mxu0 %v1064
      %1074 = vmatpush.msra.mxu0 %v1063
      %1075 = vmatpush.msra.mxu0 %v1062
      %1076 = vmatpush.msra.mxu0 %v1061
      %1077 = vmatpush.msra.mxu0 %v1060
      %1078 = vmatpush.msra.mxu0 %v1059
      %1079 = vmatpush.msra.mxu0 %v1058
      %1080 = vmatpush.msra.mxu0 %v1057
      %1081 = vmatpush.msra.mxu0 %v1056
      %1082 = vmatpush.msra.mxu0 %v1055
      %1083 = vmatpush.msra.mxu0 %v1054
      %1084 = vmatpush.msra.mxu0 %v1053
      %1085 = vmatpush.msra.mxu0 %v1052
      %1086 = vmatpush.msra.mxu0 %v1051
      %1087 = vmatmul.f32.gmra.mxu0 %v1050
      %v1088 = vpop.f32.mrf.mxu0
      %v1089 = vadd.f32 %v1069, %v1088
      %1090 = vdwg.mxu0
      %v1091 = vmax.f32 %v1089, 0.0
      %v1092 = vld [vmem:[%s11] sm:$0xff]
      %v1093 = vld [vmem:[%s11 + $0x8] sm:$0xff]
      %v1094 = vld [vmem:[%s11 + $0x10] sm:$0xff]
      %v1095 = vld [vmem:[%s11 + $0x18] sm:$0xff]
      %v1096 = vld [vmem:[%s11 + $0x20] sm:$0xff]
      %v1097 = vld [vmem:[%s11 + $0x28] sm:$0xff]
      %v1098 = vld [vmem:[%s11 + $0x30] sm:$0xff]
      %v1099 = vld [vmem:[%s11 + $0x38] sm:$0xff]
      %v1100 = vld [vmem:[%s11 + $0x40] sm:$0xff]
      %v1101 = vld [vmem:[%s11 + $0x48] sm:$0xff]
      %v1102 = vld [vmem:[%s11 + $0x50] sm:$0xff]
      %v1103 = vld [vmem:[%s11 + $0x58] sm:$0xff]
      %v1104 = vld [vmem:[%s11 + $0x60] sm:$0xff]
      %v1105 = vld [vmem:[%s11 + $0x68] sm:$0xff]
      %v1106 = vld [vmem:[%s11 + $0x70] sm:$0xff]
      %v1107 = vld [vmem:[%s11 + $0x78] sm:$0xff]
      %v1108 = vld [vmem:[%s12] sm:$0x1]
      %v1110 = vperm.slane %v1108, 0
      %1112 = vmatpush.msra.mxu0 %v1107
      %1113 = vmatpush.msra.mxu0 %v1106
      %1114 = vmatpush.msra.mxu0 %v1105
      %1115 = vmatpush.msra.mxu0 %v1104
      %1116 = vmatpush.msra.mxu0 %v1103
      %1117 = vmatpush.msra.mxu0 %v1102
      %1118 = vmatpush.msra.mxu0 %v1101
      %1119 = vmatpush.msra.mxu0 %v1100
      %1120 = vmatpush.msra.mxu0 %v1099
      %1121 = vmatpush.msra.mxu0 %v1098
      %1122 = vmatpush.msra.mxu0 %v1097
      %1123 = vmatpush.msra.mxu0 %v1096
      %1124 = vmatpush.msra.mxu0 %v1095
      %1125 = vmatpush.msra.mxu0 %v1094
      %1126 = vmatpush.msra.mxu0 %v1093
      %1127 = vmatpush.msra.mxu0 %v1092
      %1128 = vmatmul.f32.gmra.mxu0 %v1091
      %v1129 = vpop.f32.mrf.mxu0
      %v1130 = vadd.f32 %v1110, %v1129
      %1131 = vdwg.mxu0
      %v1132 = vadd.f32 %v1050, %v1130
      %v1133 = vld [vmem:[%s13] sm:$0x1]
      %v1134 = vld [vmem:[%s14] sm:$0x1]
      %v1135 = vsel %vm726, %v1132, 0.0
      %1136 = vadd.xlane.f32.xlu0 %v1135
      %v1137 = vpop.xlane.xlu0 %1136
      %v1138 = vmul.f32 %v1137, %v1023
      %v1139 = vsub.f32 %v1132, %v1138
      %v1140 = vmul.f32 %v1139, %v1139
      %v1141 = vsel %vm726, %v1140, 0.0
      %1142 = vadd.xlane.f32.xlu0 %v1141
      %v1143 = vpop.xlane.xlu0 %1142
      %v1144 = vmul.f32 %v1143, %v1023
      %v1145 = vadd.f32 %v1144, 1e-05
      %v1146 = vrsqrt.pop %v1145
      %v1147 = vmul.f32 %v1146, %v1145
      %v1148 = vmul.f32 %v1147, %v1146
      %v1149 = vmul.f32 0.5, %v1148
      %v1150 = vsub.f32 1.5, %v1149
      %v1151 = vmul.f32 %v1146, %v1150
      %vm1152 = vweird.f32 %v1145
      %vm1153 = vweird.f32 %v1146
      %vm1154 = vmor %vm1152, %vm1153
      %v1155 = vsel %vm1154, %v1146, %v1151
      %v1156 = vmul.f32 %v1139, %v1155
      %v1158 = vperm.slane %v1133, 0
      %v1160 = vmul.f32 %v1156, %v1158
      %v1162 = vperm.slane %v1134, 0
      %v1164 = vadd.f32 %v1160, %v1162
      %v1165 = vld [vmem:[%s15] sm:$0x1]
      %v1166 = vld [vmem:[%s16] sm:$0x1]
      %v1167 = vsel %vm726, %v1164, 0.0
      %1168 = vadd.xlane.f32.xlu0 %v1167
      %v1169 = vpop.xlane.xlu0 %1168
      %v1170 = vmul.f32 %v1169, %v1023
      %v1171 = vsub.f32 %v1164, %v1170
      %v1172 = vmul.f32 %v1171, %v1171
      %v1173 = vsel %vm726, %v1172, 0.0
      %1174 = vadd.xlane.f32.xlu0 %v1173
      %v1175 = vpop.xlane.xlu0 %1174
      %v1176 = vmul.f32 %v1175, %v1023
      %v1177 = vadd.f32 %v1176, 1e-05
      %v1178 = vrsqrt.pop %v1177
      %v1179 = vmul.f32 %v1178, %v1177
      %v1180 = vmul.f32 %v1179, %v1178
      %v1181 = vmul.f32 0.5, %v1180
      %v1182 = vsub.f32 1.5, %v1181
      %v1183 = vmul.f32 %v1178, %v1182
      %vm1184 = vweird.f32 %v1177
      %vm1185 = vweird.f32 %v1178
      %vm1186 = vmor %vm1184, %vm1185
      %v1187 = vsel %vm1186, %v1178, %v1183
      %v1188 = vmul.f32 %v1171, %v1187
      %v1190 = vperm.slane %v1165, 0
      %v1192 = vmul.f32 %v1188, %v1190
      %v1194 = vperm.slane %v1166, 0
      %v1196 = vadd.f32 %v1192, %v1194
      %1197 = vst [vmem:[%s557] sm:$0xf] %v1196
      %p1198 = scmp.lt.s32.totalorder %s28, 5
      %s1199 = scalar_select %p1198, %s28, 5
      %s1200 = smul.addr %s1199, 4
      %s1201 = scalar_lea.vmem %s17, %s1200
      // Predicated region
      $region89: #{cvt5_forward.7} parent=87 // pred_check
        %p1202 = pneg %p413
      $region90: #{cvt5_forward.7} parent=87 // pred_check_branch
        %1204 = sbr.rel (%p1202) target = $region92
      $region91: #{cvt5_forward.7} parent=87 // pred_region
        _
      $region92: #{cvt5_forward.7} parent=87 // pred_fallthru
        _
    $region88: #{cvt5_forward.7} parent=5 // pred_fallthru
      _
    %p1205 = scmp.le.s32.totalorder 2, %s23
    // Predicated region
    $region93: #{cvt5_forward.7} parent=5 // pred_check
      %p1206 = pneg %p1205
    $region94: #{cvt5_forward.7} parent=5 // pred_check_branch
      %1208 = sbr.rel (%p1206) target = $region96
    $region95: #{cvt5_forward.7} parent=5 // pred_region
      %s1209 = ssub.s32 %s23, 2
      // Predicated region
      $region97: #{cvt5_forward.7} parent=95 // pred_check
        %p1210 = pneg %p419
      $region98: #{cvt5_forward.7} parent=95 // pred_check_branch
        %1212 = sbr.rel (%p1210) target = $region100
      $region99: #{cvt5_forward.7} parent=95 // pred_region
        %p1213 = scmp.lt.s32.totalorder %s29, 5
        %s1214 = scalar_select %p1213, %s29, 5
        %s1215 = smul.addr %s1214, 4
        %s1216 = scalar_lea.vmem %s17, %s1215
      $region100: #{cvt5_forward.7} parent=95 // pred_fallthru
        _
    $region96: #{cvt5_forward.7} parent=5 // pred_fallthru
      _
  $region6: #{cvt5_forward.7} parent=0 // loop_footer
    %s27 = sadd.s32 1, %s23
  $region7: #{cvt5_forward.7} parent=0 // loop_footer_branch
    %22 = sbr.rel target = $region3
  $region8: #{cvt5_forward.7} parent=0 // loop_exit
    _

</llo_original>
